<compile_context>
chip_gen: v5e
topology: v5e:2x2
jax: 0.10.0
libtpu: 0.0.40
codegen_flags: <defaults>
</compile_context>

<pallas_src>
import math
import functools

import jax
import jax.numpy as jnp
from jax.experimental import pallas as pl
from jax.experimental.pallas import tpu as pltpu

EPS = 1e-12  # matches LayerNorm(eps=1e-12) in the torch module


# --------------------------------------------------------------------------- #
# math helpers (shared by the kernel and the pure-JAX reference)
# --------------------------------------------------------------------------- #
def _layernorm(x, g, b):
    # Matches the custom torch LayerNorm: biased variance over the last dim, f32.
    # rsqrt runs on the EUP slot (divide+sqrt would burn VALU slots) — review item.
    u = jnp.mean(x, axis=-1, keepdims=True)
    d = x - u
    s = jnp.mean(d * d, axis=-1, keepdims=True)
    return g * (d * jax.lax.rsqrt(s + EPS)) + b


def _gelu(x):
    # exact erf-based GELU, as in the SASRec Intermediate module.
    # (jax.nn.gelu(approximate=True) is a cheaper EUP-side option if VALU-bound.)
    return 0.5 * x * (1.0 + jax.lax.erf(x / math.sqrt(2.0)))


# --------------------------------------------------------------------------- #
# kernel: one (batch-tile, layer) grid step
# --------------------------------------------------------------------------- #
def sasrec_kernel(approx_softmax,
                  # batch-tile blocks
                  ids_ref, emb_ref,
                  # embedding LayerNorm params (grid-constant)
                  g_emb_ref, b_emb_ref,
                  # per-layer weight blocks (streamed along the layer grid axis)
                  wq_ref, bq_ref, wk_ref, bk_ref, wv_ref, bv_ref,
                  wo_ref, bo_ref, ln1_g_ref, ln1_b_ref,
                  w1_ref, b1_ref, w2_ref, b2_ref, ln2_g_ref, ln2_b_ref,
                  # output block; also carries the residual stream across layers
                  out_ref):
    layer = pl.program_id(1)
    Bt, L = ids_ref.shape
    M, H = out_ref.shape                      # M == Bt * L
    n_heads, hs = wq_ref.shape[1], wq_ref.shape[3]

    # ---- layer 0: embedding LayerNorm into the carried residual stream ----
    @pl.when(layer == 0)
    def _():
        out_ref[...] = _layernorm(emb_ref[...].astype(jnp.float32),
                                  g_emb_ref[...], b_emb_ref[...]
                                  ).astype(out_ref.dtype)

    # ---- additive attention mask (padding * causal), built in-kernel (cheap VPU) ----
    pad_ok = (ids_ref[...] > 0)[:, None, :]                        # (Bt, 1, L)
    row = jax.lax.broadcasted_iota(jnp.int32, (L, L), 0)
    col = jax.lax.broadcasted_iota(jnp.int32, (L, L), 1)
    causal = (col <= row)[None, :, :]                               # (1, L, L)
    mask = jnp.where(jnp.logical_and(causal, pad_ok), 0.0, -10000.0)  # f32 (Bt, L, L)

    x = out_ref[...].astype(jnp.float32)                            # (M, H) residual
    xb = x.astype(jnp.bfloat16)

    # ---- multi-head self-attention ----
    # Per-head weight slabs (packed once, outside the kernel): no lane slicing of
    # activations, no lane-axis concat of heads; 1/sqrt(hs) is folded into wq / bq.
    attn = bo_ref[0].astype(jnp.float32)                            # (1, H) broadcast
    for h in range(n_heads):
        qh = (jnp.dot(xb, wq_ref[0, h], preferred_element_type=jnp.float32)
              + bq_ref[0, h]).reshape(Bt, L, hs)
        kh = (jnp.dot(xb, wk_ref[0, h], preferred_element_type=jnp.float32)
              + bk_ref[0, h]).reshape(Bt, L, hs)
        vh = (jnp.dot(xb, wv_ref[0, h], preferred_element_type=jnp.float32)
              + bv_ref[0, h]).reshape(Bt, L, hs)

        s = jnp.einsum('bqd,bkd->bqk',
                       qh.astype(jnp.bfloat16), kh.astype(jnp.bfloat16),
                       preferred_element_type=jnp.float32) + mask
        m = jnp.max(s, axis=-1, keepdims=True)
        p = jnp.exp(s - m)
        den = jnp.sum(p, axis=-1, keepdims=True)
        p = (p * pl.reciprocal(den, approx=True)) if approx_softmax else (p / den)

        ctx = jnp.einsum('bqk,bkd->bqd',
                         p.astype(jnp.bfloat16), vh.astype(jnp.bfloat16),
                         preferred_element_type=jnp.float32).reshape(M, hs)
        # per-head partial output projection, accumulated in f32 (replaces concat)
        attn = attn + jnp.dot(ctx.astype(jnp.bfloat16), wo_ref[0, h],
                              preferred_element_type=jnp.float32)

    x = _layernorm(attn + x, ln1_g_ref[0], ln1_b_ref[0])

    # ---- position-wise feed-forward ----
    hid = _gelu(jnp.dot(x.astype(jnp.bfloat16), w1_ref[0],
                        preferred_element_type=jnp.float32) + b1_ref[0])
    ffn = jnp.dot(hid.astype(jnp.bfloat16), w2_ref[0],
                  preferred_element_type=jnp.float32) + b2_ref[0]
    x = _layernorm(ffn + x, ln2_g_ref[0], ln2_b_ref[0])

    # Carry the residual stream in the VMEM-resident output block.  HBM writeback
    # only happens when the batch block index changes (i.e. once per batch tile).
    out_ref[...] = x.astype(out_ref.dtype)


# --------------------------------------------------------------------------- #
# parameter init (torch-like raw params) and one-time packing
# --------------------------------------------------------------------------- #
def init_params(key, item_size, hidden_size, max_seq_length, n_layers,
                initializer_range=0.02):
    H = hidden_size
    ks = jax.random.split(key, 8)

    def nrm(k, shape):
        return (initializer_range * jax.random.normal(k, shape)).astype(jnp.float32)

    item_emb = nrm(ks[0], (item_size, H)).at[0].set(0.0)   # padding_idx = 0
    pos_emb = nrm(ks[1], (max_seq_length, H))

    return dict(
        item_emb=item_emb,
        pos_emb=pos_emb,
        ln_emb_g=jnp.ones((1, H), jnp.float32),
        ln_emb_b=jnp.zeros((1, H), jnp.float32),
        wq=nrm(ks[2], (n_layers, H, H)), bq=jnp.zeros((n_layers, 1, H), jnp.float32),
        wk=nrm(ks[3], (n_layers, H, H)), bk=jnp.zeros((n_layers, 1, H), jnp.float32),
        wv=nrm(ks[4], (n_layers, H, H)), bv=jnp.zeros((n_layers, 1, H), jnp.float32),
        wo=nrm(ks[5], (n_layers, H, H)), bo=jnp.zeros((n_layers, 1, H), jnp.float32),
        ln1_g=jnp.ones((n_layers, 1, H), jnp.float32),
        ln1_b=jnp.zeros((n_layers, 1, H), jnp.float32),
        w1=nrm(ks[6], (n_layers, H, 4 * H)),
        b1=jnp.zeros((n_layers, 1, 4 * H), jnp.float32),
        w2=nrm(ks[7], (n_layers, 4 * H, H)),
        b2=jnp.zeros((n_layers, 1, H), jnp.float32),
        ln2_g=jnp.ones((n_layers, 1, H), jnp.float32),
        ln2_b=jnp.zeros((n_layers, 1, H), jnp.float32),
    )


def pack_params(params, n_heads):
    """One-time packing (hoisted out of the per-call wrapper — review item):
       * head-major Q/K/V slabs (nl, nh, H, hs) and row-split O slabs (nl, nh, hs, H)
       * 1/sqrt(head_size) folded into Wq / bq
       * matmul operands cast to bf16 once."""
    nl, H, _ = params["wq"].shape
    hs = H // n_heads
    scale = 1.0 / math.sqrt(hs)

    def head_cols(w):    # (nl, H, H) -> (nl, nh, H, hs): column block per head
        return jnp.transpose(w.reshape(nl, H, n_heads, hs), (0, 2, 1, 3))

    def head_cols_b(b):  # (nl, 1, H) -> (nl, nh, 1, hs)
        return jnp.transpose(b.reshape(nl, 1, n_heads, hs), (0, 2, 1, 3))

    def head_rows(w):    # (nl, H, H) -> (nl, nh, hs, H): row block per head (Wo)
        return w.reshape(nl, n_heads, hs, H)

    return dict(
        item_emb=params["item_emb"], pos_emb=params["pos_emb"],
        g_emb=params["ln_emb_g"], b_emb=params["ln_emb_b"],
        wq=head_cols(params["wq"] * scale).astype(jnp.bfloat16),
        bq=head_cols_b(params["bq"] * scale),
        wk=head_cols(params["wk"]).astype(jnp.bfloat16),
        bk=head_cols_b(params["bk"]),
        wv=head_cols(params["wv"]).astype(jnp.bfloat16),
        bv=head_cols_b(params["bv"]),
        wo=head_rows(params["wo"]).astype(jnp.bfloat16),
        bo=params["bo"],
        ln1_g=params["ln1_g"], ln1_b=params["ln1_b"],
        w1=params["w1"].astype(jnp.bfloat16), b1=params["b1"],
        w2=params["w2"].astype(jnp.bfloat16), b2=params["b2"],
        ln2_g=params["ln2_g"], ln2_b=params["ln2_b"],
    )


# --------------------------------------------------------------------------- #
# tiling / VMEM-limit heuristics (review items)
# --------------------------------------------------------------------------- #
def _round_up(x, m):
    return (x + m - 1) // m * m


def _choose_tiling(B, L, target_rows=1024):
    """Batch tile Bt and padded batch size:
       * Bt*L targets ~1024 rows (amortize grid overhead, fill the MXU)
       * Bt is a multiple of 8 (sublane aligned)
       * >= 2 batch grid steps so the "parallel" axis can split across v7x's 2 TCs
       * batch is padded to a tile multiple instead of degrading to Bt = 1."""
    bt = max(1, target_rows // max(L, 1))
    bt = min(bt, max(1, (B + 1) // 2))
    bt = _round_up(bt, 8)
    b_pad = _round_up(max(B, 2 * bt), bt)
    return bt, b_pad


def _vmem_limit_bytes():
    """Chip-aware scoped-VMEM limit: 75% of per-core VMEM, clamped to [48, 100] MiB
       -> 48 MiB on v7x (64 MiB part), 96 MiB on v5e / v6e (128 MiB parts)."""
    cap = 64 * 1024 * 1024                      # conservative default (v7x per-TC)
    try:
        cap = int(pltpu.get_tpu_info().vmem_capacity_bytes)
    except Exception:
        pass
    return max(48 * 1024 * 1024, min(int(cap * 0.75), 100 * 1024 * 1024))


# --------------------------------------------------------------------------- #
# wrapper
# --------------------------------------------------------------------------- #
def sasrec_forward(input_ids, packed, *, bt=None, approx_softmax=True):
    B, L = input_ids.shape
    H = packed["item_emb"].shape[1]
    n_layers = packed["wq"].shape[0]

    if bt is None:
        bt, b_pad = _choose_tiling(B, L)
    else:
        bt = _round_up(max(bt, 1), 8)
        b_pad = _round_up(max(B, 2 * bt), bt)
    nb = b_pad // bt

    # pad the batch with all-padding (id = 0) rows; their outputs are sliced away
    ids_p = jnp.zeros((b_pad, L), jnp.int32).at[:B].set(input_ids.astype(jnp.int32))

    # glue: item + position embedding lookups (as in make_seq_embedding); the kernel
    # applies the embedding LayerNorm itself (dropout is identity at inference)
    seq_emb = (packed["item_emb"][ids_p]
               + packed["pos_emb"][jnp.arange(L)][None, :, :]).astype(jnp.float32)
    seq_emb = seq_emb.reshape(b_pad * L, H)        # rows ordered (batch, position)

    rows_spec = pl.BlockSpec((bt * L, H), lambda b, l: (b, 0))

    def layer_spec(a):      # per-layer weight block, streamed along grid axis 1
        zeros = (0,) * (a.ndim - 1)
        return pl.BlockSpec((1,) + a.shape[1:], lambda b, l, z=zeros: (l,) + z)

    def const_spec(a):      # grid-constant param (embedding LayerNorm, tiny)
        zeros = (0,) * a.ndim
        return pl.BlockSpec(a.shape, lambda b, l, z=zeros: z)

    weight_keys = ("wq", "bq", "wk", "bk", "wv", "bv", "wo", "bo",
                   "ln1_g", "ln1_b", "w1", "b1", "w2", "b2", "ln2_g", "ln2_b")
    weights = [packed[k] for k in weight_keys]

    in_specs = ([pl.BlockSpec((bt, L), lambda b, l: (b, 0)),   # ids (mask source)
                 rows_spec,                                    # embeddings
                 const_spec(packed["g_emb"]), const_spec(packed["b_emb"])]
                + [layer_spec(w) for w in weights])

    out = pl.pallas_call(
        functools.partial(sasrec_kernel, approx_softmax),
        out_shape=jax.ShapeDtypeStruct((b_pad * L, H), jnp.float32),
        grid=(nb, n_layers),
        in_specs=in_specs,
        out_specs=rows_spec,
        compiler_params=pltpu.CompilerParams(
            # batch tiles independent (megacore split); layers strictly sequential
            dimension_semantics=("parallel", "arbitrary"),
            vmem_limit_bytes=_vmem_limit_bytes(),
        ),
    )(ids_p, seq_emb, packed["g_emb"], packed["b_emb"], *weights)

    return out.reshape(b_pad, L, H)[:B]


# --------------------------------------------------------------------------- #
# pure-JAX reference (mirrors the torch module) for a parity check
# --------------------------------------------------------------------------- #
def sasrec_reference(input_ids, params, n_layers, n_heads):
    B, L = input_ids.shape
    H = params["item_emb"].shape[1]
    hs = H // n_heads
    x = params["item_emb"][input_ids] + params["pos_emb"][jnp.arange(L)][None]
    x = _layernorm(x, params["ln_emb_g"], params["ln_emb_b"])
    pad = (input_ids > 0)[:, None, None, :]
    causal = jnp.tril(jnp.ones((L, L), bool))[None, None]
    mask = jnp.where(causal & pad, 0.0, -10000.0)          # (B, 1, L, L)
    for l in range(n_layers):
        def heads(t):
            return t.reshape(B, L, n_heads, hs).transpose(0, 2, 1, 3)
        q = heads(x @ params["wq"][l] + params["bq"][l])
        k = heads(x @ params["wk"][l] + params["bk"][l])
        v = heads(x @ params["wv"][l] + params["bv"][l])
        s = q @ k.transpose(0, 1, 3, 2) / math.sqrt(hs) + mask
        p = jax.nn.softmax(s, axis=-1)
        ctx = (p @ v).transpose(0, 2, 1, 3).reshape(B, L, H)
        a = ctx @ params["wo"][l] + params["bo"][l]
        x = _layernorm(a + x, params["ln1_g"][l], params["ln1_b"][l])
        h1 = _gelu(x @ params["w1"][l] + params["b1"][l])
        f = h1 @ params["w2"][l] + params["b2"][l]
        x = _layernorm(f + x, params["ln2_g"][l], params["ln2_b"][l])
    return x


if __name__ == "__main__":
    # small config consistent with the module: item_size, hidden_size, max_seq_length
    B, L, H = 2, 8, 32
    ITEM_SIZE = 50
    N_LAYERS, N_HEADS = 2, 2

    key = jax.random.PRNGKey(0)
    k_param, k_ids = jax.random.split(key)

    params = init_params(k_param, ITEM_SIZE, H, L, N_LAYERS)
    packed = pack_params(params, N_HEADS)        # one-time packing (hoisted)

    # deterministic ids; include zeros so the padding mask path is exercised
    input_ids = jax.random.randint(k_ids, (B, L), 0, ITEM_SIZE, dtype=jnp.int32)
    input_ids = input_ids.at[0, :2].set(0)

    seq_output = sasrec_forward(input_ids, packed)
    jax.block_until_ready(seq_output)
    assert seq_output.shape == (B, L, H)

    # loose parity check vs the f32 reference (bf16 MXU + approx reciprocal in kernel)
    ref = sasrec_reference(input_ids, params, N_LAYERS, N_HEADS)
    max_err = float(jnp.max(jnp.abs(seq_output - ref)))
    assert max_err < 0.1, f"kernel mismatch vs reference: max_abs_err={max_err}"

    print("KERNEL_OK")
</pallas_src>

<mosaic_0001>
module attributes {stable_mosaic.version = 11 : i64} {
  func.func @sasrec_kernel(%arg0: i32, %arg1: i32, %arg2: memref<8x8xi32, #tpu.memory_space<vmem>>, %arg3: memref<64x32xf32, #tpu.memory_space<vmem>>, %arg4: memref<1x32xf32, #tpu.memory_space<vmem>>, %arg5: memref<1x32xf32, #tpu.memory_space<vmem>>, %arg6: memref<1x2x32x16xbf16, #tpu.memory_space<vmem>>, %arg7: memref<1x2x1x16xf32, #tpu.memory_space<vmem>>, %arg8: memref<1x2x32x16xbf16, #tpu.memory_space<vmem>>, %arg9: memref<1x2x1x16xf32, #tpu.memory_space<vmem>>, %arg10: memref<1x2x32x16xbf16, #tpu.memory_space<vmem>>, %arg11: memref<1x2x1x16xf32, #tpu.memory_space<vmem>>, %arg12: memref<1x2x16x32xbf16, #tpu.memory_space<vmem>>, %arg13: memref<1x1x32xf32, #tpu.memory_space<vmem>>, %arg14: memref<1x1x32xf32, #tpu.memory_space<vmem>>, %arg15: memref<1x1x32xf32, #tpu.memory_space<vmem>>, %arg16: memref<1x32x128xbf16, #tpu.memory_space<vmem>>, %arg17: memref<1x1x128xf32, #tpu.memory_space<vmem>>, %arg18: memref<1x128x32xbf16, #tpu.memory_space<vmem>>, %arg19: memref<1x1x32xf32, #tpu.memory_space<vmem>>, %arg20: memref<1x1x32xf32, #tpu.memory_space<vmem>>, %arg21: memref<1x1x32xf32, #tpu.memory_space<vmem>>, %arg22: memref<64x32xf32, #tpu.memory_space<vmem>>) attributes {dimension_semantics = [#tpu.dimension_semantics<parallel>, #tpu.dimension_semantics<arbitrary>], iteration_bounds = array<i64: 2, 2>, scalar_prefetch = 0 : i64, scratch_operands = 0 : i64, tpu.core_type = #tpu.core_type<tc>, window_params = [{transform_indices = @transform_0, window_bounds = array<i64: 8, 8>}, {transform_indices = @transform_1, window_bounds = array<i64: 64, 32>}, {pipeline_mode = #tpu.pipeline_mode<synchronous>, transform_indices = @transform_2, window_bounds = array<i64: 1, 32>}, {pipeline_mode = #tpu.pipeline_mode<synchronous>, transform_indices = @transform_3, window_bounds = array<i64: 1, 32>}, {transform_indices = @transform_4, window_bounds = array<i64: 1, 2, 32, 16>}, {transform_indices = @transform_5, window_bounds = array<i64: 1, 2, 1, 16>}, {transform_indices = @transform_6, window_bounds = array<i64: 1, 2, 32, 16>}, {transform_indices = @transform_7, window_bounds = array<i64: 1, 2, 1, 16>}, {transform_indices = @transform_8, window_bounds = array<i64: 1, 2, 32, 16>}, {transform_indices = @transform_9, window_bounds = array<i64: 1, 2, 1, 16>}, {transform_indices = @transform_10, window_bounds = array<i64: 1, 2, 16, 32>}, {transform_indices = @transform_11, window_bounds = array<i64: 1, 1, 32>}, {transform_indices = @transform_12, window_bounds = array<i64: 1, 1, 32>}, {transform_indices = @transform_13, window_bounds = array<i64: 1, 1, 32>}, {transform_indices = @transform_14, window_bounds = array<i64: 1, 32, 128>}, {transform_indices = @transform_15, window_bounds = array<i64: 1, 1, 128>}, {transform_indices = @transform_16, window_bounds = array<i64: 1, 128, 32>}, {transform_indices = @transform_17, window_bounds = array<i64: 1, 1, 32>}, {transform_indices = @transform_18, window_bounds = array<i64: 1, 1, 32>}, {transform_indices = @transform_19, window_bounds = array<i64: 1, 1, 32>}, {transform_indices = @transform_20, window_bounds = array<i64: 64, 32>}]} {
    %c0_i32 = arith.constant 0 : i32
    %0 = arith.cmpi eq, %arg1, %c0_i32 : i32
    %1 = arith.extui %0 : i1 to i32
    %c0_i32_0 = arith.constant 0 : i32
    %2 = arith.cmpi ne, %1, %c0_i32_0 : i32
    scf.if %2 {
      %c0_121 = arith.constant 0 : index
      %c0_122 = arith.constant 0 : index
      %191 = vector.load %arg3[%c0_121, %c0_122] : memref<64x32xf32, #tpu.memory_space<vmem>>, vector<64x32xf32>
      %c0_123 = arith.constant 0 : index
      %c0_124 = arith.constant 0 : index
      %192 = vector.load %arg4[%c0_123, %c0_124] : memref<1x32xf32, #tpu.memory_space<vmem>>, vector<1x32xf32>
      %c0_125 = arith.constant 0 : index
      %c0_126 = arith.constant 0 : index
      %193 = vector.load %arg5[%c0_125, %c0_126] : memref<1x32xf32, #tpu.memory_space<vmem>>, vector<1x32xf32>
      %cst_127 = arith.constant dense<0.000000e+00> : vector<64xf32>
      %194 = vector.multi_reduction <add>, %191, %cst_127 [1] : vector<64x32xf32> to vector<64xf32>
      %195 = vector.shape_cast %194 : vector<64xf32> to vector<64x1xf32>
      %cst_128 = arith.constant 3.200000e+01 : f32
      %196 = vector.broadcast %cst_128 : f32 to vector<64x1xf32>
      %197 = arith.divf %195, %196 : vector<64x1xf32>
      %198 = vector.broadcast %197 : vector<64x1xf32> to vector<64x32xf32>
      %199 = arith.subf %191, %198 : vector<64x32xf32>
      %200 = arith.mulf %199, %199 : vector<64x32xf32>
      %cst_129 = arith.constant dense<0.000000e+00> : vector<64xf32>
      %201 = vector.multi_reduction <add>, %200, %cst_129 [1] : vector<64x32xf32> to vector<64xf32>
      %202 = vector.shape_cast %201 : vector<64xf32> to vector<64x1xf32>
      %cst_130 = arith.constant 3.200000e+01 : f32
      %203 = vector.broadcast %cst_130 : f32 to vector<64x1xf32>
      %204 = arith.divf %202, %203 : vector<64x1xf32>
      %cst_131 = arith.constant 9.99999996E-13 : f32
      %205 = vector.broadcast %cst_131 : f32 to vector<64x1xf32>
      %206 = arith.addf %204, %205 : vector<64x1xf32>
      %207 = math.rsqrt %206 : vector<64x1xf32>
      %208 = vector.broadcast %207 : vector<64x1xf32> to vector<64x32xf32>
      %209 = arith.mulf %199, %208 : vector<64x32xf32>
      %210 = vector.broadcast %192 : vector<1x32xf32> to vector<64x32xf32>
      %211 = arith.mulf %210, %209 : vector<64x32xf32>
      %212 = vector.broadcast %193 : vector<1x32xf32> to vector<64x32xf32>
      %213 = arith.addf %211, %212 : vector<64x32xf32>
      %c0_132 = arith.constant 0 : index
      %c0_133 = arith.constant 0 : index
      %214 = vector.load %arg22[%c0_132, %c0_133] : memref<64x32xf32, #tpu.memory_space<vmem>>, vector<64x32xf32>
      tpu.vector_store %arg22[%c0_132, %c0_133], %213 {strides = array<i32>} : memref<64x32xf32, #tpu.memory_space<vmem>>, vector<64x32xf32>,
    } else {
    }
    %c0 = arith.constant 0 : index
    %c0_1 = arith.constant 0 : index
    %3 = vector.load %arg2[%c0, %c0_1] : memref<8x8xi32, #tpu.memory_space<vmem>>, vector<8x8xi32>
    %c0_i32_2 = arith.constant 0 : i32
    %4 = vector.broadcast %c0_i32_2 : i32 to vector<8x8xi32>
    %5 = arith.cmpi sgt, %3, %4 : vector<8x8xi32>
    %6 = vector.shape_cast %5 : vector<8x8xi1> to vector<8x1x8xi1>
    %7 = tpu.iota {dimensions = array<i32: 0>} : vector<8x8xi32>
    %8 = tpu.iota {dimensions = array<i32: 1>} : vector<8x8xi32>
    %9 = arith.cmpi sle, %8, %7 : vector<8x8xi32>
    %10 = vector.shape_cast %9 : vector<8x8xi1> to vector<1x8x8xi1>
    %11 = vector.broadcast %10 : vector<1x8x8xi1> to vector<8x8x8xi1>
    %12 = vector.broadcast %6 : vector<8x1x8xi1> to vector<8x8x8xi1>
    %13 = arith.andi %11, %12 : vector<8x8x8xi1>
    %cst = arith.constant 0.000000e+00 : f32
    %cst_3 = arith.constant -1.000000e+04 : f32
    %14 = vector.broadcast %cst : f32 to vector<8x8x8xf32>
    %15 = vector.broadcast %cst_3 : f32 to vector<8x8x8xf32>
    %16 = arith.select %13, %14, %15 : vector<8x8x8xi1>, vector<8x8x8xf32>
    %c0_4 = arith.constant 0 : index
    %c0_5 = arith.constant 0 : index
    %17 = vector.load %arg22[%c0_4, %c0_5] : memref<64x32xf32, #tpu.memory_space<vmem>>, vector<64x32xf32>
    %18 = arith.truncf %17 : vector<64x32xf32> to vector<64x32xbf16>
    %c0_6 = arith.constant 0 : index
    %c0_7 = arith.constant 0 : index
    %c0_8 = arith.constant 0 : index
    %19 = vector.load %arg13[%c0_6, %c0_7, %c0_8] : memref<1x1x32xf32, #tpu.memory_space<vmem>>, vector<1x1x32xf32>
    %20 = vector.shape_cast %19 : vector<1x1x32xf32> to vector<1x32xf32>
    %c0_9 = arith.constant 0 : index
    %c0_10 = arith.constant 0 : index
    %c0_11 = arith.constant 0 : index
    %c0_12 = arith.constant 0 : index
    %21 = vector.load %arg6[%c0_9, %c0_10, %c0_11, %c0_12] : memref<1x2x32x16xbf16, #tpu.memory_space<vmem>>, vector<1x1x32x16xbf16>
    %22 = vector.shape_cast %21 : vector<1x1x32x16xbf16> to vector<32x16xbf16>
    %cst_13 = arith.constant dense<0.000000e+00> : vector<64x16xf32>
    %23 = tpu.matmul %18, %22, %cst_13 {dimension_numbers = #tpu.dot_dimension_numbers<[1], [0], [0], [1], [0, 0, 1, 1], [], []>} : vector<64x32xbf16>, vector<32x16xbf16>, vector<64x16xf32> -> vector<64x16xf32>
    %c0_14 = arith.constant 0 : index
    %c0_15 = arith.constant 0 : index
    %c0_16 = arith.constant 0 : index
    %c0_17 = arith.constant 0 : index
    %24 = vector.load %arg7[%c0_14, %c0_15, %c0_16, %c0_17] : memref<1x2x1x16xf32, #tpu.memory_space<vmem>>, vector<1x1x1x16xf32>
    %25 = vector.shape_cast %24 : vector<1x1x1x16xf32> to vector<1x16xf32>
    %26 = vector.broadcast %25 : vector<1x16xf32> to vector<64x16xf32>
    %27 = arith.addf %23, %26 : vector<64x16xf32>
    %28 = vector.shape_cast %27 : vector<64x16xf32> to vector<8x8x16xf32>
    %c0_18 = arith.constant 0 : index
    %c0_19 = arith.constant 0 : index
    %c0_20 = arith.constant 0 : index
    %c0_21 = arith.constant 0 : index
    %29 = vector.load %arg8[%c0_18, %c0_19, %c0_20, %c0_21] : memref<1x2x32x16xbf16, #tpu.memory_space<vmem>>, vector<1x1x32x16xbf16>
    %30 = vector.shape_cast %29 : vector<1x1x32x16xbf16> to vector<32x16xbf16>
    %cst_22 = arith.constant dense<0.000000e+00> : vector<64x16xf32>
    %31 = tpu.matmul %18, %30, %cst_22 {dimension_numbers = #tpu.dot_dimension_numbers<[1], [0], [0], [1], [0, 0, 1, 1], [], []>} : vector<64x32xbf16>, vector<32x16xbf16>, vector<64x16xf32> -> vector<64x16xf32>
    %c0_23 = arith.constant 0 : index
    %c0_24 = arith.constant 0 : index
    %c0_25 = arith.constant 0 : index
    %c0_26 = arith.constant 0 : index
    %32 = vector.load %arg9[%c0_23, %c0_24, %c0_25, %c0_26] : memref<1x2x1x16xf32, #tpu.memory_space<vmem>>, vector<1x1x1x16xf32>
    %33 = vector.shape_cast %32 : vector<1x1x1x16xf32> to vector<1x16xf32>
    %34 = vector.broadcast %33 : vector<1x16xf32> to vector<64x16xf32>
    %35 = arith.addf %31, %34 : vector<64x16xf32>
    %36 = vector.shape_cast %35 : vector<64x16xf32> to vector<8x8x16xf32>
    %c0_27 = arith.constant 0 : index
    %c0_28 = arith.constant 0 : index
    %c0_29 = arith.constant 0 : index
    %c0_30 = arith.constant 0 : index
    %37 = vector.load %arg10[%c0_27, %c0_28, %c0_29, %c0_30] : memref<1x2x32x16xbf16, #tpu.memory_space<vmem>>, vector<1x1x32x16xbf16>
    %38 = vector.shape_cast %37 : vector<1x1x32x16xbf16> to vector<32x16xbf16>
    %cst_31 = arith.constant dense<0.000000e+00> : vector<64x16xf32>
    %39 = tpu.matmul %18, %38, %cst_31 {dimension_numbers = #tpu.dot_dimension_numbers<[1], [0], [0], [1], [0, 0, 1, 1], [], []>} : vector<64x32xbf16>, vector<32x16xbf16>, vector<64x16xf32> -> vector<64x16xf32>
    %c0_32 = arith.constant 0 : index
    %c0_33 = arith.constant 0 : index
    %c0_34 = arith.constant 0 : index
    %c0_35 = arith.constant 0 : index
    %40 = vector.load %arg11[%c0_32, %c0_33, %c0_34, %c0_35] : memref<1x2x1x16xf32, #tpu.memory_space<vmem>>, vector<1x1x1x16xf32>
    %41 = vector.shape_cast %40 : vector<1x1x1x16xf32> to vector<1x16xf32>
    %42 = vector.broadcast %41 : vector<1x16xf32> to vector<64x16xf32>
    %43 = arith.addf %39, %42 : vector<64x16xf32>
    %44 = vector.shape_cast %43 : vector<64x16xf32> to vector<8x8x16xf32>
    %45 = arith.truncf %28 : vector<8x8x16xf32> to vector<8x8x16xbf16>
    %46 = arith.truncf %36 : vector<8x8x16xf32> to vector<8x8x16xbf16>
    "tpu.trace_start"() <{level = 10 : i32, message = "bqd,bkd->bqk"}> : () -> ()
    %cst_36 = arith.constant dense<0.000000e+00> : vector<8x8x8xf32>
    %47 = tpu.matmul %45, %46, %cst_36 {dimension_numbers = #tpu.dot_dimension_numbers<[2], [2], [1], [1], [0, 0, 0, 1, 1, 1], [0], [0]>} : vector<8x8x16xbf16>, vector<8x8x16xbf16>, vector<8x8x8xf32> -> vector<8x8x8xf32>
    "tpu.trace_stop"() : () -> ()
    %48 = arith.addf %47, %16 : vector<8x8x8xf32>
    %cst_37 = arith.constant dense<0xFF800000> : vector<8x8xf32>
    %49 = vector.multi_reduction <maximumf>, %48, %cst_37 [2] : vector<8x8x8xf32> to vector<8x8xf32>
    %50 = vector.shape_cast %49 : vector<8x8xf32> to vector<8x8x1xf32>
    %51 = vector.broadcast %50 : vector<8x8x1xf32> to vector<8x8x8xf32>
    %52 = arith.subf %48, %51 : vector<8x8x8xf32>
    %53 = math.exp %52 : vector<8x8x8xf32>
    %cst_38 = arith.constant dense<0.000000e+00> : vector<8x8xf32>
    %54 = vector.multi_reduction <add>, %53, %cst_38 [2] : vector<8x8x8xf32> to vector<8x8xf32>
    %55 = vector.shape_cast %54 : vector<8x8xf32> to vector<8x8x1xf32>
    %56 = tpu.reciprocal %55 {approx = true} : vector<8x8x1xf32> -> vector<8x8x1xf32>
    %57 = vector.broadcast %56 : vector<8x8x1xf32> to vector<8x8x8xf32>
    %58 = arith.mulf %53, %57 : vector<8x8x8xf32>
    %59 = arith.truncf %58 : vector<8x8x8xf32> to vector<8x8x8xbf16>
    %60 = arith.truncf %44 : vector<8x8x16xf32> to vector<8x8x16xbf16>
    "tpu.trace_start"() <{level = 10 : i32, message = "bqk,bkd->bqd"}> : () -> ()
    %cst_39 = arith.constant dense<0.000000e+00> : vector<8x8x16xf32>
    %61 = tpu.matmul %59, %60, %cst_39 {dimension_numbers = #tpu.dot_dimension_numbers<[2], [1], [1], [2], [0, 0, 0, 1, 1, 2], [0], [0]>} : vector<8x8x8xbf16>, vector<8x8x16xbf16>, vector<8x8x16xf32> -> vector<8x8x16xf32>
    "tpu.trace_stop"() : () -> ()
    %62 = vector.shape_cast %61 : vector<8x8x16xf32> to vector<64x16xf32>
    %63 = arith.truncf %62 : vector<64x16xf32> to vector<64x16xbf16>
    %c0_40 = arith.constant 0 : index
    %c0_41 = arith.constant 0 : index
    %c0_42 = arith.constant 0 : index
    %c0_43 = arith.constant 0 : index
    %64 = vector.load %arg12[%c0_40, %c0_41, %c0_42, %c0_43] : memref<1x2x16x32xbf16, #tpu.memory_space<vmem>>, vector<1x1x16x32xbf16>
    %65 = vector.shape_cast %64 : vector<1x1x16x32xbf16> to vector<16x32xbf16>
    %cst_44 = arith.constant dense<0.000000e+00> : vector<64x32xf32>
    %66 = tpu.matmul %63, %65, %cst_44 {dimension_numbers = #tpu.dot_dimension_numbers<[1], [0], [0], [1], [0, 0, 1, 1], [], []>} : vector<64x16xbf16>, vector<16x32xbf16>, vector<64x32xf32> -> vector<64x32xf32>
    %67 = vector.broadcast %20 : vector<1x32xf32> to vector<64x32xf32>
    %68 = arith.addf %67, %66 : vector<64x32xf32>
    %c0_45 = arith.constant 0 : index
    %c1 = arith.constant 1 : index
    %c0_46 = arith.constant 0 : index
    %c0_47 = arith.constant 0 : index
    %69 = vector.load %arg6[%c0_45, %c1, %c0_46, %c0_47] : memref<1x2x32x16xbf16, #tpu.memory_space<vmem>>, vector<1x1x32x16xbf16>
    %70 = vector.shape_cast %69 : vector<1x1x32x16xbf16> to vector<32x16xbf16>
    %cst_48 = arith.constant dense<0.000000e+00> : vector<64x16xf32>
    %71 = tpu.matmul %18, %70, %cst_48 {dimension_numbers = #tpu.dot_dimension_numbers<[1], [0], [0], [1], [0, 0, 1, 1], [], []>} : vector<64x32xbf16>, vector<32x16xbf16>, vector<64x16xf32> -> vector<64x16xf32>
    %c0_49 = arith.constant 0 : index
    %c1_50 = arith.constant 1 : index
    %c0_51 = arith.constant 0 : index
    %c0_52 = arith.constant 0 : index
    %72 = vector.load %arg7[%c0_49, %c1_50, %c0_51, %c0_52] : memref<1x2x1x16xf32, #tpu.memory_space<vmem>>, vector<1x1x1x16xf32>
    %73 = vector.shape_cast %72 : vector<1x1x1x16xf32> to vector<1x16xf32>
    %74 = vector.broadcast %73 : vector<1x16xf32> to vector<64x16xf32>
    %75 = arith.addf %71, %74 : vector<64x16xf32>
    %76 = vector.shape_cast %75 : vector<64x16xf32> to vector<8x8x16xf32>
    %c0_53 = arith.constant 0 : index
    %c1_54 = arith.constant 1 : index
    %c0_55 = arith.constant 0 : index
    %c0_56 = arith.constant 0 : index
    %77 = vector.load %arg8[%c0_53, %c1_54, %c0_55, %c0_56] : memref<1x2x32x16xbf16, #tpu.memory_space<vmem>>, vector<1x1x32x16xbf16>
    %78 = vector.shape_cast %77 : vector<1x1x32x16xbf16> to vector<32x16xbf16>
    %cst_57 = arith.constant dense<0.000000e+00> : vector<64x16xf32>
    %79 = tpu.matmul %18, %78, %cst_57 {dimension_numbers = #tpu.dot_dimension_numbers<[1], [0], [0], [1], [0, 0, 1, 1], [], []>} : vector<64x32xbf16>, vector<32x16xbf16>, vector<64x16xf32> -> vector<64x16xf32>
    %c0_58 = arith.constant 0 : index
    %c1_59 = arith.constant 1 : index
    %c0_60 = arith.constant 0 : index
    %c0_61 = arith.constant 0 : index
    %80 = vector.load %arg9[%c0_58, %c1_59, %c0_60, %c0_61] : memref<1x2x1x16xf32, #tpu.memory_space<vmem>>, vector<1x1x1x16xf32>
    %81 = vector.shape_cast %80 : vector<1x1x1x16xf32> to vector<1x16xf32>
    %82 = vector.broadcast %81 : vector<1x16xf32> to vector<64x16xf32>
    %83 = arith.addf %79, %82 : vector<64x16xf32>
    %84 = vector.shape_cast %83 : vector<64x16xf32> to vector<8x8x16xf32>
    %c0_62 = arith.constant 0 : index
    %c1_63 = arith.constant 1 : index
    %c0_64 = arith.constant 0 : index
    %c0_65 = arith.constant 0 : index
    %85 = vector.load %arg10[%c0_62, %c1_63, %c0_64, %c0_65] : memref<1x2x32x16xbf16, #tpu.memory_space<vmem>>, vector<1x1x32x16xbf16>
    %86 = vector.shape_cast %85 : vector<1x1x32x16xbf16> to vector<32x16xbf16>
    %cst_66 = arith.constant dense<0.000000e+00> : vector<64x16xf32>
    %87 = tpu.matmul %18, %86, %cst_66 {dimension_numbers = #tpu.dot_dimension_numbers<[1], [0], [0], [1], [0, 0, 1, 1], [], []>} : vector<64x32xbf16>, vector<32x16xbf16>, vector<64x16xf32> -> vector<64x16xf32>
    %c0_67 = arith.constant 0 : index
    %c1_68 = arith.constant 1 : index
    %c0_69 = arith.constant 0 : index
    %c0_70 = arith.constant 0 : index
    %88 = vector.load %arg11[%c0_67, %c1_68, %c0_69, %c0_70] : memref<1x2x1x16xf32, #tpu.memory_space<vmem>>, vector<1x1x1x16xf32>
    %89 = vector.shape_cast %88 : vector<1x1x1x16xf32> to vector<1x16xf32>
    %90 = vector.broadcast %89 : vector<1x16xf32> to vector<64x16xf32>
    %91 = arith.addf %87, %90 : vector<64x16xf32>
    %92 = vector.shape_cast %91 : vector<64x16xf32> to vector<8x8x16xf32>
    %93 = arith.truncf %76 : vector<8x8x16xf32> to vector<8x8x16xbf16>
    %94 = arith.truncf %84 : vector<8x8x16xf32> to vector<8x8x16xbf16>
    "tpu.trace_start"() <{level = 10 : i32, message = "bqd,bkd->bqk"}> : () -> ()
    %cst_71 = arith.constant dense<0.000000e+00> : vector<8x8x8xf32>
    %95 = tpu.matmul %93, %94, %cst_71 {dimension_numbers = #tpu.dot_dimension_numbers<[2], [2], [1], [1], [0, 0, 0, 1, 1, 1], [0], [0]>} : vector<8x8x16xbf16>, vector<8x8x16xbf16>, vector<8x8x8xf32> -> vector<8x8x8xf32>
    "tpu.trace_stop"() : () -> ()
    %96 = arith.addf %95, %16 : vector<8x8x8xf32>
    %cst_72 = arith.constant dense<0xFF800000> : vector<8x8xf32>
    %97 = vector.multi_reduction <maximumf>, %96, %cst_72 [2] : vector<8x8x8xf32> to vector<8x8xf32>
    %98 = vector.shape_cast %97 : vector<8x8xf32> to vector<8x8x1xf32>
    %99 = vector.broadcast %98 : vector<8x8x1xf32> to vector<8x8x8xf32>
    %100 = arith.subf %96, %99 : vector<8x8x8xf32>
    %101 = math.exp %100 : vector<8x8x8xf32>
    %cst_73 = arith.constant dense<0.000000e+00> : vector<8x8xf32>
    %102 = vector.multi_reduction <add>, %101, %cst_73 [2] : vector<8x8x8xf32> to vector<8x8xf32>
    %103 = vector.shape_cast %102 : vector<8x8xf32> to vector<8x8x1xf32>
    %104 = tpu.reciprocal %103 {approx = true} : vector<8x8x1xf32> -> vector<8x8x1xf32>
    %105 = vector.broadcast %104 : vector<8x8x1xf32> to vector<8x8x8xf32>
    %106 = arith.mulf %101, %105 : vector<8x8x8xf32>
    %107 = arith.truncf %106 : vector<8x8x8xf32> to vector<8x8x8xbf16>
    %108 = arith.truncf %92 : vector<8x8x16xf32> to vector<8x8x16xbf16>
    "tpu.trace_start"() <{level = 10 : i32, message = "bqk,bkd->bqd"}> : () -> ()
    %cst_74 = arith.constant dense<0.000000e+00> : vector<8x8x16xf32>
    %109 = tpu.matmul %107, %108, %cst_74 {dimension_numbers = #tpu.dot_dimension_numbers<[2], [1], [1], [2], [0, 0, 0, 1, 1, 2], [0], [0]>} : vector<8x8x8xbf16>, vector<8x8x16xbf16>, vector<8x8x16xf32> -> vector<8x8x16xf32>
    "tpu.trace_stop"() : () -> ()
    %110 = vector.shape_cast %109 : vector<8x8x16xf32> to vector<64x16xf32>
    %111 = arith.truncf %110 : vector<64x16xf32> to vector<64x16xbf16>
    %c0_75 = arith.constant 0 : index
    %c1_76 = arith.constant 1 : index
    %c0_77 = arith.constant 0 : index
    %c0_78 = arith.constant 0 : index
    %112 = vector.load %arg12[%c0_75, %c1_76, %c0_77, %c0_78] : memref<1x2x16x32xbf16, #tpu.memory_space<vmem>>, vector<1x1x16x32xbf16>
    %113 = vector.shape_cast %112 : vector<1x1x16x32xbf16> to vector<16x32xbf16>
    %cst_79 = arith.constant dense<0.000000e+00> : vector<64x32xf32>
    %114 = tpu.matmul %111, %113, %cst_79 {dimension_numbers = #tpu.dot_dimension_numbers<[1], [0], [0], [1], [0, 0, 1, 1], [], []>} : vector<64x16xbf16>, vector<16x32xbf16>, vector<64x32xf32> -> vector<64x32xf32>
    %115 = arith.addf %68, %114 : vector<64x32xf32>
    %116 = arith.addf %115, %17 : vector<64x32xf32>
    %c0_80 = arith.constant 0 : index
    %c0_81 = arith.constant 0 : index
    %c0_82 = arith.constant 0 : index
    %117 = vector.load %arg14[%c0_80, %c0_81, %c0_82] : memref<1x1x32xf32, #tpu.memory_space<vmem>>, vector<1x1x32xf32>
    %118 = vector.shape_cast %117 : vector<1x1x32xf32> to vector<1x32xf32>
    %c0_83 = arith.constant 0 : index
    %c0_84 = arith.constant 0 : index
    %c0_85 = arith.constant 0 : index
    %119 = vector.load %arg15[%c0_83, %c0_84, %c0_85] : memref<1x1x32xf32, #tpu.memory_space<vmem>>, vector<1x1x32xf32>
    %120 = vector.shape_cast %119 : vector<1x1x32xf32> to vector<1x32xf32>
    %cst_86 = arith.constant dense<0.000000e+00> : vector<64xf32>
    %121 = vector.multi_reduction <add>, %116, %cst_86 [1] : vector<64x32xf32> to vector<64xf32>
    %122 = vector.shape_cast %121 : vector<64xf32> to vector<64x1xf32>
    %cst_87 = arith.constant 3.200000e+01 : f32
    %123 = vector.broadcast %cst_87 : f32 to vector<64x1xf32>
    %124 = arith.divf %122, %123 : vector<64x1xf32>
    %125 = vector.broadcast %124 : vector<64x1xf32> to vector<64x32xf32>
    %126 = arith.subf %116, %125 : vector<64x32xf32>
    %127 = arith.mulf %126, %126 : vector<64x32xf32>
    %cst_88 = arith.constant dense<0.000000e+00> : vector<64xf32>
    %128 = vector.multi_reduction <add>, %127, %cst_88 [1] : vector<64x32xf32> to vector<64xf32>
    %129 = vector.shape_cast %128 : vector<64xf32> to vector<64x1xf32>
    %cst_89 = arith.constant 3.200000e+01 : f32
    %130 = vector.broadcast %cst_89 : f32 to vector<64x1xf32>
    %131 = arith.divf %129, %130 : vector<64x1xf32>
    %cst_90 = arith.constant 9.99999996E-13 : f32
    %132 = vector.broadcast %cst_90 : f32 to vector<64x1xf32>
    %133 = arith.addf %131, %132 : vector<64x1xf32>
    %134 = math.rsqrt %133 : vector<64x1xf32>
    %135 = vector.broadcast %134 : vector<64x1xf32> to vector<64x32xf32>
    %136 = arith.mulf %126, %135 : vector<64x32xf32>
    %137 = vector.broadcast %118 : vector<1x32xf32> to vector<64x32xf32>
    %138 = arith.mulf %137, %136 : vector<64x32xf32>
    %139 = vector.broadcast %120 : vector<1x32xf32> to vector<64x32xf32>
    %140 = arith.addf %138, %139 : vector<64x32xf32>
    %141 = arith.truncf %140 : vector<64x32xf32> to vector<64x32xbf16>
    %c0_91 = arith.constant 0 : index
    %c0_92 = arith.constant 0 : index
    %c0_93 = arith.constant 0 : index
    %142 = vector.load %arg16[%c0_91, %c0_92, %c0_93] : memref<1x32x128xbf16, #tpu.memory_space<vmem>>, vector<1x32x128xbf16>
    %143 = vector.shape_cast %142 : vector<1x32x128xbf16> to vector<32x128xbf16>
    %cst_94 = arith.constant dense<0.000000e+00> : vector<64x128xf32>
    %144 = tpu.matmul %141, %143, %cst_94 {dimension_numbers = #tpu.dot_dimension_numbers<[1], [0], [0], [1], [0, 0, 1, 1], [], []>} : vector<64x32xbf16>, vector<32x128xbf16>, vector<64x128xf32> -> vector<64x128xf32>
    %c0_95 = arith.constant 0 : index
    %c0_96 = arith.constant 0 : index
    %c0_97 = arith.constant 0 : index
    %145 = vector.load %arg17[%c0_95, %c0_96, %c0_97] : memref<1x1x128xf32, #tpu.memory_space<vmem>>, vector<1x1x128xf32>
    %146 = vector.shape_cast %145 : vector<1x1x128xf32> to vector<1x128xf32>
    %147 = vector.broadcast %146 : vector<1x128xf32> to vector<64x128xf32>
    %148 = arith.addf %144, %147 : vector<64x128xf32>
    %cst_98 = arith.constant 5.000000e-01 : f32
    %149 = vector.broadcast %cst_98 : f32 to vector<64x128xf32>
    %150 = arith.mulf %149, %148 : vector<64x128xf32>
    %cst_99 = arith.constant 1.41421354 : f32
    %151 = vector.broadcast %cst_99 : f32 to vector<64x128xf32>
    %152 = arith.divf %148, %151 : vector<64x128xf32>
    %153 = math.erf %152 : vector<64x128xf32>
    %cst_100 = arith.constant 1.000000e+00 : f32
    %154 = vector.broadcast %cst_100 : f32 to vector<64x128xf32>
    %155 = arith.addf %154, %153 : vector<64x128xf32>
    %156 = arith.mulf %150, %155 : vector<64x128xf32>
    %157 = arith.truncf %156 : vector<64x128xf32> to vector<64x128xbf16>
    %c0_101 = arith.constant 0 : index
    %c0_102 = arith.constant 0 : index
    %c0_103 = arith.constant 0 : index
    %158 = vector.load %arg18[%c0_101, %c0_102, %c0_103] : memref<1x128x32xbf16, #tpu.memory_space<vmem>>, vector<1x128x32xbf16>
    %159 = vector.shape_cast %158 : vector<1x128x32xbf16> to vector<128x32xbf16>
    %cst_104 = arith.constant dense<0.000000e+00> : vector<64x32xf32>
    %160 = tpu.matmul %157, %159, %cst_104 {dimension_numbers = #tpu.dot_dimension_numbers<[1], [0], [0], [1], [0, 0, 1, 1], [], []>} : vector<64x128xbf16>, vector<128x32xbf16>, vector<64x32xf32> -> vector<64x32xf32>
    %c0_105 = arith.constant 0 : index
    %c0_106 = arith.constant 0 : index
    %c0_107 = arith.constant 0 : index
    %161 = vector.load %arg19[%c0_105, %c0_106, %c0_107] : memref<1x1x32xf32, #tpu.memory_space<vmem>>, vector<1x1x32xf32>
    %162 = vector.shape_cast %161 : vector<1x1x32xf32> to vector<1x32xf32>
    %163 = vector.broadcast %162 : vector<1x32xf32> to vector<64x32xf32>
    %164 = arith.addf %160, %163 : vector<64x32xf32>
    %165 = arith.addf %164, %140 : vector<64x32xf32>
    %c0_108 = arith.constant 0 : index
    %c0_109 = arith.constant 0 : index
    %c0_110 = arith.constant 0 : index
    %166 = vector.load %arg20[%c0_108, %c0_109, %c0_110] : memref<1x1x32xf32, #tpu.memory_space<vmem>>, vector<1x1x32xf32>
    %167 = vector.shape_cast %166 : vector<1x1x32xf32> to vector<1x32xf32>
    %c0_111 = arith.constant 0 : index
    %c0_112 = arith.constant 0 : index
    %c0_113 = arith.constant 0 : index
    %168 = vector.load %arg21[%c0_111, %c0_112, %c0_113] : memref<1x1x32xf32, #tpu.memory_space<vmem>>, vector<1x1x32xf32>
    %169 = vector.shape_cast %168 : vector<1x1x32xf32> to vector<1x32xf32>
    %cst_114 = arith.constant dense<0.000000e+00> : vector<64xf32>
    %170 = vector.multi_reduction <add>, %165, %cst_114 [1] : vector<64x32xf32> to vector<64xf32>
    %171 = vector.shape_cast %170 : vector<64xf32> to vector<64x1xf32>
    %cst_115 = arith.constant 3.200000e+01 : f32
    %172 = vector.broadcast %cst_115 : f32 to vector<64x1xf32>
    %173 = arith.divf %171, %172 : vector<64x1xf32>
    %174 = vector.broadcast %173 : vector<64x1xf32> to vector<64x32xf32>
    %175 = arith.subf %165, %174 : vector<64x32xf32>
    %176 = arith.mulf %175, %175 : vector<64x32xf32>
    %cst_116 = arith.constant dense<0.000000e+00> : vector<64xf32>
    %177 = vector.multi_reduction <add>, %176, %cst_116 [1] : vector<64x32xf32> to vector<64xf32>
    %178 = vector.shape_cast %177 : vector<64xf32> to vector<64x1xf32>
    %cst_117 = arith.constant 3.200000e+01 : f32
    %179 = vector.broadcast %cst_117 : f32 to vector<64x1xf32>
    %180 = arith.divf %178, %179 : vector<64x1xf32>
    %cst_118 = arith.constant 9.99999996E-13 : f32
    %181 = vector.broadcast %cst_118 : f32 to vector<64x1xf32>
    %182 = arith.addf %180, %181 : vector<64x1xf32>
    %183 = math.rsqrt %182 : vector<64x1xf32>
    %184 = vector.broadcast %183 : vector<64x1xf32> to vector<64x32xf32>
    %185 = arith.mulf %175, %184 : vector<64x32xf32>
    %186 = vector.broadcast %167 : vector<1x32xf32> to vector<64x32xf32>
    %187 = arith.mulf %186, %185 : vector<64x32xf32>
    %188 = vector.broadcast %169 : vector<1x32xf32> to vector<64x32xf32>
    %189 = arith.addf %187, %188 : vector<64x32xf32>
    %c0_119 = arith.constant 0 : index
    %c0_120 = arith.constant 0 : index
    %190 = vector.load %arg22[%c0_119, %c0_120] : memref<64x32xf32, #tpu.memory_space<vmem>>, vector<64x32xf32>
    tpu.vector_store %arg22[%c0_119, %c0_120], %189 {strides = array<i32>} : memref<64x32xf32, #tpu.memory_space<vmem>>, vector<64x32xf32>,
    return
  }
  func.func @transform_0(%arg0: i32, %arg1: i32) -> (i32, i32) {
    %c0_i32 = arith.constant 0 : i32
    %c0_i32_0 = arith.constant 0 : i32
    return %arg0, %c0_i32 : i32, i32
  }
  func.func @transform_1(%arg0: i32, %arg1: i32) -> (i32, i32) {
    %c0_i32 = arith.constant 0 : i32
    %c0_i32_0 = arith.constant 0 : i32
    return %arg0, %c0_i32 : i32, i32
  }
  func.func @transform_2(%arg0: i32, %arg1: i32) -> (i32, i32) {
    %c0_i32 = arith.constant 0 : i32
    %c0_i32_0 = arith.constant 0 : i32
    %c0_i32_1 = arith.constant 0 : i32
    return %c0_i32, %c0_i32_0 : i32, i32
  }
  func.func @transform_3(%arg0: i32, %arg1: i32) -> (i32, i32) {
    %c0_i32 = arith.constant 0 : i32
    %c0_i32_0 = arith.constant 0 : i32
    %c0_i32_1 = arith.constant 0 : i32
    return %c0_i32, %c0_i32_0 : i32, i32
  }
  func.func @transform_4(%arg0: i32, %arg1: i32) -> (i32, i32, i32, i32) {
    %c0_i32 = arith.constant 0 : i32
    %c0_i32_0 = arith.constant 0 : i32
    %c0_i32_1 = arith.constant 0 : i32
    %c0_i32_2 = arith.constant 0 : i32
    return %arg1, %c0_i32, %c0_i32_0, %c0_i32_1 : i32, i32, i32, i32
  }
  func.func @transform_5(%arg0: i32, %arg1: i32) -> (i32, i32, i32, i32) {
    %c0_i32 = arith.constant 0 : i32
    %c0_i32_0 = arith.constant 0 : i32
    %c0_i32_1 = arith.constant 0 : i32
    %c0_i32_2 = arith.constant 0 : i32
    return %arg1, %c0_i32, %c0_i32_0, %c0_i32_1 : i32, i32, i32, i32
  }
  func.func @transform_6(%arg0: i32, %arg1: i32) -> (i32, i32, i32, i32) {
    %c0_i32 = arith.constant 0 : i32
    %c0_i32_0 = arith.constant 0 : i32
    %c0_i32_1 = arith.constant 0 : i32
    %c0_i32_2 = arith.constant 0 : i32
    return %arg1, %c0_i32, %c0_i32_0, %c0_i32_1 : i32, i32, i32, i32
  }
  func.func @transform_7(%arg0: i32, %arg1: i32) -> (i32, i32, i32, i32) {
    %c0_i32 = arith.constant 0 : i32
    %c0_i32_0 = arith.constant 0 : i32
    %c0_i32_1 = arith.constant 0 : i32
    %c0_i32_2 = arith.constant 0 : i32
    return %arg1, %c0_i32, %c0_i32_0, %c0_i32_1 : i32, i32, i32, i32
  }
  func.func @transform_8(%arg0: i32, %arg1: i32) -> (i32, i32, i32, i32) {
    %c0_i32 = arith.constant 0 : i32
    %c0_i32_0 = arith.constant 0 : i32
    %c0_i32_1 = arith.constant 0 : i32
    %c0_i32_2 = arith.constant 0 : i32
    return %arg1, %c0_i32, %c0_i32_0, %c0_i32_1 : i32, i32, i32, i32
  }
  func.func @transform_9(%arg0: i32, %arg1: i32) -> (i32, i32, i32, i32) {
    %c0_i32 = arith.constant 0 : i32
    %c0_i32_0 = arith.constant 0 : i32
    %c0_i32_1 = arith.constant 0 : i32
    %c0_i32_2 = arith.constant 0 : i32
    return %arg1, %c0_i32, %c0_i32_0, %c0_i32_1 : i32, i32, i32, i32
  }
  func.func @transform_10(%arg0: i32, %arg1: i32) -> (i32, i32, i32, i32) {
    %c0_i32 = arith.constant 0 : i32
    %c0_i32_0 = arith.constant 0 : i32
    %c0_i32_1 = arith.constant 0 : i32
    %c0_i32_2 = arith.constant 0 : i32
    return %arg1, %c0_i32, %c0_i32_0, %c0_i32_1 : i32, i32, i32, i32
  }
  func.func @transform_11(%arg0: i32, %arg1: i32) -> (i32, i32, i32) {
    %c0_i32 = arith.constant 0 : i32
    %c0_i32_0 = arith.constant 0 : i32
    %c0_i32_1 = arith.constant 0 : i32
    return %arg1, %c0_i32, %c0_i32_0 : i32, i32, i32
  }
  func.func @transform_12(%arg0: i32, %arg1: i32) -> (i32, i32, i32) {
    %c0_i32 = arith.constant 0 : i32
    %c0_i32_0 = arith.constant 0 : i32
    %c0_i32_1 = arith.constant 0 : i32
    return %arg1, %c0_i32, %c0_i32_0 : i32, i32, i32
  }
  func.func @transform_13(%arg0: i32, %arg1: i32) -> (i32, i32, i32) {
    %c0_i32 = arith.constant 0 : i32
    %c0_i32_0 = arith.constant 0 : i32
    %c0_i32_1 = arith.constant 0 : i32
    return %arg1, %c0_i32, %c0_i32_0 : i32, i32, i32
  }
  func.func @transform_14(%arg0: i32, %arg1: i32) -> (i32, i32, i32) {
    %c0_i32 = arith.constant 0 : i32
    %c0_i32_0 = arith.constant 0 : i32
    %c0_i32_1 = arith.constant 0 : i32
    return %arg1, %c0_i32, %c0_i32_0 : i32, i32, i32
  }
  func.func @transform_15(%arg0: i32, %arg1: i32) -> (i32, i32, i32) {
    %c0_i32 = arith.constant 0 : i32
    %c0_i32_0 = arith.constant 0 : i32
    %c0_i32_1 = arith.constant 0 : i32
    return %arg1, %c0_i32, %c0_i32_0 : i32, i32, i32
  }
  func.func @transform_16(%arg0: i32, %arg1: i32) -> (i32, i32, i32) {
    %c0_i32 = arith.constant 0 : i32
    %c0_i32_0 = arith.constant 0 : i32
    %c0_i32_1 = arith.constant 0 : i32
    return %arg1, %c0_i32, %c0_i32_0 : i32, i32, i32
  }
  func.func @transform_17(%arg0: i32, %arg1: i32) -> (i32, i32, i32) {
    %c0_i32 = arith.constant 0 : i32
    %c0_i32_0 = arith.constant 0 : i32
    %c0_i32_1 = arith.constant 0 : i32
    return %arg1, %c0_i32, %c0_i32_0 : i32, i32, i32
  }
  func.func @transform_18(%arg0: i32, %arg1: i32) -> (i32, i32, i32) {
    %c0_i32 = arith.constant 0 : i32
    %c0_i32_0 = arith.constant 0 : i32
    %c0_i32_1 = arith.constant 0 : i32
    return %arg1, %c0_i32, %c0_i32_0 : i32, i32, i32
  }
  func.func @transform_19(%arg0: i32, %arg1: i32) -> (i32, i32, i32) {
    %c0_i32 = arith.constant 0 : i32
    %c0_i32_0 = arith.constant 0 : i32
    %c0_i32_1 = arith.constant 0 : i32
    return %arg1, %c0_i32, %c0_i32_0 : i32, i32, i32
  }
  func.func @transform_20(%arg0: i32, %arg1: i32) -> (i32, i32) {
    %c0_i32 = arith.constant 0 : i32
    %c0_i32_0 = arith.constant 0 : i32
    return %arg0, %c0_i32 : i32, i32
  }
}

</mosaic_0001>

<llo_original>
// kernel: tpu_custom_call.1
$region0: #{tpu_custom_call.1}
  #allocation0 [shape = 'u32[]', space=smem, size = 0x4, offset = 0x4, fixed_abs, tag = 'smem constant byte address 0x4 - core index']
  #allocation1 [shape = 'u32[72,128]{1,0:T(1,128)}', space=vmem, size = 0x9000, scoped, tag = 'internal scratch']
  %s0 = inlined_call_operand.vmem [shape: s32[16,8], index: 0, kind: input, shape index: {}]
  %s1 = inlined_call_operand.vmem [shape: f32[128,32], index: 1, kind: input, shape index: {}]
  %s2 = inlined_call_operand.vmem [shape: f32[1,32], index: 2, kind: input, shape index: {}]
  %s3 = inlined_call_operand.vmem [shape: f32[1,32], index: 3, kind: input, shape index: {}]
  %s4 = inlined_call_operand.vmem [shape: bf16[2,2,32,16], index: 4, kind: input, shape index: {}]
  %s5 = inlined_call_operand.vmem [shape: f32[2,2,1,16], index: 5, kind: input, shape index: {}]
  %s6 = inlined_call_operand.vmem [shape: bf16[2,2,32,16], index: 6, kind: input, shape index: {}]
  %s7 = inlined_call_operand.vmem [shape: f32[2,2,1,16], index: 7, kind: input, shape index: {}]
  %s8 = inlined_call_operand.vmem [shape: bf16[2,2,32,16], index: 8, kind: input, shape index: {}]
  %s9 = inlined_call_operand.vmem [shape: f32[2,2,1,16], index: 9, kind: input, shape index: {}]
  %s10 = inlined_call_operand.vmem [shape: bf16[2,2,16,32], index: 10, kind: input, shape index: {}]
  %s11 = inlined_call_operand.vmem [shape: f32[2,1,32], index: 11, kind: input, shape index: {}]
  %s12 = inlined_call_operand.vmem [shape: f32[2,1,32], index: 12, kind: input, shape index: {}]
  %s13 = inlined_call_operand.vmem [shape: f32[2,1,32], index: 13, kind: input, shape index: {}]
  %s14 = inlined_call_operand.vmem [shape: bf16[2,32,128], index: 14, kind: input, shape index: {}]
  %s15 = inlined_call_operand.vmem [shape: f32[2,1,128], index: 15, kind: input, shape index: {}]
  %s16 = inlined_call_operand.vmem [shape: bf16[2,128,32], index: 16, kind: input, shape index: {}]
  %s17 = inlined_call_operand.vmem [shape: f32[2,1,32], index: 17, kind: input, shape index: {}]
  %s18 = inlined_call_operand.vmem [shape: f32[2,1,32], index: 18, kind: input, shape index: {}]
  %s19 = inlined_call_operand.vmem [shape: f32[2,1,32], index: 19, kind: input, shape index: {}]
  %s20 = inlined_call_operand.vmem [shape: f32[128,32], index: 20, kind: output, shape index: {}]
  %s21 = sld [smem:[#allocation0]]
  $region117: #{tpu_custom_call.1} parent=0
    _
  %s23 = ssub.s32 1, %s21
  %s24 = scalar_select 0, %s23, %s21
  loop: start=0, step=1, limit=6
  $region2: #{tpu_custom_call.1} parent=0 // loop_pre_header
    _
  $region3: #{tpu_custom_call.1} parent=0 // loop_header
    %s26 = sphi 0, %s30
    %p27 = scmp.ge.s32.totalorder %s26, 6
    %s33 = sphi 0, %s45
    %s34 = sphi 0, %s41
    %s35 = sphi 0, %s33
    %s36 = sphi 0, %s34
    %s37 = sphi 0, %s35
    %s38 = sphi 0, %s36
    %s48 = sphi 0, %s50
    %s51 = sphi 0, %s48
    %s52 = sphi 0, %s51
    %s68 = sphi 0, %s52
    %s74 = sphi 0, %s76
    %s77 = sphi 0, %s74
    %s78 = sphi 0, %s77
    %s94 = sphi 0, %s78
    %s98 = sphi 0, %s98
    %s100 = sphi 0, %s98
    %s101 = sphi 0, %s100
    %s115 = sphi 0, %s101
    %s119 = sphi 0, %s119
    %s121 = sphi 0, %s119
    %s122 = sphi 0, %s121
    %s136 = sphi 0, %s122
    %s142 = sphi 0, %s144
    %s145 = sphi 0, %s142
    %s146 = sphi 0, %s145
    %s162 = sphi 0, %s146
    %s168 = sphi 0, %s170
    %s171 = sphi 0, %s168
    %s172 = sphi 0, %s171
    %s188 = sphi 0, %s172
    %s194 = sphi 0, %s196
    %s197 = sphi 0, %s194
    %s198 = sphi 0, %s197
    %s214 = sphi 0, %s198
    %s220 = sphi 0, %s222
    %s223 = sphi 0, %s220
    %s224 = sphi 0, %s223
    %s240 = sphi 0, %s224
    %s246 = sphi 0, %s248
    %s249 = sphi 0, %s246
    %s250 = sphi 0, %s249
    %s266 = sphi 0, %s250
    %s272 = sphi 0, %s274
    %s275 = sphi 0, %s272
    %s276 = sphi 0, %s275
    %s292 = sphi 0, %s276
    %s298 = sphi 0, %s300
    %s301 = sphi 0, %s298
    %s302 = sphi 0, %s301
    %s318 = sphi 0, %s302
    %s324 = sphi 0, %s326
    %s327 = sphi 0, %s324
    %s328 = sphi 0, %s327
    %s344 = sphi 0, %s328
    %s350 = sphi 0, %s352
    %s353 = sphi 0, %s350
    %s354 = sphi 0, %s353
    %s370 = sphi 0, %s354
    %s376 = sphi 0, %s378
    %s379 = sphi 0, %s376
    %s380 = sphi 0, %s379
    %s396 = sphi 0, %s380
    %s402 = sphi 0, %s404
    %s405 = sphi 0, %s402
    %s406 = sphi 0, %s405
    %s422 = sphi 0, %s406
    %s428 = sphi 0, %s430
    %s431 = sphi 0, %s428
    %s432 = sphi 0, %s431
    %s448 = sphi 0, %s432
    %s454 = sphi 0, %s456
    %s457 = sphi 0, %s454
    %s458 = sphi 0, %s457
    %s474 = sphi 0, %s458
    %s480 = sphi 0, %s482
    %s483 = sphi 0, %s480
    %s484 = sphi 0, %s483
    %s500 = sphi 0, %s484
    %s506 = sphi 0, %s508
    %s509 = sphi 0, %s506
    %s510 = sphi 0, %s509
    %s526 = sphi 0, %s510
    %s532 = sphi 0, %s534
    %s535 = sphi 0, %s532
    %s536 = sphi 0, %s535
    %s552 = sphi 0, %s536
    %s558 = sphi 0, %s560
    %s561 = sphi 0, %s558
    %s562 = sphi 0, %s561
    %s578 = sphi 0, %s562
  $region4: #{tpu_custom_call.1} parent=0 // loop_header_branch
    %29 = sbr.rel (%p27) target = $region8
  $region5: #{tpu_custom_call.1} parent=0 // loop_body
    %s31 = ssub.s32 %s26, 1
    %s32 = ssub.s32 %s26, 2
    %s39 = sadd.s32 1, %s34
    %p40 = scmp.ge.s32.totalorder %s39, 2
    %s41 = scalar_select %p40, 0, %s39
    %s42 = sadd.s32 1, %s33
    %s43 = scalar_select %p40, %s42, %s33
    %p44 = scmp.ge.s32.totalorder %s43, 2
    %s45 = scalar_select %p44, 0, %s43
    %s46 = ssub.s32 %s33, %s45
    %p47 = scmp.eq.s32.totalorder %s46, 0
    %s49 = sadd.s32 %s48, 1
    %s50 = scalar_select %p47, %s48, %s49
    %p53 = pneg %p47
    %p54 = scmp.eq.s32.totalorder %s26, 3
    %p55 = por %p53, %p54
    %p56 = scmp.ne.s32.totalorder %s48, %s51
    %p57 = scmp.eq.s32.totalorder %s26, 0
    %p58 = por %p56, %p57
    %p59 = scmp.ne.s32.totalorder %s48, %s51
    %p60 = scmp.eq.s32.totalorder %s31, 3
    %p61 = por %p59, %p60
    %p62 = scmp.ne.s32.totalorder %s51, %s52
    %p63 = scmp.eq.s32.totalorder %s31, 0
    %p64 = por %p62, %p63
    %p65 = scmp.ne.s32.totalorder %s51, %s52
    %p66 = scmp.eq.s32.totalorder %s32, 3
    %p67 = por %p65, %p66
    %p69 = scmp.ne.s32.totalorder %s52, %s68
    %p70 = scmp.eq.s32.totalorder %s32, 0
    %p71 = por %p69, %p70
    %s72 = ssub.s32 %s33, %s45
    %p73 = scmp.eq.s32.totalorder %s72, 0
    %s75 = sadd.s32 %s74, 1
    %s76 = scalar_select %p73, %s74, %s75
    %p79 = pneg %p73
    %p80 = scmp.eq.s32.totalorder %s26, 3
    %p81 = por %p79, %p80
    %p82 = scmp.ne.s32.totalorder %s74, %s77
    %p83 = scmp.eq.s32.totalorder %s26, 0
    %p84 = por %p82, %p83
    %p85 = scmp.ne.s32.totalorder %s74, %s77
    %p86 = scmp.eq.s32.totalorder %s31, 3
    %p87 = por %p85, %p86
    %p88 = scmp.ne.s32.totalorder %s77, %s78
    %p89 = scmp.eq.s32.totalorder %s31, 0
    %p90 = por %p88, %p89
    %p91 = scmp.ne.s32.totalorder %s77, %s78
    %p92 = scmp.eq.s32.totalorder %s32, 3
    %p93 = por %p91, %p92
    %p95 = scmp.ne.s32.totalorder %s78, %s94
    %p96 = scmp.eq.s32.totalorder %s32, 0
    %p97 = por %p95, %p96
    %s99 = sadd.s32 %s98, 1
    %p102 = scmp.eq.s32.totalorder %s26, 3
    %p103 = scmp.ne.s32.totalorder %s98, %s100
    %p104 = scmp.eq.s32.totalorder %s26, 0
    %p105 = por %p103, %p104
    %p106 = scmp.ne.s32.totalorder %s98, %s100
    %p107 = scmp.eq.s32.totalorder %s31, 3
    %p108 = por %p106, %p107
    %p109 = scmp.ne.s32.totalorder %s100, %s101
    %p110 = scmp.eq.s32.totalorder %s31, 0
    %p111 = por %p109, %p110
    %p112 = scmp.ne.s32.totalorder %s100, %s101
    %p113 = scmp.eq.s32.totalorder %s32, 3
    %p114 = por %p112, %p113
    %p116 = scmp.ne.s32.totalorder %s101, %s115
    %p117 = scmp.eq.s32.totalorder %s32, 0
    %p118 = por %p116, %p117
    %s120 = sadd.s32 %s119, 1
    %p123 = scmp.eq.s32.totalorder %s26, 3
    %p124 = scmp.ne.s32.totalorder %s119, %s121
    %p125 = scmp.eq.s32.totalorder %s26, 0
    %p126 = por %p124, %p125
    %p127 = scmp.ne.s32.totalorder %s119, %s121
    %p128 = scmp.eq.s32.totalorder %s31, 3
    %p129 = por %p127, %p128
    %p130 = scmp.ne.s32.totalorder %s121, %s122
    %p131 = scmp.eq.s32.totalorder %s31, 0
    %p132 = por %p130, %p131
    %p133 = scmp.ne.s32.totalorder %s121, %s122
    %p134 = scmp.eq.s32.totalorder %s32, 3
    %p135 = por %p133, %p134
    %p137 = scmp.ne.s32.totalorder %s122, %s136
    %p138 = scmp.eq.s32.totalorder %s32, 0
    %p139 = por %p137, %p138
    %s140 = ssub.s32 %s34, %s41
    %p141 = scmp.eq.s32.totalorder %s140, 0
    %s143 = sadd.s32 %s142, 1
    %s144 = scalar_select %p141, %s142, %s143
    %p147 = pneg %p141
    %p148 = scmp.eq.s32.totalorder %s26, 3
    %p149 = por %p147, %p148
    %p150 = scmp.ne.s32.totalorder %s142, %s145
    %p151 = scmp.eq.s32.totalorder %s26, 0
    %p152 = por %p150, %p151
    %p153 = scmp.ne.s32.totalorder %s142, %s145
    %p154 = scmp.eq.s32.totalorder %s31, 3
    %p155 = por %p153, %p154
    %p156 = scmp.ne.s32.totalorder %s145, %s146
    %p157 = scmp.eq.s32.totalorder %s31, 0
    %p158 = por %p156, %p157
    %p159 = scmp.ne.s32.totalorder %s145, %s146
    %p160 = scmp.eq.s32.totalorder %s32, 3
    %p161 = por %p159, %p160
    %p163 = scmp.ne.s32.totalorder %s146, %s162
    %p164 = scmp.eq.s32.totalorder %s32, 0
    %p165 = por %p163, %p164
    %s166 = ssub.s32 %s34, %s41
    %p167 = scmp.eq.s32.totalorder %s166, 0
    %s169 = sadd.s32 %s168, 1
    %s170 = scalar_select %p167, %s168, %s169
    %p173 = pneg %p167
    %p174 = scmp.eq.s32.totalorder %s26, 3
    %p175 = por %p173, %p174
    %p176 = scmp.ne.s32.totalorder %s168, %s171
    %p177 = scmp.eq.s32.totalorder %s26, 0
    %p178 = por %p176, %p177
    %p179 = scmp.ne.s32.totalorder %s168, %s171
    %p180 = scmp.eq.s32.totalorder %s31, 3
    %p181 = por %p179, %p180
    %p182 = scmp.ne.s32.totalorder %s171, %s172
    %p183 = scmp.eq.s32.totalorder %s31, 0
    %p184 = por %p182, %p183
    %p185 = scmp.ne.s32.totalorder %s171, %s172
    %p186 = scmp.eq.s32.totalorder %s32, 3
    %p187 = por %p185, %p186
    %p189 = scmp.ne.s32.totalorder %s172, %s188
    %p190 = scmp.eq.s32.totalorder %s32, 0
    %p191 = por %p189, %p190
    %s192 = ssub.s32 %s34, %s41
    %p193 = scmp.eq.s32.totalorder %s192, 0
    %s195 = sadd.s32 %s194, 1
    %s196 = scalar_select %p193, %s194, %s195
    %p199 = pneg %p193
    %p200 = scmp.eq.s32.totalorder %s26, 3
    %p201 = por %p199, %p200
    %p202 = scmp.ne.s32.totalorder %s194, %s197
    %p203 = scmp.eq.s32.totalorder %s26, 0
    %p204 = por %p202, %p203
    %p205 = scmp.ne.s32.totalorder %s194, %s197
    %p206 = scmp.eq.s32.totalorder %s31, 3
    %p207 = por %p205, %p206
    %p208 = scmp.ne.s32.totalorder %s197, %s198
    %p209 = scmp.eq.s32.totalorder %s31, 0
    %p210 = por %p208, %p209
    %p211 = scmp.ne.s32.totalorder %s197, %s198
    %p212 = scmp.eq.s32.totalorder %s32, 3
    %p213 = por %p211, %p212
    %p215 = scmp.ne.s32.totalorder %s198, %s214
    %p216 = scmp.eq.s32.totalorder %s32, 0
    %p217 = por %p215, %p216
    %s218 = ssub.s32 %s34, %s41
    %p219 = scmp.eq.s32.totalorder %s218, 0
    %s221 = sadd.s32 %s220, 1
    %s222 = scalar_select %p219, %s220, %s221
    %p225 = pneg %p219
    %p226 = scmp.eq.s32.totalorder %s26, 3
    %p227 = por %p225, %p226
    %p228 = scmp.ne.s32.totalorder %s220, %s223
    %p229 = scmp.eq.s32.totalorder %s26, 0
    %p230 = por %p228, %p229
    %p231 = scmp.ne.s32.totalorder %s220, %s223
    %p232 = scmp.eq.s32.totalorder %s31, 3
    %p233 = por %p231, %p232
    %p234 = scmp.ne.s32.totalorder %s223, %s224
    %p235 = scmp.eq.s32.totalorder %s31, 0
    %p236 = por %p234, %p235
    %p237 = scmp.ne.s32.totalorder %s223, %s224
    %p238 = scmp.eq.s32.totalorder %s32, 3
    %p239 = por %p237, %p238
    %p241 = scmp.ne.s32.totalorder %s224, %s240
    %p242 = scmp.eq.s32.totalorder %s32, 0
    %p243 = por %p241, %p242
    %s244 = ssub.s32 %s34, %s41
    %p245 = scmp.eq.s32.totalorder %s244, 0
    %s247 = sadd.s32 %s246, 1
    %s248 = scalar_select %p245, %s246, %s247
    %p251 = pneg %p245
    %p252 = scmp.eq.s32.totalorder %s26, 3
    %p253 = por %p251, %p252
    %p254 = scmp.ne.s32.totalorder %s246, %s249
    %p255 = scmp.eq.s32.totalorder %s26, 0
    %p256 = por %p254, %p255
    %p257 = scmp.ne.s32.totalorder %s246, %s249
    %p258 = scmp.eq.s32.totalorder %s31, 3
    %p259 = por %p257, %p258
    %p260 = scmp.ne.s32.totalorder %s249, %s250
    %p261 = scmp.eq.s32.totalorder %s31, 0
    %p262 = por %p260, %p261
    %p263 = scmp.ne.s32.totalorder %s249, %s250
    %p264 = scmp.eq.s32.totalorder %s32, 3
    %p265 = por %p263, %p264
    %p267 = scmp.ne.s32.totalorder %s250, %s266
    %p268 = scmp.eq.s32.totalorder %s32, 0
    %p269 = por %p267, %p268
    %s270 = ssub.s32 %s34, %s41
    %p271 = scmp.eq.s32.totalorder %s270, 0
    %s273 = sadd.s32 %s272, 1
    %s274 = scalar_select %p271, %s272, %s273
    %p277 = pneg %p271
    %p278 = scmp.eq.s32.totalorder %s26, 3
    %p279 = por %p277, %p278
    %p280 = scmp.ne.s32.totalorder %s272, %s275
    %p281 = scmp.eq.s32.totalorder %s26, 0
    %p282 = por %p280, %p281
    %p283 = scmp.ne.s32.totalorder %s272, %s275
    %p284 = scmp.eq.s32.totalorder %s31, 3
    %p285 = por %p283, %p284
    %p286 = scmp.ne.s32.totalorder %s275, %s276
    %p287 = scmp.eq.s32.totalorder %s31, 0
    %p288 = por %p286, %p287
    %p289 = scmp.ne.s32.totalorder %s275, %s276
    %p290 = scmp.eq.s32.totalorder %s32, 3
    %p291 = por %p289, %p290
    %p293 = scmp.ne.s32.totalorder %s276, %s292
    %p294 = scmp.eq.s32.totalorder %s32, 0
    %p295 = por %p293, %p294
    %s296 = ssub.s32 %s34, %s41
    %p297 = scmp.eq.s32.totalorder %s296, 0
    %s299 = sadd.s32 %s298, 1
    %s300 = scalar_select %p297, %s298, %s299
    %p303 = pneg %p297
    %p304 = scmp.eq.s32.totalorder %s26, 3
    %p305 = por %p303, %p304
    %p306 = scmp.ne.s32.totalorder %s298, %s301
    %p307 = scmp.eq.s32.totalorder %s26, 0
    %p308 = por %p306, %p307
    %p309 = scmp.ne.s32.totalorder %s298, %s301
    %p310 = scmp.eq.s32.totalorder %s31, 3
    %p311 = por %p309, %p310
    %p312 = scmp.ne.s32.totalorder %s301, %s302
    %p313 = scmp.eq.s32.totalorder %s31, 0
    %p314 = por %p312, %p313
    %p315 = scmp.ne.s32.totalorder %s301, %s302
    %p316 = scmp.eq.s32.totalorder %s32, 3
    %p317 = por %p315, %p316
    %p319 = scmp.ne.s32.totalorder %s302, %s318
    %p320 = scmp.eq.s32.totalorder %s32, 0
    %p321 = por %p319, %p320
    %s322 = ssub.s32 %s34, %s41
    %p323 = scmp.eq.s32.totalorder %s322, 0
    %s325 = sadd.s32 %s324, 1
    %s326 = scalar_select %p323, %s324, %s325
    %p329 = pneg %p323
    %p330 = scmp.eq.s32.totalorder %s26, 3
    %p331 = por %p329, %p330
    %p332 = scmp.ne.s32.totalorder %s324, %s327
    %p333 = scmp.eq.s32.totalorder %s26, 0
    %p334 = por %p332, %p333
    %p335 = scmp.ne.s32.totalorder %s324, %s327
    %p336 = scmp.eq.s32.totalorder %s31, 3
    %p337 = por %p335, %p336
    %p338 = scmp.ne.s32.totalorder %s327, %s328
    %p339 = scmp.eq.s32.totalorder %s31, 0
    %p340 = por %p338, %p339
    %p341 = scmp.ne.s32.totalorder %s327, %s328
    %p342 = scmp.eq.s32.totalorder %s32, 3
    %p343 = por %p341, %p342
    %p345 = scmp.ne.s32.totalorder %s328, %s344
    %p346 = scmp.eq.s32.totalorder %s32, 0
    %p347 = por %p345, %p346
    %s348 = ssub.s32 %s34, %s41
    %p349 = scmp.eq.s32.totalorder %s348, 0
    %s351 = sadd.s32 %s350, 1
    %s352 = scalar_select %p349, %s350, %s351
    %p355 = pneg %p349
    %p356 = scmp.eq.s32.totalorder %s26, 3
    %p357 = por %p355, %p356
    %p358 = scmp.ne.s32.totalorder %s350, %s353
    %p359 = scmp.eq.s32.totalorder %s26, 0
    %p360 = por %p358, %p359
    %p361 = scmp.ne.s32.totalorder %s350, %s353
    %p362 = scmp.eq.s32.totalorder %s31, 3
    %p363 = por %p361, %p362
    %p364 = scmp.ne.s32.totalorder %s353, %s354
    %p365 = scmp.eq.s32.totalorder %s31, 0
    %p366 = por %p364, %p365
    %p367 = scmp.ne.s32.totalorder %s353, %s354
    %p368 = scmp.eq.s32.totalorder %s32, 3
    %p369 = por %p367, %p368
    %p371 = scmp.ne.s32.totalorder %s354, %s370
    %p372 = scmp.eq.s32.totalorder %s32, 0
    %p373 = por %p371, %p372
    %s374 = ssub.s32 %s34, %s41
    %p375 = scmp.eq.s32.totalorder %s374, 0
    %s377 = sadd.s32 %s376, 1
    %s378 = scalar_select %p375, %s376, %s377
    %p381 = pneg %p375
    %p382 = scmp.eq.s32.totalorder %s26, 3
    %p383 = por %p381, %p382
    %p384 = scmp.ne.s32.totalorder %s376, %s379
    %p385 = scmp.eq.s32.totalorder %s26, 0
    %p386 = por %p384, %p385
    %p387 = scmp.ne.s32.totalorder %s376, %s379
    %p388 = scmp.eq.s32.totalorder %s31, 3
    %p389 = por %p387, %p388
    %p390 = scmp.ne.s32.totalorder %s379, %s380
    %p391 = scmp.eq.s32.totalorder %s31, 0
    %p392 = por %p390, %p391
    %p393 = scmp.ne.s32.totalorder %s379, %s380
    %p394 = scmp.eq.s32.totalorder %s32, 3
    %p395 = por %p393, %p394
    %p397 = scmp.ne.s32.totalorder %s380, %s396
    %p398 = scmp.eq.s32.totalorder %s32, 0
    %p399 = por %p397, %p398
    %s400 = ssub.s32 %s34, %s41
    %p401 = scmp.eq.s32.totalorder %s400, 0
    %s403 = sadd.s32 %s402, 1
    %s404 = scalar_select %p401, %s402, %s403
    %p407 = pneg %p401
    %p408 = scmp.eq.s32.totalorder %s26, 3
    %p409 = por %p407, %p408
    %p410 = scmp.ne.s32.totalorder %s402, %s405
    %p411 = scmp.eq.s32.totalorder %s26, 0
    %p412 = por %p410, %p411
    %p413 = scmp.ne.s32.totalorder %s402, %s405
    %p414 = scmp.eq.s32.totalorder %s31, 3
    %p415 = por %p413, %p414
    %p416 = scmp.ne.s32.totalorder %s405, %s406
    %p417 = scmp.eq.s32.totalorder %s31, 0
    %p418 = por %p416, %p417
    %p419 = scmp.ne.s32.totalorder %s405, %s406
    %p420 = scmp.eq.s32.totalorder %s32, 3
    %p421 = por %p419, %p420
    %p423 = scmp.ne.s32.totalorder %s406, %s422
    %p424 = scmp.eq.s32.totalorder %s32, 0
    %p425 = por %p423, %p424
    %s426 = ssub.s32 %s34, %s41
    %p427 = scmp.eq.s32.totalorder %s426, 0
    %s429 = sadd.s32 %s428, 1
    %s430 = scalar_select %p427, %s428, %s429
    %p433 = pneg %p427
    %p434 = scmp.eq.s32.totalorder %s26, 3
    %p435 = por %p433, %p434
    %p436 = scmp.ne.s32.totalorder %s428, %s431
    %p437 = scmp.eq.s32.totalorder %s26, 0
    %p438 = por %p436, %p437
    %p439 = scmp.ne.s32.totalorder %s428, %s431
    %p440 = scmp.eq.s32.totalorder %s31, 3
    %p441 = por %p439, %p440
    %p442 = scmp.ne.s32.totalorder %s431, %s432
    %p443 = scmp.eq.s32.totalorder %s31, 0
    %p444 = por %p442, %p443
    %p445 = scmp.ne.s32.totalorder %s431, %s432
    %p446 = scmp.eq.s32.totalorder %s32, 3
    %p447 = por %p445, %p446
    %p449 = scmp.ne.s32.totalorder %s432, %s448
    %p450 = scmp.eq.s32.totalorder %s32, 0
    %p451 = por %p449, %p450
    %s452 = ssub.s32 %s34, %s41
    %p453 = scmp.eq.s32.totalorder %s452, 0
    %s455 = sadd.s32 %s454, 1
    %s456 = scalar_select %p453, %s454, %s455
    %p459 = pneg %p453
    %p460 = scmp.eq.s32.totalorder %s26, 3
    %p461 = por %p459, %p460
    %p462 = scmp.ne.s32.totalorder %s454, %s457
    %p463 = scmp.eq.s32.totalorder %s26, 0
    %p464 = por %p462, %p463
    %p465 = scmp.ne.s32.totalorder %s454, %s457
    %p466 = scmp.eq.s32.totalorder %s31, 3
    %p467 = por %p465, %p466
    %p468 = scmp.ne.s32.totalorder %s457, %s458
    %p469 = scmp.eq.s32.totalorder %s31, 0
    %p470 = por %p468, %p469
    %p471 = scmp.ne.s32.totalorder %s457, %s458
    %p472 = scmp.eq.s32.totalorder %s32, 3
    %p473 = por %p471, %p472
    %p475 = scmp.ne.s32.totalorder %s458, %s474
    %p476 = scmp.eq.s32.totalorder %s32, 0
    %p477 = por %p475, %p476
    %s478 = ssub.s32 %s34, %s41
    %p479 = scmp.eq.s32.totalorder %s478, 0
    %s481 = sadd.s32 %s480, 1
    %s482 = scalar_select %p479, %s480, %s481
    %p485 = pneg %p479
    %p486 = scmp.eq.s32.totalorder %s26, 3
    %p487 = por %p485, %p486
    %p488 = scmp.ne.s32.totalorder %s480, %s483
    %p489 = scmp.eq.s32.totalorder %s26, 0
    %p490 = por %p488, %p489
    %p491 = scmp.ne.s32.totalorder %s480, %s483
    %p492 = scmp.eq.s32.totalorder %s31, 3
    %p493 = por %p491, %p492
    %p494 = scmp.ne.s32.totalorder %s483, %s484
    %p495 = scmp.eq.s32.totalorder %s31, 0
    %p496 = por %p494, %p495
    %p497 = scmp.ne.s32.totalorder %s483, %s484
    %p498 = scmp.eq.s32.totalorder %s32, 3
    %p499 = por %p497, %p498
    %p501 = scmp.ne.s32.totalorder %s484, %s500
    %p502 = scmp.eq.s32.totalorder %s32, 0
    %p503 = por %p501, %p502
    %s504 = ssub.s32 %s34, %s41
    %p505 = scmp.eq.s32.totalorder %s504, 0
    %s507 = sadd.s32 %s506, 1
    %s508 = scalar_select %p505, %s506, %s507
    %p511 = pneg %p505
    %p512 = scmp.eq.s32.totalorder %s26, 3
    %p513 = por %p511, %p512
    %p514 = scmp.ne.s32.totalorder %s506, %s509
    %p515 = scmp.eq.s32.totalorder %s26, 0
    %p516 = por %p514, %p515
    %p517 = scmp.ne.s32.totalorder %s506, %s509
    %p518 = scmp.eq.s32.totalorder %s31, 3
    %p519 = por %p517, %p518
    %p520 = scmp.ne.s32.totalorder %s509, %s510
    %p521 = scmp.eq.s32.totalorder %s31, 0
    %p522 = por %p520, %p521
    %p523 = scmp.ne.s32.totalorder %s509, %s510
    %p524 = scmp.eq.s32.totalorder %s32, 3
    %p525 = por %p523, %p524
    %p527 = scmp.ne.s32.totalorder %s510, %s526
    %p528 = scmp.eq.s32.totalorder %s32, 0
    %p529 = por %p527, %p528
    %s530 = ssub.s32 %s34, %s41
    %p531 = scmp.eq.s32.totalorder %s530, 0
    %s533 = sadd.s32 %s532, 1
    %s534 = scalar_select %p531, %s532, %s533
    %p537 = pneg %p531
    %p538 = scmp.eq.s32.totalorder %s26, 3
    %p539 = por %p537, %p538
    %p540 = scmp.ne.s32.totalorder %s532, %s535
    %p541 = scmp.eq.s32.totalorder %s26, 0
    %p542 = por %p540, %p541
    %p543 = scmp.ne.s32.totalorder %s532, %s535
    %p544 = scmp.eq.s32.totalorder %s31, 3
    %p545 = por %p543, %p544
    %p546 = scmp.ne.s32.totalorder %s535, %s536
    %p547 = scmp.eq.s32.totalorder %s31, 0
    %p548 = por %p546, %p547
    %p549 = scmp.ne.s32.totalorder %s535, %s536
    %p550 = scmp.eq.s32.totalorder %s32, 3
    %p551 = por %p549, %p550
    %p553 = scmp.ne.s32.totalorder %s536, %s552
    %p554 = scmp.eq.s32.totalorder %s32, 0
    %p555 = por %p553, %p554
    %s556 = ssub.s32 %s33, %s45
    %p557 = scmp.eq.s32.totalorder %s556, 0
    %s559 = sadd.s32 %s558, 1
    %s560 = scalar_select %p557, %s558, %s559
    %p563 = pneg %p557
    %p564 = scmp.eq.s32.totalorder %s26, 3
    %p565 = por %p563, %p564
    %p566 = scmp.ne.s32.totalorder %s558, %s561
    %p567 = scmp.eq.s32.totalorder %s26, 0
    %p568 = por %p566, %p567
    %p569 = scmp.ne.s32.totalorder %s558, %s561
    %p570 = scmp.eq.s32.totalorder %s31, 3
    %p571 = por %p569, %p570
    %p572 = scmp.ne.s32.totalorder %s561, %s562
    %p573 = scmp.eq.s32.totalorder %s31, 0
    %p574 = por %p572, %p573
    %p575 = scmp.ne.s32.totalorder %s561, %s562
    %p576 = scmp.eq.s32.totalorder %s32, 3
    %p577 = por %p575, %p576
    %p579 = scmp.ne.s32.totalorder %s562, %s578
    %p580 = scmp.eq.s32.totalorder %s32, 0
    %p581 = por %p579, %p580
    %p582 = scmp.le.s32.totalorder 1, %s26
    %p583 = scmp.lt.s32.totalorder %s26, 5
    %p584 = pnand %p582, %p583
    %p585 = pneg %p584
    // Predicated region
    $region9: #{tpu_custom_call.1} parent=5 // pred_check
      _
    $region10: #{tpu_custom_call.1} parent=5 // pred_check_branch
      %587 = sbr.rel (%p584) target = $region12
    $region11: #{tpu_custom_call.1} parent=5 // pred_region
      %s588 = ssub.s32 %s26, 1
      // Predicated region
      $region13: #{tpu_custom_call.1} parent=11 // pred_check
        %p589 = pneg %p111
      $region14: #{tpu_custom_call.1} parent=11 // pred_check_branch
        %591 = sbr.rel (%p589) target = $region16
      $region15: #{tpu_custom_call.1} parent=11 // pred_region
        _
      $region16: #{tpu_custom_call.1} parent=11 // pred_fallthru
        _
      // Predicated region
      $region17: #{tpu_custom_call.1} parent=11 // pred_check
        %p592 = pneg %p132
      $region18: #{tpu_custom_call.1} parent=11 // pred_check_branch
        %594 = sbr.rel (%p592) target = $region20
      $region19: #{tpu_custom_call.1} parent=11 // pred_region
        _
      $region20: #{tpu_custom_call.1} parent=11 // pred_fallthru
        _
    $region12: #{tpu_custom_call.1} parent=5 // pred_fallthru
      _
    %p595 = scmp.lt.s32.totalorder %s26, 4
    // Predicated region
    $region21: #{tpu_custom_call.1} parent=5 // pred_check
      %p596 = pneg %p595
    $region22: #{tpu_custom_call.1} parent=5 // pred_check_branch
      %598 = sbr.rel (%p596) target = $region24
    $region23: #{tpu_custom_call.1} parent=5 // pred_region
      // Predicated region
      $region25: #{tpu_custom_call.1} parent=23 // pred_check
        %p599 = pneg %p58
      $region26: #{tpu_custom_call.1} parent=23 // pred_check_branch
        %601 = sbr.rel (%p599) target = $region28
      $region27: #{tpu_custom_call.1} parent=23 // pred_region
        %p602 = scmp.lt.s32.totalorder %s33, 1
        %s603 = scalar_select %p602, %s33, 1
        %s604 = smul.addr %s603, 8
        %s605 = scalar_lea.vmem %s0, %s604
      $region28: #{tpu_custom_call.1} parent=23 // pred_fallthru
        _
      // Predicated region
      $region29: #{tpu_custom_call.1} parent=23 // pred_check
        %p606 = pneg %p84
      $region30: #{tpu_custom_call.1} parent=23 // pred_check_branch
        %608 = sbr.rel (%p606) target = $region32
      $region31: #{tpu_custom_call.1} parent=23 // pred_region
        %s609 = smul.u32 8, %s33
        %p610 = scmp.lt.s32.totalorder %s609, 15
        %s611 = scalar_select %p610, %s609, 15
        %s612 = smul.addr %s611, 8
        %s613 = scalar_lea.vmem %s1, %s612
        %s614 = smul.u32 8, %s33
      $region32: #{tpu_custom_call.1} parent=23 // pred_fallthru
        _
      // Predicated region
      $region33: #{tpu_custom_call.1} parent=23 // pred_check
        %p615 = pneg %p152
      $region34: #{tpu_custom_call.1} parent=23 // pred_check_branch
        %617 = sbr.rel (%p615) target = $region36
      $region35: #{tpu_custom_call.1} parent=23 // pred_region
        %p618 = scmp.lt.s32.totalorder %s34, 1
        %s619 = scalar_select %p618, %s34, 1
        %s620 = smul.addr %s619, 8
        %s621 = smul.addr %s620, 4
        %s622 = scalar_lea.vmem %s4, %s621
      $region36: #{tpu_custom_call.1} parent=23 // pred_fallthru
        _
      // Predicated region
      $region37: #{tpu_custom_call.1} parent=23 // pred_check
        %p623 = pneg %p178
      $region38: #{tpu_custom_call.1} parent=23 // pred_check_branch
        %625 = sbr.rel (%p623) target = $region40
      $region39: #{tpu_custom_call.1} parent=23 // pred_region
        %p626 = scmp.lt.s32.totalorder %s34, 1
        %s627 = scalar_select %p626, %s34, 1
        %s628 = smul.addr %s627, 2
        %s629 = scalar_lea.vmem %s5, %s628
      $region40: #{tpu_custom_call.1} parent=23 // pred_fallthru
        _
      // Predicated region
      $region41: #{tpu_custom_call.1} parent=23 // pred_check
        %p630 = pneg %p204
      $region42: #{tpu_custom_call.1} parent=23 // pred_check_branch
        %632 = sbr.rel (%p630) target = $region44
      $region43: #{tpu_custom_call.1} parent=23 // pred_region
        %p633 = scmp.lt.s32.totalorder %s34, 1
        %s634 = scalar_select %p633, %s34, 1
        %s635 = smul.addr %s634, 8
        %s636 = smul.addr %s635, 4
        %s637 = scalar_lea.vmem %s6, %s636
      $region44: #{tpu_custom_call.1} parent=23 // pred_fallthru
        _
      // Predicated region
      $region45: #{tpu_custom_call.1} parent=23 // pred_check
        %p638 = pneg %p230
      $region46: #{tpu_custom_call.1} parent=23 // pred_check_branch
        %640 = sbr.rel (%p638) target = $region48
      $region47: #{tpu_custom_call.1} parent=23 // pred_region
        %p641 = scmp.lt.s32.totalorder %s34, 1
        %s642 = scalar_select %p641, %s34, 1
        %s643 = smul.addr %s642, 2
        %s644 = scalar_lea.vmem %s7, %s643
      $region48: #{tpu_custom_call.1} parent=23 // pred_fallthru
        _
      // Predicated region
      $region49: #{tpu_custom_call.1} parent=23 // pred_check
        %p645 = pneg %p256
      $region50: #{tpu_custom_call.1} parent=23 // pred_check_branch
        %647 = sbr.rel (%p645) target = $region52
      $region51: #{tpu_custom_call.1} parent=23 // pred_region
        %p648 = scmp.lt.s32.totalorder %s34, 1
        %s649 = scalar_select %p648, %s34, 1
        %s650 = smul.addr %s649, 8
        %s651 = smul.addr %s650, 4
        %s652 = scalar_lea.vmem %s8, %s651
      $region52: #{tpu_custom_call.1} parent=23 // pred_fallthru
        _
      // Predicated region
      $region53: #{tpu_custom_call.1} parent=23 // pred_check
        %p653 = pneg %p282
      $region54: #{tpu_custom_call.1} parent=23 // pred_check_branch
        %655 = sbr.rel (%p653) target = $region56
      $region55: #{tpu_custom_call.1} parent=23 // pred_region
        %p656 = scmp.lt.s32.totalorder %s34, 1
        %s657 = scalar_select %p656, %s34, 1
        %s658 = smul.addr %s657, 2
        %s659 = scalar_lea.vmem %s9, %s658
      $region56: #{tpu_custom_call.1} parent=23 // pred_fallthru
        _
      // Predicated region
      $region57: #{tpu_custom_call.1} parent=23 // pred_check
        %p660 = pneg %p308
      $region58: #{tpu_custom_call.1} parent=23 // pred_check_branch
        %662 = sbr.rel (%p660) target = $region60
      $region59: #{tpu_custom_call.1} parent=23 // pred_region
        %p663 = scmp.lt.s32.totalorder %s34, 1
        %s664 = scalar_select %p663, %s34, 1
        %s665 = smul.addr %s664, 4
        %s666 = smul.addr %s665, 4
        %s667 = scalar_lea.vmem %s10, %s666
      $region60: #{tpu_custom_call.1} parent=23 // pred_fallthru
        _
      // Predicated region
      $region61: #{tpu_custom_call.1} parent=23 // pred_check
        %p668 = pneg %p334
      $region62: #{tpu_custom_call.1} parent=23 // pred_check_branch
        %670 = sbr.rel (%p668) target = $region64
      $region63: #{tpu_custom_call.1} parent=23 // pred_region
        %p671 = scmp.lt.s32.totalorder %s34, 1
        %s672 = scalar_select %p671, %s34, 1
        %s673 = scalar_lea.vmem %s11, %s672
      $region64: #{tpu_custom_call.1} parent=23 // pred_fallthru
        _
      // Predicated region
      $region65: #{tpu_custom_call.1} parent=23 // pred_check
        %p674 = pneg %p360
      $region66: #{tpu_custom_call.1} parent=23 // pred_check_branch
        %676 = sbr.rel (%p674) target = $region68
      $region67: #{tpu_custom_call.1} parent=23 // pred_region
        %p677 = scmp.lt.s32.totalorder %s34, 1
        %s678 = scalar_select %p677, %s34, 1
        %s679 = scalar_lea.vmem %s12, %s678
      $region68: #{tpu_custom_call.1} parent=23 // pred_fallthru
        _
      // Predicated region
      $region69: #{tpu_custom_call.1} parent=23 // pred_check
        %p680 = pneg %p386
      $region70: #{tpu_custom_call.1} parent=23 // pred_check_branch
        %682 = sbr.rel (%p680) target = $region72
      $region71: #{tpu_custom_call.1} parent=23 // pred_region
        %p683 = scmp.lt.s32.totalorder %s34, 1
        %s684 = scalar_select %p683, %s34, 1
        %s685 = scalar_lea.vmem %s13, %s684
      $region72: #{tpu_custom_call.1} parent=23 // pred_fallthru
        _
      // Predicated region
      $region73: #{tpu_custom_call.1} parent=23 // pred_check
        %p686 = pneg %p412
      $region74: #{tpu_custom_call.1} parent=23 // pred_check_branch
        %688 = sbr.rel (%p686) target = $region76
      $region75: #{tpu_custom_call.1} parent=23 // pred_region
        %p689 = scmp.lt.s32.totalorder %s34, 1
        %s690 = scalar_select %p689, %s34, 1
        %s691 = smul.addr %s690, 4
        %s692 = smul.addr %s691, 4
        %s693 = scalar_lea.vmem %s14, %s692
      $region76: #{tpu_custom_call.1} parent=23 // pred_fallthru
        _
      // Predicated region
      $region77: #{tpu_custom_call.1} parent=23 // pred_check
        %p694 = pneg %p438
      $region78: #{tpu_custom_call.1} parent=23 // pred_check_branch
        %696 = sbr.rel (%p694) target = $region80
      $region79: #{tpu_custom_call.1} parent=23 // pred_region
        %p697 = scmp.lt.s32.totalorder %s34, 1
        %s698 = scalar_select %p697, %s34, 1
        %s699 = scalar_lea.vmem %s15, %s698
      $region80: #{tpu_custom_call.1} parent=23 // pred_fallthru
        _
      // Predicated region
      $region81: #{tpu_custom_call.1} parent=23 // pred_check
        %p700 = pneg %p464
      $region82: #{tpu_custom_call.1} parent=23 // pred_check_branch
        %702 = sbr.rel (%p700) target = $region84
      $region83: #{tpu_custom_call.1} parent=23 // pred_region
        %p703 = scmp.lt.s32.totalorder %s34, 1
        %s704 = scalar_select %p703, %s34, 1
        %s705 = smul.addr %s704, 16
        %s706 = smul.addr %s705, 4
        %s707 = scalar_lea.vmem %s16, %s706
      $region84: #{tpu_custom_call.1} parent=23 // pred_fallthru
        _
      // Predicated region
      $region85: #{tpu_custom_call.1} parent=23 // pred_check
        %p708 = pneg %p490
      $region86: #{tpu_custom_call.1} parent=23 // pred_check_branch
        %710 = sbr.rel (%p708) target = $region88
      $region87: #{tpu_custom_call.1} parent=23 // pred_region
        %p711 = scmp.lt.s32.totalorder %s34, 1
        %s712 = scalar_select %p711, %s34, 1
        %s713 = scalar_lea.vmem %s17, %s712
      $region88: #{tpu_custom_call.1} parent=23 // pred_fallthru
        _
      // Predicated region
      $region89: #{tpu_custom_call.1} parent=23 // pred_check
        %p714 = pneg %p516
      $region90: #{tpu_custom_call.1} parent=23 // pred_check_branch
        %716 = sbr.rel (%p714) target = $region92
      $region91: #{tpu_custom_call.1} parent=23 // pred_region
        %p717 = scmp.lt.s32.totalorder %s34, 1
        %s718 = scalar_select %p717, %s34, 1
        %s719 = scalar_lea.vmem %s18, %s718
      $region92: #{tpu_custom_call.1} parent=23 // pred_fallthru
        _
      // Predicated region
      $region93: #{tpu_custom_call.1} parent=23 // pred_check
        %p720 = pneg %p542
      $region94: #{tpu_custom_call.1} parent=23 // pred_check_branch
        %722 = sbr.rel (%p720) target = $region96
      $region95: #{tpu_custom_call.1} parent=23 // pred_region
        %p723 = scmp.lt.s32.totalorder %s34, 1
        %s724 = scalar_select %p723, %s34, 1
        %s725 = scalar_lea.vmem %s19, %s724
      $region96: #{tpu_custom_call.1} parent=23 // pred_fallthru
        _
    $region24: #{tpu_custom_call.1} parent=5 // pred_fallthru
      _
    %p726 = scmp.le.s32.totalorder 1, %s26
    %p727 = scmp.lt.s32.totalorder %s26, 5
    %p728 = pnand %p726, %p727
    %p729 = pneg %p728
    // Predicated region
    $region97: #{tpu_custom_call.1} parent=5 // pred_check
      _
    $region98: #{tpu_custom_call.1} parent=5 // pred_check_branch
      %731 = sbr.rel (%p728) target = $region100
    $region99: #{tpu_custom_call.1} parent=5 // pred_region
      %s732 = ssub.s32 %s26, 1
      %p733 = scmp.lt.s32.totalorder %s35, 1
      %s734 = scalar_select %p733, %s35, 1
      %s735 = smul.addr %s734, 8
      %s736 = scalar_lea.vmem %s0, %s735
      %p737 = pneg %p64
      %p738 = pneg %p61
      %s739 = smul.u32 8, %s35
      %p740 = scmp.lt.s32.totalorder %s739, 15
      %s741 = scalar_select %p740, %s739, 15
      %s742 = smul.addr %s741, 8
      %s743 = scalar_lea.vmem %s1, %s742
      %p744 = pneg %p90
      %p745 = pneg %p87
      %p746 = pneg %p111
      %p747 = pneg %p108
      %p748 = pneg %p132
      %p749 = pneg %p129
      %p750 = scmp.lt.s32.totalorder %s36, 1
      %s751 = scalar_select %p750, %s36, 1
      %s752 = smul.addr %s751, 8
      %s753 = smul.addr %s752, 4
      %s754 = scalar_lea.vmem %s4, %s753
      %p755 = pneg %p158
      %p756 = pneg %p155
      %p757 = scmp.lt.s32.totalorder %s36, 1
      %s758 = scalar_select %p757, %s36, 1
      %s759 = smul.addr %s758, 2
      %s760 = scalar_lea.vmem %s5, %s759
      %p761 = pneg %p184
      %p762 = pneg %p181
      %p763 = scmp.lt.s32.totalorder %s36, 1
      %s764 = scalar_select %p763, %s36, 1
      %s765 = smul.addr %s764, 8
      %s766 = smul.addr %s765, 4
      %s767 = scalar_lea.vmem %s6, %s766
      %p768 = pneg %p210
      %p769 = pneg %p207
      %p770 = scmp.lt.s32.totalorder %s36, 1
      %s771 = scalar_select %p770, %s36, 1
      %s772 = smul.addr %s771, 2
      %s773 = scalar_lea.vmem %s7, %s772
      %p774 = pneg %p236
      %p775 = pneg %p233
      %p776 = scmp.lt.s32.totalorder %s36, 1
      %s777 = scalar_select %p776, %s36, 1
      %s778 = smul.addr %s777, 8
      %s779 = smul.addr %s778, 4
      %s780 = scalar_lea.vmem %s8, %s779
      %p781 = pneg %p262
      %p782 = pneg %p259
      %p783 = scmp.lt.s32.totalorder %s36, 1
      %s784 = scalar_select %p783, %s36, 1
      %s785 = smul.addr %s784, 2
      %s786 = scalar_lea.vmem %s9, %s785
      %p787 = pneg %p288
      %p788 = pneg %p285
      %p789 = scmp.lt.s32.totalorder %s36, 1
      %s790 = scalar_select %p789, %s36, 1
      %s791 = smul.addr %s790, 4
      %s792 = smul.addr %s791, 4
      %s793 = scalar_lea.vmem %s10, %s792
      %p794 = pneg %p314
      %p795 = pneg %p311
      %p796 = scmp.lt.s32.totalorder %s36, 1
      %s797 = scalar_select %p796, %s36, 1
      %s798 = scalar_lea.vmem %s11, %s797
      %p799 = pneg %p340
      %p800 = pneg %p337
      %p801 = scmp.lt.s32.totalorder %s36, 1
      %s802 = scalar_select %p801, %s36, 1
      %s803 = scalar_lea.vmem %s12, %s802
      %p804 = pneg %p366
      %p805 = pneg %p363
      %p806 = scmp.lt.s32.totalorder %s36, 1
      %s807 = scalar_select %p806, %s36, 1
      %s808 = scalar_lea.vmem %s13, %s807
      %p809 = pneg %p392
      %p810 = pneg %p389
      %p811 = scmp.lt.s32.totalorder %s36, 1
      %s812 = scalar_select %p811, %s36, 1
      %s813 = smul.addr %s812, 4
      %s814 = smul.addr %s813, 4
      %s815 = scalar_lea.vmem %s14, %s814
      %p816 = pneg %p418
      %p817 = pneg %p415
      %p818 = scmp.lt.s32.totalorder %s36, 1
      %s819 = scalar_select %p818, %s36, 1
      %s820 = scalar_lea.vmem %s15, %s819
      %p821 = pneg %p444
      %p822 = pneg %p441
      %p823 = scmp.lt.s32.totalorder %s36, 1
      %s824 = scalar_select %p823, %s36, 1
      %s825 = smul.addr %s824, 16
      %s826 = smul.addr %s825, 4
      %s827 = scalar_lea.vmem %s16, %s826
      %p828 = pneg %p470
      %p829 = pneg %p467
      %p830 = scmp.lt.s32.totalorder %s36, 1
      %s831 = scalar_select %p830, %s36, 1
      %s832 = scalar_lea.vmem %s17, %s831
      %p833 = pneg %p496
      %p834 = pneg %p493
      %p835 = scmp.lt.s32.totalorder %s36, 1
      %s836 = scalar_select %p835, %s36, 1
      %s837 = scalar_lea.vmem %s18, %s836
      %p838 = pneg %p522
      %p839 = pneg %p519
      %p840 = scmp.lt.s32.totalorder %s36, 1
      %s841 = scalar_select %p840, %s36, 1
      %s842 = scalar_lea.vmem %s19, %s841
      %p843 = pneg %p548
      %p844 = pneg %p545
      %p845 = pneg %p574
      %p846 = pneg %p571
      %s847 = smul.u32 8, %s35
      %p848 = scmp.lt.s32.totalorder %s847, 15
      %s849 = scalar_select %p848, %s847, 15
      %s850 = smul.addr %s849, 8
      %s851 = scalar_lea.vmem %s20, %s850
      %p852 = scmp.lt.s32.totalorder %s35, 1
      %s853 = scalar_select %p852, %s35, 1
      %s854 = smul.addr %s853, 8
      %s855 = scalar_lea.vmem %s0, %s854
      %s856 = smul.u32 8, %s35
      %p857 = scmp.lt.s32.totalorder %s856, 15
      %s858 = scalar_select %p857, %s856, 15
      %s859 = smul.addr %s858, 8
      %s860 = scalar_lea.vmem %s1, %s859
      %s861 = smul.u32 8, %s35
      %p862 = scmp.lt.s32.totalorder %s36, 1
      %s863 = scalar_select %p862, %s36, 1
      %s864 = smul.addr %s863, 8
      %s865 = smul.addr %s864, 4
      %s866 = scalar_lea.vmem %s4, %s865
      %p867 = scmp.lt.s32.totalorder %s36, 1
      %s868 = scalar_select %p867, %s36, 1
      %s869 = smul.addr %s868, 2
      %s870 = scalar_lea.vmem %s5, %s869
      %p871 = scmp.lt.s32.totalorder %s36, 1
      %s872 = scalar_select %p871, %s36, 1
      %s873 = smul.addr %s872, 8
      %s874 = smul.addr %s873, 4
      %s875 = scalar_lea.vmem %s6, %s874
      %p876 = scmp.lt.s32.totalorder %s36, 1
      %s877 = scalar_select %p876, %s36, 1
      %s878 = smul.addr %s877, 2
      %s879 = scalar_lea.vmem %s7, %s878
      %p880 = scmp.lt.s32.totalorder %s36, 1
      %s881 = scalar_select %p880, %s36, 1
      %s882 = smul.addr %s881, 8
      %s883 = smul.addr %s882, 4
      %s884 = scalar_lea.vmem %s8, %s883
      %p885 = scmp.lt.s32.totalorder %s36, 1
      %s886 = scalar_select %p885, %s36, 1
      %s887 = smul.addr %s886, 2
      %s888 = scalar_lea.vmem %s9, %s887
      %p889 = scmp.lt.s32.totalorder %s36, 1
      %s890 = scalar_select %p889, %s36, 1
      %s891 = smul.addr %s890, 4
      %s892 = smul.addr %s891, 4
      %s893 = scalar_lea.vmem %s10, %s892
      %p894 = scmp.lt.s32.totalorder %s36, 1
      %s895 = scalar_select %p894, %s36, 1
      %s896 = scalar_lea.vmem %s11, %s895
      %p897 = scmp.lt.s32.totalorder %s36, 1
      %s898 = scalar_select %p897, %s36, 1
      %s899 = scalar_lea.vmem %s12, %s898
      %p900 = scmp.lt.s32.totalorder %s36, 1
      %s901 = scalar_select %p900, %s36, 1
      %s902 = scalar_lea.vmem %s13, %s901
      %p903 = scmp.lt.s32.totalorder %s36, 1
      %s904 = scalar_select %p903, %s36, 1
      %s905 = smul.addr %s904, 4
      %s906 = smul.addr %s905, 4
      %s907 = scalar_lea.vmem %s14, %s906
      %p908 = scmp.lt.s32.totalorder %s36, 1
      %s909 = scalar_select %p908, %s36, 1
      %s910 = scalar_lea.vmem %s15, %s909
      %p911 = scmp.lt.s32.totalorder %s36, 1
      %s912 = scalar_select %p911, %s36, 1
      %s913 = smul.addr %s912, 16
      %s914 = smul.addr %s913, 4
      %s915 = scalar_lea.vmem %s16, %s914
      %p916 = scmp.lt.s32.totalorder %s36, 1
      %s917 = scalar_select %p916, %s36, 1
      %s918 = scalar_lea.vmem %s17, %s917
      %p919 = scmp.lt.s32.totalorder %s36, 1
      %s920 = scalar_select %p919, %s36, 1
      %s921 = scalar_lea.vmem %s18, %s920
      %p922 = scmp.lt.s32.totalorder %s36, 1
      %s923 = scalar_select %p922, %s36, 1
      %s924 = scalar_lea.vmem %s19, %s923
      %s925 = smul.u32 8, %s35
      %p926 = scmp.lt.s32.totalorder %s925, 15
      %s927 = scalar_select %p926, %s925, 15
      %s928 = smul.addr %s927, 8
      %s929 = scalar_lea.vmem %s20, %s928
      %s930 = smul.u32 8, %s35
      %p932 = scmp.eq.s32.totalorder %s36, 0
      // Predicated region
      $region101: #{tpu_custom_call.1} parent=99 // pred_check
        %p933 = pneg %p932
      $region102: #{tpu_custom_call.1} parent=99 // pred_check_branch
        %935 = sbr.rel (%p933) target = $region104
      $region103: #{tpu_custom_call.1} parent=99 // pred_region
        %v936 = vld [vmem:[%s860] sm:$0xff]
        %v937 = vld [vmem:[%s860 + $0x8] sm:$0xff]
        %v938 = vld [vmem:[%s860 + $0x10] sm:$0xff]
        %v939 = vld [vmem:[%s860 + $0x18] sm:$0xff]
        %v940 = vld [vmem:[%s860 + $0x20] sm:$0xff]
        %v941 = vld [vmem:[%s860 + $0x28] sm:$0xff]
        %v942 = vld [vmem:[%s860 + $0x30] sm:$0xff]
        %v943 = vld [vmem:[%s860 + $0x38] sm:$0xff]
        %v944 = vld [vmem:[%s2] sm:$0x1]
        %v945 = vld [vmem:[%s3] sm:$0x1]
        %vm946 = vcmask 261120
        %v947 = vsel %vm946, %v936, 0.0
        %948 = vadd.xlane.f32.xlu0 %v947
        %v949 = vpop.xlane.xlu0 %948
        %v950 = vsel %vm946, %v937, 0.0
        %951 = vadd.xlane.f32.xlu0 %v950
        %v952 = vpop.xlane.xlu0 %951
        %v953 = vsel %vm946, %v938, 0.0
        %954 = vadd.xlane.f32.xlu0 %v953
        %v955 = vpop.xlane.xlu0 %954
        %v956 = vsel %vm946, %v939, 0.0
        %957 = vadd.xlane.f32.xlu0 %v956
        %v958 = vpop.xlane.xlu0 %957
        %v959 = vsel %vm946, %v940, 0.0
        %960 = vadd.xlane.f32.xlu0 %v959
        %v961 = vpop.xlane.xlu0 %960
        %v962 = vsel %vm946, %v941, 0.0
        %963 = vadd.xlane.f32.xlu0 %v962
        %v964 = vpop.xlane.xlu0 %963
        %v965 = vsel %vm946, %v942, 0.0
        %966 = vadd.xlane.f32.xlu0 %v965
        %v967 = vpop.xlane.xlu0 %966
        %v968 = vsel %vm946, %v943, 0.0
        %969 = vadd.xlane.f32.xlu0 %v968
        %v970 = vpop.xlane.xlu0 %969
        %v971 = vrcp.pop 32.0
        %v972 = vmul.f32 32.0, %v971
        %v973 = vsub.f32 1.0, %v972
        %v974 = vmul.f32 %v971, %v973
        %v975 = vadd.f32 %v971, %v974
        %vm976 = vweird.f32 %v971
        %v977 = vsel %vm976, %v971, %v975
        %v978 = vmul.f32 %v949, %v977
        %v979 = vmul.f32 %v952, %v977
        %v980 = vmul.f32 %v955, %v977
        %v981 = vmul.f32 %v958, %v977
        %v982 = vmul.f32 %v961, %v977
        %v983 = vmul.f32 %v964, %v977
        %v984 = vmul.f32 %v967, %v977
        %v985 = vmul.f32 %v970, %v977
        %v986 = vsub.f32 %v936, %v978
        %v987 = vsub.f32 %v937, %v979
        %v988 = vsub.f32 %v938, %v980
        %v989 = vsub.f32 %v939, %v981
        %v990 = vsub.f32 %v940, %v982
        %v991 = vsub.f32 %v941, %v983
        %v992 = vsub.f32 %v942, %v984
        %v993 = vsub.f32 %v943, %v985
        %v994 = vmul.f32 %v986, %v986
        %v995 = vmul.f32 %v987, %v987
        %v996 = vmul.f32 %v988, %v988
        %v997 = vmul.f32 %v989, %v989
        %v998 = vmul.f32 %v990, %v990
        %v999 = vmul.f32 %v991, %v991
        %v1000 = vmul.f32 %v992, %v992
        %v1001 = vmul.f32 %v993, %v993
        %v1002 = vsel %vm946, %v994, 0.0
        %1003 = vadd.xlane.f32.xlu0 %v1002
        %v1004 = vpop.xlane.xlu0 %1003
        %v1005 = vsel %vm946, %v995, 0.0
        %1006 = vadd.xlane.f32.xlu0 %v1005
        %v1007 = vpop.xlane.xlu0 %1006
        %v1008 = vsel %vm946, %v996, 0.0
        %1009 = vadd.xlane.f32.xlu0 %v1008
        %v1010 = vpop.xlane.xlu0 %1009
        %v1011 = vsel %vm946, %v997, 0.0
        %1012 = vadd.xlane.f32.xlu0 %v1011
        %v1013 = vpop.xlane.xlu0 %1012
        %v1014 = vsel %vm946, %v998, 0.0
        %1015 = vadd.xlane.f32.xlu0 %v1014
        %v1016 = vpop.xlane.xlu0 %1015
        %v1017 = vsel %vm946, %v999, 0.0
        %1018 = vadd.xlane.f32.xlu0 %v1017
        %v1019 = vpop.xlane.xlu0 %1018
        %v1020 = vsel %vm946, %v1000, 0.0
        %1021 = vadd.xlane.f32.xlu0 %v1020
        %v1022 = vpop.xlane.xlu0 %1021
        %v1023 = vsel %vm946, %v1001, 0.0
        %1024 = vadd.xlane.f32.xlu0 %v1023
        %v1025 = vpop.xlane.xlu0 %1024
        %v1026 = vmul.f32 %v1004, %v977
        %v1027 = vmul.f32 %v1007, %v977
        %v1028 = vmul.f32 %v1010, %v977
        %v1029 = vmul.f32 %v1013, %v977
        %v1030 = vmul.f32 %v1016, %v977
        %v1031 = vmul.f32 %v1019, %v977
        %v1032 = vmul.f32 %v1022, %v977
        %v1033 = vmul.f32 %v1025, %v977
        %v1034 = vadd.f32 %v1026, 1e-12
        %v1035 = vadd.f32 %v1027, 1e-12
        %v1036 = vadd.f32 %v1028, 1e-12
        %v1037 = vadd.f32 %v1029, 1e-12
        %v1038 = vadd.f32 %v1030, 1e-12
        %v1039 = vadd.f32 %v1031, 1e-12
        %v1040 = vadd.f32 %v1032, 1e-12
        %v1041 = vadd.f32 %v1033, 1e-12
        %v1042 = vrsqrt.pop %v1034
        %v1043 = vmul.f32 %v1042, %v1034
        %v1044 = vmul.f32 %v1043, %v1042
        %v1045 = vmul.f32 0.5, %v1044
        %v1046 = vsub.f32 1.5, %v1045
        %v1047 = vmul.f32 %v1042, %v1046
        %vm1048 = vweird.f32 %v1034
        %vm1049 = vweird.f32 %v1042
        %vm1050 = vmor %vm1048, %vm1049
        %v1051 = vsel %vm1050, %v1042, %v1047
        %v1052 = vrsqrt.pop %v1035
        %v1053 = vmul.f32 %v1052, %v1035
        %v1054 = vmul.f32 %v1053, %v1052
        %v1055 = vmul.f32 0.5, %v1054
        %v1056 = vsub.f32 1.5, %v1055
        %v1057 = vmul.f32 %v1052, %v1056
        %vm1058 = vweird.f32 %v1035
        %vm1059 = vweird.f32 %v1052
        %vm1060 = vmor %vm1058, %vm1059
        %v1061 = vsel %vm1060, %v1052, %v1057
        %v1062 = vrsqrt.pop %v1036
        %v1063 = vmul.f32 %v1062, %v1036
        %v1064 = vmul.f32 %v1063, %v1062
        %v1065 = vmul.f32 0.5, %v1064
        %v1066 = vsub.f32 1.5, %v1065
        %v1067 = vmul.f32 %v1062, %v1066
        %vm1068 = vweird.f32 %v1036
        %vm1069 = vweird.f32 %v1062
        %vm1070 = vmor %vm1068, %vm1069
        %v1071 = vsel %vm1070, %v1062, %v1067
        %v1072 = vrsqrt.pop %v1037
        %v1073 = vmul.f32 %v1072, %v1037
        %v1074 = vmul.f32 %v1073, %v1072
        %v1075 = vmul.f32 0.5, %v1074
        %v1076 = vsub.f32 1.5, %v1075
        %v1077 = vmul.f32 %v1072, %v1076
        %vm1078 = vweird.f32 %v1037
        %vm1079 = vweird.f32 %v1072
        %vm1080 = vmor %vm1078, %vm1079
        %v1081 = vsel %vm1080, %v1072, %v1077
        %v1082 = vrsqrt.pop %v1038
        %v1083 = vmul.f32 %v1082, %v1038
        %v1084 = vmul.f32 %v1083, %v1082
        %v1085 = vmul.f32 0.5, %v1084
        %v1086 = vsub.f32 1.5, %v1085
        %v1087 = vmul.f32 %v1082, %v1086
        %vm1088 = vweird.f32 %v1038
        %vm1089 = vweird.f32 %v1082
        %vm1090 = vmor %vm1088, %vm1089
        %v1091 = vsel %vm1090, %v1082, %v1087
        %v1092 = vrsqrt.pop %v1039
        %v1093 = vmul.f32 %v1092, %v1039
        %v1094 = vmul.f32 %v1093, %v1092
        %v1095 = vmul.f32 0.5, %v1094
        %v1096 = vsub.f32 1.5, %v1095
        %v1097 = vmul.f32 %v1092, %v1096
        %vm1098 = vweird.f32 %v1039
        %vm1099 = vweird.f32 %v1092
        %vm1100 = vmor %vm1098, %vm1099
        %v1101 = vsel %vm1100, %v1092, %v1097
        %v1102 = vrsqrt.pop %v1040
        %v1103 = vmul.f32 %v1102, %v1040
        %v1104 = vmul.f32 %v1103, %v1102
        %v1105 = vmul.f32 0.5, %v1104
        %v1106 = vsub.f32 1.5, %v1105
        %v1107 = vmul.f32 %v1102, %v1106
        %vm1108 = vweird.f32 %v1040
        %vm1109 = vweird.f32 %v1102
        %vm1110 = vmor %vm1108, %vm1109
        %v1111 = vsel %vm1110, %v1102, %v1107
        %v1112 = vrsqrt.pop %v1041
        %v1113 = vmul.f32 %v1112, %v1041
        %v1114 = vmul.f32 %v1113, %v1112
        %v1115 = vmul.f32 0.5, %v1114
        %v1116 = vsub.f32 1.5, %v1115
        %v1117 = vmul.f32 %v1112, %v1116
        %vm1118 = vweird.f32 %v1041
        %vm1119 = vweird.f32 %v1112
        %vm1120 = vmor %vm1118, %vm1119
        %v1121 = vsel %vm1120, %v1112, %v1117
        %v1122 = vmul.f32 %v986, %v1051
        %v1123 = vmul.f32 %v987, %v1061
        %v1124 = vmul.f32 %v988, %v1071
        %v1125 = vmul.f32 %v989, %v1081
        %v1126 = vmul.f32 %v990, %v1091
        %v1127 = vmul.f32 %v991, %v1101
        %v1128 = vmul.f32 %v992, %v1111
        %v1129 = vmul.f32 %v993, %v1121
        %v1131 = vperm.slane %v944, 0
        %v1133 = vmul.f32 %v1131, %v1122
        %v1134 = vmul.f32 %v1131, %v1123
        %v1135 = vmul.f32 %v1131, %v1124
        %v1136 = vmul.f32 %v1131, %v1125
        %v1137 = vmul.f32 %v1131, %v1126
        %v1138 = vmul.f32 %v1131, %v1127
        %v1139 = vmul.f32 %v1131, %v1128
        %v1140 = vmul.f32 %v1131, %v1129
        %v1142 = vperm.slane %v945, 0
        %v1144 = vadd.f32 %v1133, %v1142
        %v1145 = vadd.f32 %v1134, %v1142
        %v1146 = vadd.f32 %v1135, %v1142
        %v1147 = vadd.f32 %v1136, %v1142
        %v1148 = vadd.f32 %v1137, %v1142
        %v1149 = vadd.f32 %v1138, %v1142
        %v1150 = vadd.f32 %v1139, %v1142
        %v1151 = vadd.f32 %v1140, %v1142
        %1152 = vst.msk [vmem:[%s929] sm:$0xff] %vm946, %v1144
        %1153 = vst.msk [vmem:[%s929 + $0x8] sm:$0xff] %vm946, %v1145
        %1154 = vst.msk [vmem:[%s929 + $0x10] sm:$0xff] %vm946, %v1146
        %1155 = vst.msk [vmem:[%s929 + $0x18] sm:$0xff] %vm946, %v1147
        %1156 = vst.msk [vmem:[%s929 + $0x20] sm:$0xff] %vm946, %v1148
        %1157 = vst.msk [vmem:[%s929 + $0x28] sm:$0xff] %vm946, %v1149
        %1158 = vst.msk [vmem:[%s929 + $0x30] sm:$0xff] %vm946, %v1150
        %1159 = vst.msk [vmem:[%s929 + $0x38] sm:$0xff] %vm946, %v1151
      $region104: #{tpu_custom_call.1} parent=99 // pred_fallthru
        _
      %v1160 = vld [vmem:[%s855] sm:$0xff]
      %vm1161 = vcmp.gt.s32.totalorder %v1160, 0
      %v1162 = vsel %vm1161, 1, 0
      %v1163 = vrot.slane %v1162, 1
      %v1164 = vrot.slane %v1162, 2
      %v1165 = vrot.slane %v1162, 3
      %v1166 = vrot.slane %v1162, 4
      %v1167 = vrot.slane %v1162, 5
      %v1168 = vrot.slane %v1162, 6
      %v1169 = vrot.slane %v1162, 7
      %vm1170 = vcmp.ne.s32.totalorder %v1163, 0
      %vm1171 = vcmp.ne.s32.totalorder %v1164, 0
      %vm1172 = vcmp.ne.s32.totalorder %v1165, 0
      %vm1173 = vcmp.ne.s32.totalorder %v1166, 0
      %vm1174 = vcmp.ne.s32.totalorder %v1167, 0
      %vm1175 = vcmp.ne.s32.totalorder %v1168, 0
      %vm1176 = vcmp.ne.s32.totalorder %v1169, 0
      %v1177 = vlaneseq
      %v1178 = vshrl.u32 %v1177, 7
      %v1179 = vlaneseq
      %v1180 = vand.u32 %v1179, 127
      %vm1181 = vcmp.le.s32.totalorder %v1180, %v1178
      %v1182 = vsel %vm1181, 1, 0
      %vm1183 = vcmp.eq.s32.totalorder %v1182, 1
      %v1184 = vsel %vm1170, 1, 0
      %v1185 = vsel %vm1171, 1, 0
      %v1186 = vsel %vm1172, 1, 0
      %v1187 = vsel %vm1173, 1, 0
      %v1188 = vsel %vm1174, 1, 0
      %v1189 = vsel %vm1175, 1, 0
      %v1190 = vsel %vm1176, 1, 0
      %v1191 = vperm.slane %v1162, 0
      %v1192 = vperm.slane %v1184, 0
      %v1193 = vperm.slane %v1185, 0
      %v1194 = vperm.slane %v1186, 0
      %v1195 = vperm.slane %v1187, 0
      %v1196 = vperm.slane %v1188, 0
      %v1197 = vperm.slane %v1189, 0
      %v1198 = vperm.slane %v1190, 0
      %vm1199 = vcmp.eq.s32.totalorder %v1191, 1
      %vm1200 = vcmp.eq.s32.totalorder %v1192, 1
      %vm1201 = vcmp.eq.s32.totalorder %v1193, 1
      %vm1202 = vcmp.eq.s32.totalorder %v1194, 1
      %vm1203 = vcmp.eq.s32.totalorder %v1195, 1
      %vm1204 = vcmp.eq.s32.totalorder %v1196, 1
      %vm1205 = vcmp.eq.s32.totalorder %v1197, 1
      %vm1206 = vcmp.eq.s32.totalorder %v1198, 1
      %vm1207 = vmand %vm1183, %vm1199
      %vm1208 = vmand %vm1183, %vm1200
      %vm1209 = vmand %vm1183, %vm1201
      %vm1210 = vmand %vm1183, %vm1202
      %vm1211 = vmand %vm1183, %vm1203
      %vm1212 = vmand %vm1183, %vm1204
      %vm1213 = vmand %vm1183, %vm1205
      %vm1214 = vmand %vm1183, %vm1206
      %v1215 = vsel %vm1207, 0.0, -10000.0
      %v1216 = vsel %vm1208, 0.0, -10000.0
      %v1217 = vsel %vm1209, 0.0, -10000.0
      %v1218 = vsel %vm1210, 0.0, -10000.0
      %v1219 = vsel %vm1211, 0.0, -10000.0
      %v1220 = vsel %vm1212, 0.0, -10000.0
      %v1221 = vsel %vm1213, 0.0, -10000.0
      %v1222 = vsel %vm1214, 0.0, -10000.0
      %v1223 = vld [vmem:[%s929] sm:$0xff]
      %v1224 = vld [vmem:[%s929 + $0x8] sm:$0xff]
      %v1225 = vld [vmem:[%s929 + $0x10] sm:$0xff]
      %v1226 = vld [vmem:[%s929 + $0x18] sm:$0xff]
      %v1227 = vld [vmem:[%s929 + $0x20] sm:$0xff]
      %v1228 = vld [vmem:[%s929 + $0x28] sm:$0xff]
      %v1229 = vld [vmem:[%s929 + $0x30] sm:$0xff]
      %v1230 = vld [vmem:[%s929 + $0x38] sm:$0xff]
      %v1231 = vpack.c.bf16 %v1224, %v1223
      %v1232 = vpack.c.bf16 %v1226, %v1225
      %v1233 = vpack.c.bf16 %v1228, %v1227
      %v1234 = vpack.c.bf16 %v1230, %v1229
      %v1235 = vld [vmem:[%s896] sm:$0x1]
      %v1236 = vld [vmem:[%s866] sm:$0xf]
      %v1237 = vld [vmem:[%s866 + $0x4] sm:$0xf]
      %v1238 = vld [vmem:[%s866 + $0x8] sm:$0xf]
      %v1239 = vld [vmem:[%s866 + $0xc] sm:$0xf]
      %v1240 = vld [vmem:[%s870] sm:$0x1]
      %v1242 = vperm.slane %v1240, 0
      %v1248 = vunpack.c.l.b16 %v1236
      %v1249 = vunpack.c.l.b16 %v1237
      %v1250 = vunpack.c.l.b16 %v1238
      %v1251 = vunpack.c.l.b16 %v1239
      %v1252 = vpack.c.b16 %v1249, %v1248
      %v1253 = vpack.c.b16 %v1251, %v1250
      %vm1256 = vcmask 261120
      %v1258 = vsel %vm1256, %v1231, 0
      %v1261 = vsel %vm1256, %v1232, 0
      %v1264 = vsel %vm1256, %v1233, 0
      %v1267 = vsel %vm1256, %v1234, 0
      %1269 = vmatpush.bf16.msra.mxu0 0
      %1270 = vmatpush.bf16.msra.mxu0 0
      %1271 = vmatpush.bf16.msra.mxu0 0
      %1272 = vmatpush.bf16.msra.mxu0 0
      %1273 = vmatpush.bf16.msra.mxu0 0
      %1274 = vmatpush.bf16.msra.mxu0 0
      %1275 = vmatpush.bf16.msra.mxu0 %v1253
      %1276 = vmatpush.bf16.msra.mxu0 %v1252
      %1277 = vmatmul.bf16.gmra.mxu0 %v1258
      %v1278 = vpop.f32.mrf.mxu0
      %v1279 = vadd.f32 %v1242, %v1278
      %v1280 = vpop.f32.mrf.mxu0
      %v1281 = vadd.f32 %v1242, %v1280
      %1282 = vmatmul.bf16.gmra.mxu0 %v1261
      %v1283 = vpop.f32.mrf.mxu0
      %v1284 = vadd.f32 %v1242, %v1283
      %v1285 = vpop.f32.mrf.mxu0
      %v1286 = vadd.f32 %v1242, %v1285
      %1287 = vmatmul.bf16.gmra.mxu0 %v1264
      %v1288 = vpop.f32.mrf.mxu0
      %v1289 = vadd.f32 %v1242, %v1288
      %v1290 = vpop.f32.mrf.mxu0
      %v1291 = vadd.f32 %v1242, %v1290
      %1292 = vmatmul.bf16.gmra.mxu0 %v1267
      %v1293 = vpop.f32.mrf.mxu0
      %v1294 = vadd.f32 %v1242, %v1293
      %v1295 = vpop.f32.mrf.mxu0
      %v1296 = vadd.f32 %v1242, %v1295
      %1297 = vdwg.mxu0
      %v1298 = vld [vmem:[%s875] sm:$0xf]
      %v1299 = vld [vmem:[%s875 + $0x4] sm:$0xf]
      %v1300 = vld [vmem:[%s875 + $0x8] sm:$0xf]
      %v1301 = vld [vmem:[%s875 + $0xc] sm:$0xf]
      %v1302 = vld [vmem:[%s879] sm:$0x1]
      %v1304 = vperm.slane %v1302, 0
      %v1310 = vunpack.c.l.b16 %v1298
      %v1311 = vunpack.c.l.b16 %v1299
      %v1312 = vunpack.c.l.b16 %v1300
      %v1313 = vunpack.c.l.b16 %v1301
      %v1314 = vpack.c.b16 %v1311, %v1310
      %v1315 = vpack.c.b16 %v1313, %v1312
      %1318 = vmatpush.bf16.msra.mxu0 0
      %1319 = vmatpush.bf16.msra.mxu0 0
      %1320 = vmatpush.bf16.msra.mxu0 0
      %1321 = vmatpush.bf16.msra.mxu0 0
      %1322 = vmatpush.bf16.msra.mxu0 0
      %1323 = vmatpush.bf16.msra.mxu0 0
      %1324 = vmatpush.bf16.msra.mxu0 %v1315
      %1325 = vmatpush.bf16.msra.mxu0 %v1314
      %1326 = vmatmul.bf16.gmra.mxu0 %v1258
      %v1327 = vpop.f32.mrf.mxu0
      %v1328 = vadd.f32 %v1304, %v1327
      %v1329 = vpop.f32.mrf.mxu0
      %v1330 = vadd.f32 %v1304, %v1329
      %1331 = vmatmul.bf16.gmra.mxu0 %v1261
      %v1332 = vpop.f32.mrf.mxu0
      %v1333 = vadd.f32 %v1304, %v1332
      %v1334 = vpop.f32.mrf.mxu0
      %v1335 = vadd.f32 %v1304, %v1334
      %1336 = vmatmul.bf16.gmra.mxu0 %v1264
      %v1337 = vpop.f32.mrf.mxu0
      %v1338 = vadd.f32 %v1304, %v1337
      %v1339 = vpop.f32.mrf.mxu0
      %v1340 = vadd.f32 %v1304, %v1339
      %1341 = vmatmul.bf16.gmra.mxu0 %v1267
      %v1342 = vpop.f32.mrf.mxu0
      %v1343 = vadd.f32 %v1304, %v1342
      %v1344 = vpop.f32.mrf.mxu0
      %v1345 = vadd.f32 %v1304, %v1344
      %1346 = vdwg.mxu0
      %v1347 = vld [vmem:[%s884] sm:$0xf]
      %v1348 = vld [vmem:[%s884 + $0x4] sm:$0xf]
      %v1349 = vld [vmem:[%s884 + $0x8] sm:$0xf]
      %v1350 = vld [vmem:[%s884 + $0xc] sm:$0xf]
      %v1351 = vld [vmem:[%s888] sm:$0x1]
      %v1353 = vperm.slane %v1351, 0
      %v1359 = vunpack.c.l.b16 %v1347
      %v1360 = vunpack.c.l.b16 %v1348
      %v1361 = vunpack.c.l.b16 %v1349
      %v1362 = vunpack.c.l.b16 %v1350
      %v1363 = vpack.c.b16 %v1360, %v1359
      %v1364 = vpack.c.b16 %v1362, %v1361
      %1367 = vmatpush.bf16.msra.mxu0 0
      %1368 = vmatpush.bf16.msra.mxu0 0
      %1369 = vmatpush.bf16.msra.mxu0 0
      %1370 = vmatpush.bf16.msra.mxu0 0
      %1371 = vmatpush.bf16.msra.mxu0 0
      %1372 = vmatpush.bf16.msra.mxu0 0
      %1373 = vmatpush.bf16.msra.mxu0 %v1364
      %1374 = vmatpush.bf16.msra.mxu0 %v1363
      %1375 = vmatmul.bf16.gmra.mxu0 %v1258
      %v1376 = vpop.f32.mrf.mxu0
      %v1377 = vadd.f32 %v1353, %v1376
      %v1378 = vpop.f32.mrf.mxu0
      %v1379 = vadd.f32 %v1353, %v1378
      %1380 = vmatmul.bf16.gmra.mxu0 %v1261
      %v1381 = vpop.f32.mrf.mxu0
      %v1382 = vadd.f32 %v1353, %v1381
      %v1383 = vpop.f32.mrf.mxu0
      %v1384 = vadd.f32 %v1353, %v1383
      %1385 = vmatmul.bf16.gmra.mxu0 %v1264
      %v1386 = vpop.f32.mrf.mxu0
      %v1387 = vadd.f32 %v1353, %v1386
      %v1388 = vpop.f32.mrf.mxu0
      %v1389 = vadd.f32 %v1353, %v1388
      %1390 = vmatmul.bf16.gmra.mxu0 %v1267
      %v1391 = vpop.f32.mrf.mxu0
      %v1392 = vadd.f32 %v1353, %v1391
      %v1393 = vpop.f32.mrf.mxu0
      %v1394 = vadd.f32 %v1353, %v1393
      %1395 = vdwg.mxu0
      %v1396 = vpack.c.bf16 %v1279, %v1279
      %v1397 = vpack.c.bf16 %v1281, %v1281
      %v1398 = vpack.c.bf16 %v1284, %v1284
      %v1399 = vpack.c.bf16 %v1286, %v1286
      %v1400 = vpack.c.bf16 %v1289, %v1289
      %v1401 = vpack.c.bf16 %v1291, %v1291
      %v1402 = vpack.c.bf16 %v1294, %v1294
      %v1403 = vpack.c.bf16 %v1296, %v1296
      %v1404 = vpack.c.bf16 %v1328, %v1328
      %v1405 = vpack.c.bf16 %v1330, %v1330
      %v1406 = vpack.c.bf16 %v1333, %v1333
      %v1407 = vpack.c.bf16 %v1335, %v1335
      %v1408 = vpack.c.bf16 %v1338, %v1338
      %v1409 = vpack.c.bf16 %v1340, %v1340
      %v1410 = vpack.c.bf16 %v1343, %v1343
      %v1411 = vpack.c.bf16 %v1345, %v1345
      %vm1412 = vcmask 130048
      %v1414 = vsel %vm1412, %v1396, 0
      %v1417 = vsel %vm1412, %v1404, 0
      %1419 = vmatpush.bf16.xpose.msra.mxu0 0
      %1420 = vmatpush.bf16.xpose.msra.mxu0 0
      %1421 = vmatpush.bf16.xpose.msra.mxu0 0
      %1422 = vmatpush.bf16.xpose.msra.mxu0 0
      %1423 = vmatpush.bf16.xpose.msra.mxu0 0
      %1424 = vmatpush.bf16.xpose.msra.mxu0 0
      %1425 = vmatpush.bf16.xpose.msra.mxu0 0
      %1426 = vmatpush.bf16.xpose.msra.mxu0 %v1417
      %1427 = vmatmul.bf16.gmra.mxu0 %v1414
      %v1428 = vpop.f32.mrf.mxu0
      %v1429 = vadd.f32 %v1215, %v1428
      %v1430 = vpop.f32.mrf.mxu0
      %1431 = vdwg.mxu0
      %v1433 = vsel %vm1412, %v1397, 0
      %v1436 = vsel %vm1412, %v1405, 0
      %1438 = vmatpush.bf16.xpose.msra.mxu0 0
      %1439 = vmatpush.bf16.xpose.msra.mxu0 0
      %1440 = vmatpush.bf16.xpose.msra.mxu0 0
      %1441 = vmatpush.bf16.xpose.msra.mxu0 0
      %1442 = vmatpush.bf16.xpose.msra.mxu0 0
      %1443 = vmatpush.bf16.xpose.msra.mxu0 0
      %1444 = vmatpush.bf16.xpose.msra.mxu0 0
      %1445 = vmatpush.bf16.xpose.msra.mxu0 %v1436
      %1446 = vmatmul.bf16.gmra.mxu0 %v1433
      %v1447 = vpop.f32.mrf.mxu0
      %v1448 = vadd.f32 %v1216, %v1447
      %v1449 = vpop.f32.mrf.mxu0
      %1450 = vdwg.mxu0
      %v1452 = vsel %vm1412, %v1398, 0
      %v1455 = vsel %vm1412, %v1406, 0
      %1457 = vmatpush.bf16.xpose.msra.mxu0 0
      %1458 = vmatpush.bf16.xpose.msra.mxu0 0
      %1459 = vmatpush.bf16.xpose.msra.mxu0 0
      %1460 = vmatpush.bf16.xpose.msra.mxu0 0
      %1461 = vmatpush.bf16.xpose.msra.mxu0 0
      %1462 = vmatpush.bf16.xpose.msra.mxu0 0
      %1463 = vmatpush.bf16.xpose.msra.mxu0 0
      %1464 = vmatpush.bf16.xpose.msra.mxu0 %v1455
      %1465 = vmatmul.bf16.gmra.mxu0 %v1452
      %v1466 = vpop.f32.mrf.mxu0
      %v1467 = vadd.f32 %v1217, %v1466
      %v1468 = vpop.f32.mrf.mxu0
      %1469 = vdwg.mxu0
      %v1471 = vsel %vm1412, %v1399, 0
      %v1474 = vsel %vm1412, %v1407, 0
      %1476 = vmatpush.bf16.xpose.msra.mxu0 0
      %1477 = vmatpush.bf16.xpose.msra.mxu0 0
      %1478 = vmatpush.bf16.xpose.msra.mxu0 0
      %1479 = vmatpush.bf16.xpose.msra.mxu0 0
      %1480 = vmatpush.bf16.xpose.msra.mxu0 0
      %1481 = vmatpush.bf16.xpose.msra.mxu0 0
      %1482 = vmatpush.bf16.xpose.msra.mxu0 0
      %1483 = vmatpush.bf16.xpose.msra.mxu0 %v1474
      %1484 = vmatmul.bf16.gmra.mxu0 %v1471
      %v1485 = vpop.f32.mrf.mxu0
      %v1486 = vadd.f32 %v1218, %v1485
      %v1487 = vpop.f32.mrf.mxu0
      %1488 = vdwg.mxu0
      %v1490 = vsel %vm1412, %v1400, 0
      %v1493 = vsel %vm1412, %v1408, 0
      %1495 = vmatpush.bf16.xpose.msra.mxu0 0
      %1496 = vmatpush.bf16.xpose.msra.mxu0 0
      %1497 = vmatpush.bf16.xpose.msra.mxu0 0
      %1498 = vmatpush.bf16.xpose.msra.mxu0 0
      %1499 = vmatpush.bf16.xpose.msra.mxu0 0
      %1500 = vmatpush.bf16.xpose.msra.mxu0 0
      %1501 = vmatpush.bf16.xpose.msra.mxu0 0
      %1502 = vmatpush.bf16.xpose.msra.mxu0 %v1493
      %1503 = vmatmul.bf16.gmra.mxu0 %v1490
      %v1504 = vpop.f32.mrf.mxu0
      %v1505 = vadd.f32 %v1219, %v1504
      %v1506 = vpop.f32.mrf.mxu0
      %1507 = vdwg.mxu0
      %v1509 = vsel %vm1412, %v1401, 0
      %v1512 = vsel %vm1412, %v1409, 0
      %1514 = vmatpush.bf16.xpose.msra.mxu0 0
      %1515 = vmatpush.bf16.xpose.msra.mxu0 0
      %1516 = vmatpush.bf16.xpose.msra.mxu0 0
      %1517 = vmatpush.bf16.xpose.msra.mxu0 0
      %1518 = vmatpush.bf16.xpose.msra.mxu0 0
      %1519 = vmatpush.bf16.xpose.msra.mxu0 0
      %1520 = vmatpush.bf16.xpose.msra.mxu0 0
      %1521 = vmatpush.bf16.xpose.msra.mxu0 %v1512
      %1522 = vmatmul.bf16.gmra.mxu0 %v1509
      %v1523 = vpop.f32.mrf.mxu0
      %v1524 = vadd.f32 %v1220, %v1523
      %v1525 = vpop.f32.mrf.mxu0
      %1526 = vdwg.mxu0
      %v1528 = vsel %vm1412, %v1402, 0
      %v1531 = vsel %vm1412, %v1410, 0
      %1533 = vmatpush.bf16.xpose.msra.mxu0 0
      %1534 = vmatpush.bf16.xpose.msra.mxu0 0
      %1535 = vmatpush.bf16.xpose.msra.mxu0 0
      %1536 = vmatpush.bf16.xpose.msra.mxu0 0
      %1537 = vmatpush.bf16.xpose.msra.mxu0 0
      %1538 = vmatpush.bf16.xpose.msra.mxu0 0
      %1539 = vmatpush.bf16.xpose.msra.mxu0 0
      %1540 = vmatpush.bf16.xpose.msra.mxu0 %v1531
      %1541 = vmatmul.bf16.gmra.mxu0 %v1528
      %v1542 = vpop.f32.mrf.mxu0
      %v1543 = vadd.f32 %v1221, %v1542
      %v1544 = vpop.f32.mrf.mxu0
      %1545 = vdwg.mxu0
      %v1547 = vsel %vm1412, %v1403, 0
      %v1550 = vsel %vm1412, %v1411, 0
      %1552 = vmatpush.bf16.xpose.msra.mxu0 0
      %1553 = vmatpush.bf16.xpose.msra.mxu0 0
      %1554 = vmatpush.bf16.xpose.msra.mxu0 0
      %1555 = vmatpush.bf16.xpose.msra.mxu0 0
      %1556 = vmatpush.bf16.xpose.msra.mxu0 0
      %1557 = vmatpush.bf16.xpose.msra.mxu0 0
      %1558 = vmatpush.bf16.xpose.msra.mxu0 0
      %1559 = vmatpush.bf16.xpose.msra.mxu0 %v1550
      %1560 = vmatmul.bf16.gmra.mxu0 %v1547
      %v1561 = vpop.f32.mrf.mxu0
      %v1562 = vadd.f32 %v1222, %v1561
      %v1563 = vpop.f32.mrf.mxu0
      %1564 = vdwg.mxu0
      %vm1565 = vcmask 64512
      %v1566 = vsel %vm1565, %v1429, -inf
      %1567 = vmax.xlane.f32.xlu0 %v1566
      %v1568 = vpop.xlane.xlu0 %1567
      %v1569 = vsel %vm1565, %v1448, -inf
      %1570 = vmax.xlane.f32.xlu0 %v1569
      %v1571 = vpop.xlane.xlu0 %1570
      %v1572 = vsel %vm1565, %v1467, -inf
      %1573 = vmax.xlane.f32.xlu0 %v1572
      %v1574 = vpop.xlane.xlu0 %1573
      %v1575 = vsel %vm1565, %v1486, -inf
      %1576 = vmax.xlane.f32.xlu0 %v1575
      %v1577 = vpop.xlane.xlu0 %1576
      %v1578 = vsel %vm1565, %v1505, -inf
      %1579 = vmax.xlane.f32.xlu0 %v1578
      %v1580 = vpop.xlane.xlu0 %1579
      %v1581 = vsel %vm1565, %v1524, -inf
      %1582 = vmax.xlane.f32.xlu0 %v1581
      %v1583 = vpop.xlane.xlu0 %1582
      %v1584 = vsel %vm1565, %v1543, -inf
      %1585 = vmax.xlane.f32.xlu0 %v1584
      %v1586 = vpop.xlane.xlu0 %1585
      %v1587 = vsel %vm1565, %v1562, -inf
      %1588 = vmax.xlane.f32.xlu0 %v1587
      %v1589 = vpop.xlane.xlu0 %1588
      %v1590 = vsub.f32 %v1429, %v1568
      %v1591 = vsub.f32 %v1448, %v1571
      %v1592 = vsub.f32 %v1467, %v1574
      %v1593 = vsub.f32 %v1486, %v1577
      %v1594 = vsub.f32 %v1505, %v1580
      %v1595 = vsub.f32 %v1524, %v1583
      %v1596 = vsub.f32 %v1543, %v1586
      %v1597 = vsub.f32 %v1562, %v1589
      %v1598 = vmul.f32 %v1590, 1.442695
      %v1599 = vpow.pop %v1598
      %v1600 = vmul.f32 %v1591, 1.442695
      %v1601 = vpow.pop %v1600
      %v1602 = vmul.f32 %v1592, 1.442695
      %v1603 = vpow.pop %v1602
      %v1604 = vmul.f32 %v1593, 1.442695
      %v1605 = vpow.pop %v1604
      %v1606 = vmul.f32 %v1594, 1.442695
      %v1607 = vpow.pop %v1606
      %v1608 = vmul.f32 %v1595, 1.442695
      %v1609 = vpow.pop %v1608
      %v1610 = vmul.f32 %v1596, 1.442695
      %v1611 = vpow.pop %v1610
      %v1612 = vmul.f32 %v1597, 1.442695
      %v1613 = vpow.pop %v1612
      %v1614 = vsel %vm1565, %v1599, 0.0
      %1615 = vadd.xlane.f32.xlu0 %v1614
      %v1616 = vpop.xlane.xlu0 %1615
      %v1617 = vsel %vm1565, %v1601, 0.0
      %1618 = vadd.xlane.f32.xlu0 %v1617
      %v1619 = vpop.xlane.xlu0 %1618
      %v1620 = vsel %vm1565, %v1603, 0.0
      %1621 = vadd.xlane.f32.xlu0 %v1620
      %v1622 = vpop.xlane.xlu0 %1621
      %v1623 = vsel %vm1565, %v1605, 0.0
      %1624 = vadd.xlane.f32.xlu0 %v1623
      %v1625 = vpop.xlane.xlu0 %1624
      %v1626 = vsel %vm1565, %v1607, 0.0
      %1627 = vadd.xlane.f32.xlu0 %v1626
      %v1628 = vpop.xlane.xlu0 %1627
      %v1629 = vsel %vm1565, %v1609, 0.0
      %1630 = vadd.xlane.f32.xlu0 %v1629
      %v1631 = vpop.xlane.xlu0 %1630
      %v1632 = vsel %vm1565, %v1611, 0.0
      %1633 = vadd.xlane.f32.xlu0 %v1632
      %v1634 = vpop.xlane.xlu0 %1633
      %v1635 = vsel %vm1565, %v1613, 0.0
      %1636 = vadd.xlane.f32.xlu0 %v1635
      %v1637 = vpop.xlane.xlu0 %1636
      %v1638 = vrcp.pop %v1616
      %v1639 = vrcp.pop %v1619
      %v1640 = vrcp.pop %v1622
      %v1641 = vrcp.pop %v1625
      %v1642 = vrcp.pop %v1628
      %v1643 = vrcp.pop %v1631
      %v1644 = vrcp.pop %v1634
      %v1645 = vrcp.pop %v1637
      %v1646 = vmul.f32 %v1599, %v1638
      %v1647 = vmul.f32 %v1601, %v1639
      %v1648 = vmul.f32 %v1603, %v1640
      %v1649 = vmul.f32 %v1605, %v1641
      %v1650 = vmul.f32 %v1607, %v1642
      %v1651 = vmul.f32 %v1609, %v1643
      %v1652 = vmul.f32 %v1611, %v1644
      %v1653 = vmul.f32 %v1613, %v1645
      %v1654 = vpack.c.bf16 %v1646, %v1646
      %v1655 = vpack.c.bf16 %v1647, %v1647
      %v1656 = vpack.c.bf16 %v1648, %v1648
      %v1657 = vpack.c.bf16 %v1649, %v1649
      %v1658 = vpack.c.bf16 %v1650, %v1650
      %v1659 = vpack.c.bf16 %v1651, %v1651
      %v1660 = vpack.c.bf16 %v1652, %v1652
      %v1661 = vpack.c.bf16 %v1653, %v1653
      %v1662 = vpack.c.bf16 %v1377, %v1377
      %v1663 = vpack.c.bf16 %v1379, %v1379
      %v1664 = vpack.c.bf16 %v1382, %v1382
      %v1665 = vpack.c.bf16 %v1384, %v1384
      %v1666 = vpack.c.bf16 %v1387, %v1387
      %v1667 = vpack.c.bf16 %v1389, %v1389
      %v1668 = vpack.c.bf16 %v1392, %v1392
      %v1669 = vpack.c.bf16 %v1394, %v1394
      %v1671 = vsel %vm1565, %v1654, 0
      %vm1673 = vcmask 1043456
      %v1675 = vsel %vm1673, %v1662, 0
      %1677 = vmatpush.bf16.msra.mxu0 0
      %1678 = vmatpush.bf16.msra.mxu0 0
      %1679 = vmatpush.bf16.msra.mxu0 0
      %1680 = vmatpush.bf16.msra.mxu0 0
      %1681 = vmatpush.bf16.msra.mxu0 0
      %1682 = vmatpush.bf16.msra.mxu0 0
      %1683 = vmatpush.bf16.msra.mxu0 0
      %1684 = vmatpush.bf16.msra.mxu0 %v1675
      %1685 = vmatmul.bf16.gmra.mxu0 %v1671
      %v1686 = vpop.f32.mrf.mxu0
      %v1687 = vadd.f32 0.0, %v1686
      %v1688 = vpop.f32.mrf.mxu0
      %1689 = vdwg.mxu0
      %v1691 = vsel %vm1565, %v1655, 0
      %v1694 = vsel %vm1673, %v1663, 0
      %1696 = vmatpush.bf16.msra.mxu0 0
      %1697 = vmatpush.bf16.msra.mxu0 0
      %1698 = vmatpush.bf16.msra.mxu0 0
      %1699 = vmatpush.bf16.msra.mxu0 0
      %1700 = vmatpush.bf16.msra.mxu0 0
      %1701 = vmatpush.bf16.msra.mxu0 0
      %1702 = vmatpush.bf16.msra.mxu0 0
      %1703 = vmatpush.bf16.msra.mxu0 %v1694
      %1704 = vmatmul.bf16.gmra.mxu0 %v1691
      %v1705 = vpop.f32.mrf.mxu0
      %v1706 = vadd.f32 0.0, %v1705
      %v1707 = vpop.f32.mrf.mxu0
      %1708 = vdwg.mxu0
      %v1710 = vsel %vm1565, %v1656, 0
      %v1713 = vsel %vm1673, %v1664, 0
      %1715 = vmatpush.bf16.msra.mxu0 0
      %1716 = vmatpush.bf16.msra.mxu0 0
      %1717 = vmatpush.bf16.msra.mxu0 0
      %1718 = vmatpush.bf16.msra.mxu0 0
      %1719 = vmatpush.bf16.msra.mxu0 0
      %1720 = vmatpush.bf16.msra.mxu0 0
      %1721 = vmatpush.bf16.msra.mxu0 0
      %1722 = vmatpush.bf16.msra.mxu0 %v1713
      %1723 = vmatmul.bf16.gmra.mxu0 %v1710
      %v1724 = vpop.f32.mrf.mxu0
      %v1725 = vadd.f32 0.0, %v1724
      %v1726 = vpop.f32.mrf.mxu0
      %1727 = vdwg.mxu0
      %v1729 = vsel %vm1565, %v1657, 0
      %v1732 = vsel %vm1673, %v1665, 0
      %1734 = vmatpush.bf16.msra.mxu0 0
      %1735 = vmatpush.bf16.msra.mxu0 0
      %1736 = vmatpush.bf16.msra.mxu0 0
      %1737 = vmatpush.bf16.msra.mxu0 0
      %1738 = vmatpush.bf16.msra.mxu0 0
      %1739 = vmatpush.bf16.msra.mxu0 0
      %1740 = vmatpush.bf16.msra.mxu0 0
      %1741 = vmatpush.bf16.msra.mxu0 %v1732
      %1742 = vmatmul.bf16.gmra.mxu0 %v1729
      %v1743 = vpop.f32.mrf.mxu0
      %v1744 = vadd.f32 0.0, %v1743
      %v1745 = vpop.f32.mrf.mxu0
      %1746 = vdwg.mxu0
      %v1748 = vsel %vm1565, %v1658, 0
      %v1751 = vsel %vm1673, %v1666, 0
      %1753 = vmatpush.bf16.msra.mxu0 0
      %1754 = vmatpush.bf16.msra.mxu0 0
      %1755 = vmatpush.bf16.msra.mxu0 0
      %1756 = vmatpush.bf16.msra.mxu0 0
      %1757 = vmatpush.bf16.msra.mxu0 0
      %1758 = vmatpush.bf16.msra.mxu0 0
      %1759 = vmatpush.bf16.msra.mxu0 0
      %1760 = vmatpush.bf16.msra.mxu0 %v1751
      %1761 = vmatmul.bf16.gmra.mxu0 %v1748
      %v1762 = vpop.f32.mrf.mxu0
      %v1763 = vadd.f32 0.0, %v1762
      %v1764 = vpop.f32.mrf.mxu0
      %1765 = vdwg.mxu0
      %v1767 = vsel %vm1565, %v1659, 0
      %v1770 = vsel %vm1673, %v1667, 0
      %1772 = vmatpush.bf16.msra.mxu0 0
      %1773 = vmatpush.bf16.msra.mxu0 0
      %1774 = vmatpush.bf16.msra.mxu0 0
      %1775 = vmatpush.bf16.msra.mxu0 0
      %1776 = vmatpush.bf16.msra.mxu0 0
      %1777 = vmatpush.bf16.msra.mxu0 0
      %1778 = vmatpush.bf16.msra.mxu0 0
      %1779 = vmatpush.bf16.msra.mxu0 %v1770
      %1780 = vmatmul.bf16.gmra.mxu0 %v1767
      %v1781 = vpop.f32.mrf.mxu0
      %v1782 = vadd.f32 0.0, %v1781
      %v1783 = vpop.f32.mrf.mxu0
      %1784 = vdwg.mxu0
      %v1786 = vsel %vm1565, %v1660, 0
      %v1789 = vsel %vm1673, %v1668, 0
      %1791 = vmatpush.bf16.msra.mxu0 0
      %1792 = vmatpush.bf16.msra.mxu0 0
      %1793 = vmatpush.bf16.msra.mxu0 0
      %1794 = vmatpush.bf16.msra.mxu0 0
      %1795 = vmatpush.bf16.msra.mxu0 0
      %1796 = vmatpush.bf16.msra.mxu0 0
      %1797 = vmatpush.bf16.msra.mxu0 0
      %1798 = vmatpush.bf16.msra.mxu0 %v1789
      %1799 = vmatmul.bf16.gmra.mxu0 %v1786
      %v1800 = vpop.f32.mrf.mxu0
      %v1801 = vadd.f32 0.0, %v1800
      %v1802 = vpop.f32.mrf.mxu0
      %1803 = vdwg.mxu0
      %v1805 = vsel %vm1565, %v1661, 0
      %v1808 = vsel %vm1673, %v1669, 0
      %1810 = vmatpush.bf16.msra.mxu0 0
      %1811 = vmatpush.bf16.msra.mxu0 0
      %1812 = vmatpush.bf16.msra.mxu0 0
      %1813 = vmatpush.bf16.msra.mxu0 0
      %1814 = vmatpush.bf16.msra.mxu0 0
      %1815 = vmatpush.bf16.msra.mxu0 0
      %1816 = vmatpush.bf16.msra.mxu0 0
      %1817 = vmatpush.bf16.msra.mxu0 %v1808
      %1818 = vmatmul.bf16.gmra.mxu0 %v1805
      %v1819 = vpop.f32.mrf.mxu0
      %v1820 = vadd.f32 0.0, %v1819
      %v1821 = vpop.f32.mrf.mxu0
      %1822 = vdwg.mxu0
      %v1823 = vpack.c.bf16 %v1706, %v1687
      %v1824 = vpack.c.bf16 %v1744, %v1725
      %v1825 = vpack.c.bf16 %v1782, %v1763
      %v1826 = vpack.c.bf16 %v1820, %v1801
      %v1827 = vld [vmem:[%s893] sm:$0xf]
      %v1828 = vld [vmem:[%s893 + $0x4] sm:$0xf]
      %v1831 = vunpack.c.l.b16 %v1827
      %v1832 = vunpack.c.l.b16 %v1828
      %v1833 = vpack.c.b16 %v1832, %v1831
      %v1836 = vsel %vm1412, %v1823, 0
      %v1839 = vsel %vm1412, %v1824, 0
      %v1842 = vsel %vm1412, %v1825, 0
      %v1845 = vsel %vm1412, %v1826, 0
      %1847 = vmatpush.bf16.msra.mxu0 0
      %1848 = vmatpush.bf16.msra.mxu0 0
      %1849 = vmatpush.bf16.msra.mxu0 0
      %1850 = vmatpush.bf16.msra.mxu0 0
      %1851 = vmatpush.bf16.msra.mxu0 0
      %1852 = vmatpush.bf16.msra.mxu0 0
      %1853 = vmatpush.bf16.msra.mxu0 0
      %1854 = vmatpush.bf16.msra.mxu0 %v1833
      %1855 = vmatmul.bf16.gmra.mxu0 %v1836
      %v1856 = vpop.f32.mrf.mxu0
      %v1857 = vadd.f32 0.0, %v1856
      %v1858 = vpop.f32.mrf.mxu0
      %v1859 = vadd.f32 0.0, %v1858
      %1860 = vmatmul.bf16.gmra.mxu0 %v1839
      %v1861 = vpop.f32.mrf.mxu0
      %v1862 = vadd.f32 0.0, %v1861
      %v1863 = vpop.f32.mrf.mxu0
      %v1864 = vadd.f32 0.0, %v1863
      %1865 = vmatmul.bf16.gmra.mxu0 %v1842
      %v1866 = vpop.f32.mrf.mxu0
      %v1867 = vadd.f32 0.0, %v1866
      %v1868 = vpop.f32.mrf.mxu0
      %v1869 = vadd.f32 0.0, %v1868
      %1870 = vmatmul.bf16.gmra.mxu0 %v1845
      %v1871 = vpop.f32.mrf.mxu0
      %v1872 = vadd.f32 0.0, %v1871
      %v1873 = vpop.f32.mrf.mxu0
      %v1874 = vadd.f32 0.0, %v1873
      %1875 = vdwg.mxu0
      %v1877 = vperm.slane %v1235, 0
      %v1879 = vadd.f32 %v1877, %v1857
      %v1880 = vadd.f32 %v1877, %v1859
      %v1881 = vadd.f32 %v1877, %v1862
      %v1882 = vadd.f32 %v1877, %v1864
      %v1883 = vadd.f32 %v1877, %v1867
      %v1884 = vadd.f32 %v1877, %v1869
      %v1885 = vadd.f32 %v1877, %v1872
      %v1886 = vadd.f32 %v1877, %v1874
      %s1887 = scalar_lea.vmem %s866, 16
      %v1888 = vld [vmem:[%s1887] sm:$0xf]
      %v1889 = vld [vmem:[%s1887 + $0x4] sm:$0xf]
      %v1890 = vld [vmem:[%s1887 + $0x8] sm:$0xf]
      %v1891 = vld [vmem:[%s1887 + $0xc] sm:$0xf]
      %s1892 = scalar_lea.vmem %s870, 1
      %v1893 = vld [vmem:[%s1892] sm:$0x1]
      %v1895 = vperm.slane %v1893, 0
      %v1901 = vunpack.c.l.b16 %v1888
      %v1902 = vunpack.c.l.b16 %v1889
      %v1903 = vunpack.c.l.b16 %v1890
      %v1904 = vunpack.c.l.b16 %v1891
      %v1905 = vpack.c.b16 %v1902, %v1901
      %v1906 = vpack.c.b16 %v1904, %v1903
      %1909 = vmatpush.bf16.msra.mxu0 0
      %1910 = vmatpush.bf16.msra.mxu0 0
      %1911 = vmatpush.bf16.msra.mxu0 0
      %1912 = vmatpush.bf16.msra.mxu0 0
      %1913 = vmatpush.bf16.msra.mxu0 0
      %1914 = vmatpush.bf16.msra.mxu0 0
      %1915 = vmatpush.bf16.msra.mxu0 %v1906
      %1916 = vmatpush.bf16.msra.mxu0 %v1905
      %1917 = vmatmul.bf16.gmra.mxu0 %v1258
      %v1918 = vpop.f32.mrf.mxu0
      %v1919 = vadd.f32 %v1895, %v1918
      %v1920 = vpop.f32.mrf.mxu0
      %v1921 = vadd.f32 %v1895, %v1920
      %1922 = vmatmul.bf16.gmra.mxu0 %v1261
      %v1923 = vpop.f32.mrf.mxu0
      %v1924 = vadd.f32 %v1895, %v1923
      %v1925 = vpop.f32.mrf.mxu0
      %v1926 = vadd.f32 %v1895, %v1925
      %1927 = vmatmul.bf16.gmra.mxu0 %v1264
      %v1928 = vpop.f32.mrf.mxu0
      %v1929 = vadd.f32 %v1895, %v1928
      %v1930 = vpop.f32.mrf.mxu0
      %v1931 = vadd.f32 %v1895, %v1930
      %1932 = vmatmul.bf16.gmra.mxu0 %v1267
      %v1933 = vpop.f32.mrf.mxu0
      %v1934 = vadd.f32 %v1895, %v1933
      %v1935 = vpop.f32.mrf.mxu0
      %v1936 = vadd.f32 %v1895, %v1935
      %1937 = vdwg.mxu0
      %s1938 = scalar_lea.vmem %s875, 16
      %v1939 = vld [vmem:[%s1938] sm:$0xf]
      %v1940 = vld [vmem:[%s1938 + $0x4] sm:$0xf]
      %v1941 = vld [vmem:[%s1938 + $0x8] sm:$0xf]
      %v1942 = vld [vmem:[%s1938 + $0xc] sm:$0xf]
      %s1943 = scalar_lea.vmem %s879, 1
      %v1944 = vld [vmem:[%s1943] sm:$0x1]
      %v1946 = vperm.slane %v1944, 0
      %v1952 = vunpack.c.l.b16 %v1939
      %v1953 = vunpack.c.l.b16 %v1940
      %v1954 = vunpack.c.l.b16 %v1941
      %v1955 = vunpack.c.l.b16 %v1942
      %v1956 = vpack.c.b16 %v1953, %v1952
      %v1957 = vpack.c.b16 %v1955, %v1954
      %1960 = vmatpush.bf16.msra.mxu0 0
      %1961 = vmatpush.bf16.msra.mxu0 0
      %1962 = vmatpush.bf16.msra.mxu0 0
      %1963 = vmatpush.bf16.msra.mxu0 0
      %1964 = vmatpush.bf16.msra.mxu0 0
      %1965 = vmatpush.bf16.msra.mxu0 0
      %1966 = vmatpush.bf16.msra.mxu0 %v1957
      %1967 = vmatpush.bf16.msra.mxu0 %v1956
      %1968 = vmatmul.bf16.gmra.mxu0 %v1258
      %v1969 = vpop.f32.mrf.mxu0
      %v1970 = vadd.f32 %v1946, %v1969
      %v1971 = vpop.f32.mrf.mxu0
      %v1972 = vadd.f32 %v1946, %v1971
      %1973 = vmatmul.bf16.gmra.mxu0 %v1261
      %v1974 = vpop.f32.mrf.mxu0
      %v1975 = vadd.f32 %v1946, %v1974
      %v1976 = vpop.f32.mrf.mxu0
      %v1977 = vadd.f32 %v1946, %v1976
      %1978 = vmatmul.bf16.gmra.mxu0 %v1264
      %v1979 = vpop.f32.mrf.mxu0
      %v1980 = vadd.f32 %v1946, %v1979
      %v1981 = vpop.f32.mrf.mxu0
      %v1982 = vadd.f32 %v1946, %v1981
      %1983 = vmatmul.bf16.gmra.mxu0 %v1267
      %v1984 = vpop.f32.mrf.mxu0
      %v1985 = vadd.f32 %v1946, %v1984
      %v1986 = vpop.f32.mrf.mxu0
      %v1987 = vadd.f32 %v1946, %v1986
      %1988 = vdwg.mxu0
      %s1989 = scalar_lea.vmem %s884, 16
      %v1990 = vld [vmem:[%s1989] sm:$0xf]
      %v1991 = vld [vmem:[%s1989 + $0x4] sm:$0xf]
      %v1992 = vld [vmem:[%s1989 + $0x8] sm:$0xf]
      %v1993 = vld [vmem:[%s1989 + $0xc] sm:$0xf]
      %s1994 = scalar_lea.vmem %s888, 1
      %v1995 = vld [vmem:[%s1994] sm:$0x1]
      %v1997 = vperm.slane %v1995, 0
      %v2003 = vunpack.c.l.b16 %v1990
      %v2004 = vunpack.c.l.b16 %v1991
      %v2005 = vunpack.c.l.b16 %v1992
      %v2006 = vunpack.c.l.b16 %v1993
      %v2007 = vpack.c.b16 %v2004, %v2003
      %v2008 = vpack.c.b16 %v2006, %v2005
      %2011 = vmatpush.bf16.msra.mxu0 0
      %2012 = vmatpush.bf16.msra.mxu0 0
      %2013 = vmatpush.bf16.msra.mxu0 0
      %2014 = vmatpush.bf16.msra.mxu0 0
      %2015 = vmatpush.bf16.msra.mxu0 0
      %2016 = vmatpush.bf16.msra.mxu0 0
      %2017 = vmatpush.bf16.msra.mxu0 %v2008
      %2018 = vmatpush.bf16.msra.mxu0 %v2007
      %2019 = vmatmul.bf16.gmra.mxu0 %v1258
      %v2020 = vpop.f32.mrf.mxu0
      %v2021 = vadd.f32 %v1997, %v2020
      %v2022 = vpop.f32.mrf.mxu0
      %v2023 = vadd.f32 %v1997, %v2022
      %2024 = vmatmul.bf16.gmra.mxu0 %v1261
      %v2025 = vpop.f32.mrf.mxu0
      %v2026 = vadd.f32 %v1997, %v2025
      %v2027 = vpop.f32.mrf.mxu0
      %v2028 = vadd.f32 %v1997, %v2027
      %2029 = vmatmul.bf16.gmra.mxu0 %v1264
      %v2030 = vpop.f32.mrf.mxu0
      %v2031 = vadd.f32 %v1997, %v2030
      %v2032 = vpop.f32.mrf.mxu0
      %v2033 = vadd.f32 %v1997, %v2032
      %2034 = vmatmul.bf16.gmra.mxu0 %v1267
      %v2035 = vpop.f32.mrf.mxu0
      %v2036 = vadd.f32 %v1997, %v2035
      %v2037 = vpop.f32.mrf.mxu0
      %v2038 = vadd.f32 %v1997, %v2037
      %2039 = vdwg.mxu0
      %v2040 = vpack.c.bf16 %v1919, %v1919
      %v2041 = vpack.c.bf16 %v1921, %v1921
      %v2042 = vpack.c.bf16 %v1924, %v1924
      %v2043 = vpack.c.bf16 %v1926, %v1926
      %v2044 = vpack.c.bf16 %v1929, %v1929
      %v2045 = vpack.c.bf16 %v1931, %v1931
      %v2046 = vpack.c.bf16 %v1934, %v1934
      %v2047 = vpack.c.bf16 %v1936, %v1936
      %v2048 = vpack.c.bf16 %v1970, %v1970
      %v2049 = vpack.c.bf16 %v1972, %v1972
      %v2050 = vpack.c.bf16 %v1975, %v1975
      %v2051 = vpack.c.bf16 %v1977, %v1977
      %v2052 = vpack.c.bf16 %v1980, %v1980
      %v2053 = vpack.c.bf16 %v1982, %v1982
      %v2054 = vpack.c.bf16 %v1985, %v1985
      %v2055 = vpack.c.bf16 %v1987, %v1987
      %v2057 = vsel %vm1412, %v2040, 0
      %v2060 = vsel %vm1412, %v2048, 0
      %2062 = vmatpush.bf16.xpose.msra.mxu0 0
      %2063 = vmatpush.bf16.xpose.msra.mxu0 0
      %2064 = vmatpush.bf16.xpose.msra.mxu0 0
      %2065 = vmatpush.bf16.xpose.msra.mxu0 0
      %2066 = vmatpush.bf16.xpose.msra.mxu0 0
      %2067 = vmatpush.bf16.xpose.msra.mxu0 0
      %2068 = vmatpush.bf16.xpose.msra.mxu0 0
      %2069 = vmatpush.bf16.xpose.msra.mxu0 %v2060
      %2070 = vmatmul.bf16.gmra.mxu0 %v2057
      %v2071 = vpop.f32.mrf.mxu0
      %v2072 = vadd.f32 %v1215, %v2071
      %v2073 = vpop.f32.mrf.mxu0
      %2074 = vdwg.mxu0
      %v2076 = vsel %vm1412, %v2041, 0
      %v2079 = vsel %vm1412, %v2049, 0
      %2081 = vmatpush.bf16.xpose.msra.mxu0 0
      %2082 = vmatpush.bf16.xpose.msra.mxu0 0
      %2083 = vmatpush.bf16.xpose.msra.mxu0 0
      %2084 = vmatpush.bf16.xpose.msra.mxu0 0
      %2085 = vmatpush.bf16.xpose.msra.mxu0 0
      %2086 = vmatpush.bf16.xpose.msra.mxu0 0
      %2087 = vmatpush.bf16.xpose.msra.mxu0 0
      %2088 = vmatpush.bf16.xpose.msra.mxu0 %v2079
      %2089 = vmatmul.bf16.gmra.mxu0 %v2076
      %v2090 = vpop.f32.mrf.mxu0
      %v2091 = vadd.f32 %v1216, %v2090
      %v2092 = vpop.f32.mrf.mxu0
      %2093 = vdwg.mxu0
      %v2095 = vsel %vm1412, %v2042, 0
      %v2098 = vsel %vm1412, %v2050, 0
      %2100 = vmatpush.bf16.xpose.msra.mxu0 0
      %2101 = vmatpush.bf16.xpose.msra.mxu0 0
      %2102 = vmatpush.bf16.xpose.msra.mxu0 0
      %2103 = vmatpush.bf16.xpose.msra.mxu0 0
      %2104 = vmatpush.bf16.xpose.msra.mxu0 0
      %2105 = vmatpush.bf16.xpose.msra.mxu0 0
      %2106 = vmatpush.bf16.xpose.msra.mxu0 0
      %2107 = vmatpush.bf16.xpose.msra.mxu0 %v2098
      %2108 = vmatmul.bf16.gmra.mxu0 %v2095
      %v2109 = vpop.f32.mrf.mxu0
      %v2110 = vadd.f32 %v1217, %v2109
      %v2111 = vpop.f32.mrf.mxu0
      %2112 = vdwg.mxu0
      %v2114 = vsel %vm1412, %v2043, 0
      %v2117 = vsel %vm1412, %v2051, 0
      %2119 = vmatpush.bf16.xpose.msra.mxu0 0
      %2120 = vmatpush.bf16.xpose.msra.mxu0 0
      %2121 = vmatpush.bf16.xpose.msra.mxu0 0
      %2122 = vmatpush.bf16.xpose.msra.mxu0 0
      %2123 = vmatpush.bf16.xpose.msra.mxu0 0
      %2124 = vmatpush.bf16.xpose.msra.mxu0 0
      %2125 = vmatpush.bf16.xpose.msra.mxu0 0
      %2126 = vmatpush.bf16.xpose.msra.mxu0 %v2117
      %2127 = vmatmul.bf16.gmra.mxu0 %v2114
      %v2128 = vpop.f32.mrf.mxu0
      %v2129 = vadd.f32 %v1218, %v2128
      %v2130 = vpop.f32.mrf.mxu0
      %2131 = vdwg.mxu0
      %v2133 = vsel %vm1412, %v2044, 0
      %v2136 = vsel %vm1412, %v2052, 0
      %2138 = vmatpush.bf16.xpose.msra.mxu0 0
      %2139 = vmatpush.bf16.xpose.msra.mxu0 0
      %2140 = vmatpush.bf16.xpose.msra.mxu0 0
      %2141 = vmatpush.bf16.xpose.msra.mxu0 0
      %2142 = vmatpush.bf16.xpose.msra.mxu0 0
      %2143 = vmatpush.bf16.xpose.msra.mxu0 0
      %2144 = vmatpush.bf16.xpose.msra.mxu0 0
      %2145 = vmatpush.bf16.xpose.msra.mxu0 %v2136
      %2146 = vmatmul.bf16.gmra.mxu0 %v2133
      %v2147 = vpop.f32.mrf.mxu0
      %v2148 = vadd.f32 %v1219, %v2147
      %v2149 = vpop.f32.mrf.mxu0
      %2150 = vdwg.mxu0
      %v2152 = vsel %vm1412, %v2045, 0
      %v2155 = vsel %vm1412, %v2053, 0
      %2157 = vmatpush.bf16.xpose.msra.mxu0 0
      %2158 = vmatpush.bf16.xpose.msra.mxu0 0
      %2159 = vmatpush.bf16.xpose.msra.mxu0 0
      %2160 = vmatpush.bf16.xpose.msra.mxu0 0
      %2161 = vmatpush.bf16.xpose.msra.mxu0 0
      %2162 = vmatpush.bf16.xpose.msra.mxu0 0
      %2163 = vmatpush.bf16.xpose.msra.mxu0 0
      %2164 = vmatpush.bf16.xpose.msra.mxu0 %v2155
      %2165 = vmatmul.bf16.gmra.mxu0 %v2152
      %v2166 = vpop.f32.mrf.mxu0
      %v2167 = vadd.f32 %v1220, %v2166
      %v2168 = vpop.f32.mrf.mxu0
      %2169 = vdwg.mxu0
      %v2171 = vsel %vm1412, %v2046, 0
      %v2174 = vsel %vm1412, %v2054, 0
      %2176 = vmatpush.bf16.xpose.msra.mxu0 0
      %2177 = vmatpush.bf16.xpose.msra.mxu0 0
      %2178 = vmatpush.bf16.xpose.msra.mxu0 0
      %2179 = vmatpush.bf16.xpose.msra.mxu0 0
      %2180 = vmatpush.bf16.xpose.msra.mxu0 0
      %2181 = vmatpush.bf16.xpose.msra.mxu0 0
      %2182 = vmatpush.bf16.xpose.msra.mxu0 0
      %2183 = vmatpush.bf16.xpose.msra.mxu0 %v2174
      %2184 = vmatmul.bf16.gmra.mxu0 %v2171
      %v2185 = vpop.f32.mrf.mxu0
      %v2186 = vadd.f32 %v1221, %v2185
      %v2187 = vpop.f32.mrf.mxu0
      %2188 = vdwg.mxu0
      %v2190 = vsel %vm1412, %v2047, 0
      %v2193 = vsel %vm1412, %v2055, 0
      %2195 = vmatpush.bf16.xpose.msra.mxu0 0
      %2196 = vmatpush.bf16.xpose.msra.mxu0 0
      %2197 = vmatpush.bf16.xpose.msra.mxu0 0
      %2198 = vmatpush.bf16.xpose.msra.mxu0 0
      %2199 = vmatpush.bf16.xpose.msra.mxu0 0
      %2200 = vmatpush.bf16.xpose.msra.mxu0 0
      %2201 = vmatpush.bf16.xpose.msra.mxu0 0
      %2202 = vmatpush.bf16.xpose.msra.mxu0 %v2193
      %2203 = vmatmul.bf16.gmra.mxu0 %v2190
      %v2204 = vpop.f32.mrf.mxu0
      %v2205 = vadd.f32 %v1222, %v2204
      %v2206 = vpop.f32.mrf.mxu0
      %2207 = vdwg.mxu0
      %v2208 = vsel %vm1565, %v2072, -inf
      %2209 = vmax.xlane.f32.xlu0 %v2208
      %v2210 = vpop.xlane.xlu0 %2209
      %v2211 = vsel %vm1565, %v2091, -inf
      %2212 = vmax.xlane.f32.xlu0 %v2211
      %v2213 = vpop.xlane.xlu0 %2212
      %v2214 = vsel %vm1565, %v2110, -inf
      %2215 = vmax.xlane.f32.xlu0 %v2214
      %v2216 = vpop.xlane.xlu0 %2215
      %v2217 = vsel %vm1565, %v2129, -inf
      %2218 = vmax.xlane.f32.xlu0 %v2217
      %v2219 = vpop.xlane.xlu0 %2218
      %v2220 = vsel %vm1565, %v2148, -inf
      %2221 = vmax.xlane.f32.xlu0 %v2220
      %v2222 = vpop.xlane.xlu0 %2221
      %v2223 = vsel %vm1565, %v2167, -inf
      %2224 = vmax.xlane.f32.xlu0 %v2223
      %v2225 = vpop.xlane.xlu0 %2224
      %v2226 = vsel %vm1565, %v2186, -inf
      %2227 = vmax.xlane.f32.xlu0 %v2226
      %v2228 = vpop.xlane.xlu0 %2227
      %v2229 = vsel %vm1565, %v2205, -inf
      %2230 = vmax.xlane.f32.xlu0 %v2229
      %v2231 = vpop.xlane.xlu0 %2230
      %v2232 = vsub.f32 %v2072, %v2210
      %v2233 = vsub.f32 %v2091, %v2213
      %v2234 = vsub.f32 %v2110, %v2216
      %v2235 = vsub.f32 %v2129, %v2219
      %v2236 = vsub.f32 %v2148, %v2222
      %v2237 = vsub.f32 %v2167, %v2225
      %v2238 = vsub.f32 %v2186, %v2228
      %v2239 = vsub.f32 %v2205, %v2231
      %v2240 = vmul.f32 %v2232, 1.442695
      %v2241 = vpow.pop %v2240
      %v2242 = vmul.f32 %v2233, 1.442695
      %v2243 = vpow.pop %v2242
      %v2244 = vmul.f32 %v2234, 1.442695
      %v2245 = vpow.pop %v2244
      %v2246 = vmul.f32 %v2235, 1.442695
      %v2247 = vpow.pop %v2246
      %v2248 = vmul.f32 %v2236, 1.442695
      %v2249 = vpow.pop %v2248
      %v2250 = vmul.f32 %v2237, 1.442695
      %v2251 = vpow.pop %v2250
      %v2252 = vmul.f32 %v2238, 1.442695
      %v2253 = vpow.pop %v2252
      %v2254 = vmul.f32 %v2239, 1.442695
      %v2255 = vpow.pop %v2254
      %v2256 = vsel %vm1565, %v2241, 0.0
      %2257 = vadd.xlane.f32.xlu0 %v2256
      %v2258 = vpop.xlane.xlu0 %2257
      %v2259 = vsel %vm1565, %v2243, 0.0
      %2260 = vadd.xlane.f32.xlu0 %v2259
      %v2261 = vpop.xlane.xlu0 %2260
      %v2262 = vsel %vm1565, %v2245, 0.0
      %2263 = vadd.xlane.f32.xlu0 %v2262
      %v2264 = vpop.xlane.xlu0 %2263
      %v2265 = vsel %vm1565, %v2247, 0.0
      %2266 = vadd.xlane.f32.xlu0 %v2265
      %v2267 = vpop.xlane.xlu0 %2266
      %v2268 = vsel %vm1565, %v2249, 0.0
      %2269 = vadd.xlane.f32.xlu0 %v2268
      %v2270 = vpop.xlane.xlu0 %2269
      %v2271 = vsel %vm1565, %v2251, 0.0
      %2272 = vadd.xlane.f32.xlu0 %v2271
      %v2273 = vpop.xlane.xlu0 %2272
      %v2274 = vsel %vm1565, %v2253, 0.0
      %2275 = vadd.xlane.f32.xlu0 %v2274
      %v2276 = vpop.xlane.xlu0 %2275
      %v2277 = vsel %vm1565, %v2255, 0.0
      %2278 = vadd.xlane.f32.xlu0 %v2277
      %v2279 = vpop.xlane.xlu0 %2278
      %v2280 = vrcp.pop %v2258
      %v2281 = vrcp.pop %v2261
      %v2282 = vrcp.pop %v2264
      %v2283 = vrcp.pop %v2267
      %v2284 = vrcp.pop %v2270
      %v2285 = vrcp.pop %v2273
      %v2286 = vrcp.pop %v2276
      %v2287 = vrcp.pop %v2279
      %v2288 = vmul.f32 %v2241, %v2280
      %v2289 = vmul.f32 %v2243, %v2281
      %v2290 = vmul.f32 %v2245, %v2282
      %v2291 = vmul.f32 %v2247, %v2283
      %v2292 = vmul.f32 %v2249, %v2284
      %v2293 = vmul.f32 %v2251, %v2285
      %v2294 = vmul.f32 %v2253, %v2286
      %v2295 = vmul.f32 %v2255, %v2287
      %v2296 = vpack.c.bf16 %v2288, %v2288
      %v2297 = vpack.c.bf16 %v2289, %v2289
      %v2298 = vpack.c.bf16 %v2290, %v2290
      %v2299 = vpack.c.bf16 %v2291, %v2291
      %v2300 = vpack.c.bf16 %v2292, %v2292
      %v2301 = vpack.c.bf16 %v2293, %v2293
      %v2302 = vpack.c.bf16 %v2294, %v2294
      %v2303 = vpack.c.bf16 %v2295, %v2295
      %v2304 = vpack.c.bf16 %v2021, %v2021
      %v2305 = vpack.c.bf16 %v2023, %v2023
      %v2306 = vpack.c.bf16 %v2026, %v2026
      %v2307 = vpack.c.bf16 %v2028, %v2028
      %v2308 = vpack.c.bf16 %v2031, %v2031
      %v2309 = vpack.c.bf16 %v2033, %v2033
      %v2310 = vpack.c.bf16 %v2036, %v2036
      %v2311 = vpack.c.bf16 %v2038, %v2038
      %v2313 = vsel %vm1565, %v2296, 0
      %v2316 = vsel %vm1673, %v2304, 0
      %2318 = vmatpush.bf16.msra.mxu0 0
      %2319 = vmatpush.bf16.msra.mxu0 0
      %2320 = vmatpush.bf16.msra.mxu0 0
      %2321 = vmatpush.bf16.msra.mxu0 0
      %2322 = vmatpush.bf16.msra.mxu0 0
      %2323 = vmatpush.bf16.msra.mxu0 0
      %2324 = vmatpush.bf16.msra.mxu0 0
      %2325 = vmatpush.bf16.msra.mxu0 %v2316
      %2326 = vmatmul.bf16.gmra.mxu0 %v2313
      %v2327 = vpop.f32.mrf.mxu0
      %v2328 = vadd.f32 0.0, %v2327
      %v2329 = vpop.f32.mrf.mxu0
      %2330 = vdwg.mxu0
      %v2332 = vsel %vm1565, %v2297, 0
      %v2335 = vsel %vm1673, %v2305, 0
      %2337 = vmatpush.bf16.msra.mxu0 0
      %2338 = vmatpush.bf16.msra.mxu0 0
      %2339 = vmatpush.bf16.msra.mxu0 0
      %2340 = vmatpush.bf16.msra.mxu0 0
      %2341 = vmatpush.bf16.msra.mxu0 0
      %2342 = vmatpush.bf16.msra.mxu0 0
      %2343 = vmatpush.bf16.msra.mxu0 0
      %2344 = vmatpush.bf16.msra.mxu0 %v2335
      %2345 = vmatmul.bf16.gmra.mxu0 %v2332
      %v2346 = vpop.f32.mrf.mxu0
      %v2347 = vadd.f32 0.0, %v2346
      %v2348 = vpop.f32.mrf.mxu0
      %2349 = vdwg.mxu0
      %v2351 = vsel %vm1565, %v2298, 0
      %v2354 = vsel %vm1673, %v2306, 0
      %2356 = vmatpush.bf16.msra.mxu0 0
      %2357 = vmatpush.bf16.msra.mxu0 0
      %2358 = vmatpush.bf16.msra.mxu0 0
      %2359 = vmatpush.bf16.msra.mxu0 0
      %2360 = vmatpush.bf16.msra.mxu0 0
      %2361 = vmatpush.bf16.msra.mxu0 0
      %2362 = vmatpush.bf16.msra.mxu0 0
      %2363 = vmatpush.bf16.msra.mxu0 %v2354
      %2364 = vmatmul.bf16.gmra.mxu0 %v2351
      %v2365 = vpop.f32.mrf.mxu0
      %v2366 = vadd.f32 0.0, %v2365
      %v2367 = vpop.f32.mrf.mxu0
      %2368 = vdwg.mxu0
      %v2370 = vsel %vm1565, %v2299, 0
      %v2373 = vsel %vm1673, %v2307, 0
      %2375 = vmatpush.bf16.msra.mxu0 0
      %2376 = vmatpush.bf16.msra.mxu0 0
      %2377 = vmatpush.bf16.msra.mxu0 0
      %2378 = vmatpush.bf16.msra.mxu0 0
      %2379 = vmatpush.bf16.msra.mxu0 0
      %2380 = vmatpush.bf16.msra.mxu0 0
      %2381 = vmatpush.bf16.msra.mxu0 0
      %2382 = vmatpush.bf16.msra.mxu0 %v2373
      %2383 = vmatmul.bf16.gmra.mxu0 %v2370
      %v2384 = vpop.f32.mrf.mxu0
      %v2385 = vadd.f32 0.0, %v2384
      %v2386 = vpop.f32.mrf.mxu0
      %2387 = vdwg.mxu0
      %v2389 = vsel %vm1565, %v2300, 0
      %v2392 = vsel %vm1673, %v2308, 0
      %2394 = vmatpush.bf16.msra.mxu0 0
      %2395 = vmatpush.bf16.msra.mxu0 0
      %2396 = vmatpush.bf16.msra.mxu0 0
      %2397 = vmatpush.bf16.msra.mxu0 0
      %2398 = vmatpush.bf16.msra.mxu0 0
      %2399 = vmatpush.bf16.msra.mxu0 0
      %2400 = vmatpush.bf16.msra.mxu0 0
      %2401 = vmatpush.bf16.msra.mxu0 %v2392
      %2402 = vmatmul.bf16.gmra.mxu0 %v2389
      %v2403 = vpop.f32.mrf.mxu0
      %v2404 = vadd.f32 0.0, %v2403
      %v2405 = vpop.f32.mrf.mxu0
      %2406 = vdwg.mxu0
      %v2408 = vsel %vm1565, %v2301, 0
      %v2411 = vsel %vm1673, %v2309, 0
      %2413 = vmatpush.bf16.msra.mxu0 0
      %2414 = vmatpush.bf16.msra.mxu0 0
      %2415 = vmatpush.bf16.msra.mxu0 0
      %2416 = vmatpush.bf16.msra.mxu0 0
      %2417 = vmatpush.bf16.msra.mxu0 0
      %2418 = vmatpush.bf16.msra.mxu0 0
      %2419 = vmatpush.bf16.msra.mxu0 0
      %2420 = vmatpush.bf16.msra.mxu0 %v2411
      %2421 = vmatmul.bf16.gmra.mxu0 %v2408
      %v2422 = vpop.f32.mrf.mxu0
      %v2423 = vadd.f32 0.0, %v2422
      %v2424 = vpop.f32.mrf.mxu0
      %2425 = vdwg.mxu0
      %v2427 = vsel %vm1565, %v2302, 0
      %v2430 = vsel %vm1673, %v2310, 0
      %2432 = vmatpush.bf16.msra.mxu0 0
      %2433 = vmatpush.bf16.msra.mxu0 0
      %2434 = vmatpush.bf16.msra.mxu0 0
      %2435 = vmatpush.bf16.msra.mxu0 0
      %2436 = vmatpush.bf16.msra.mxu0 0
      %2437 = vmatpush.bf16.msra.mxu0 0
      %2438 = vmatpush.bf16.msra.mxu0 0
      %2439 = vmatpush.bf16.msra.mxu0 %v2430
      %2440 = vmatmul.bf16.gmra.mxu0 %v2427
      %v2441 = vpop.f32.mrf.mxu0
      %v2442 = vadd.f32 0.0, %v2441
      %v2443 = vpop.f32.mrf.mxu0
      %2444 = vdwg.mxu0
      %v2446 = vsel %vm1565, %v2303, 0
      %v2449 = vsel %vm1673, %v2311, 0
      %2451 = vmatpush.bf16.msra.mxu0 0
      %2452 = vmatpush.bf16.msra.mxu0 0
      %2453 = vmatpush.bf16.msra.mxu0 0
      %2454 = vmatpush.bf16.msra.mxu0 0
      %2455 = vmatpush.bf16.msra.mxu0 0
      %2456 = vmatpush.bf16.msra.mxu0 0
      %2457 = vmatpush.bf16.msra.mxu0 0
      %2458 = vmatpush.bf16.msra.mxu0 %v2449
      %2459 = vmatmul.bf16.gmra.mxu0 %v2446
      %v2460 = vpop.f32.mrf.mxu0
      %v2461 = vadd.f32 0.0, %v2460
      %v2462 = vpop.f32.mrf.mxu0
      %2463 = vdwg.mxu0
      %v2464 = vpack.c.bf16 %v2347, %v2328
      %v2465 = vpack.c.bf16 %v2385, %v2366
      %v2466 = vpack.c.bf16 %v2423, %v2404
      %v2467 = vpack.c.bf16 %v2461, %v2442
      %s2468 = scalar_lea.vmem %s893, 8
      %v2469 = vld [vmem:[%s2468] sm:$0xf]
      %v2470 = vld [vmem:[%s2468 + $0x4] sm:$0xf]
      %v2473 = vunpack.c.l.b16 %v2469
      %v2474 = vunpack.c.l.b16 %v2470
      %v2475 = vpack.c.b16 %v2474, %v2473
      %v2478 = vsel %vm1412, %v2464, 0
      %v2481 = vsel %vm1412, %v2465, 0
      %v2484 = vsel %vm1412, %v2466, 0
      %v2487 = vsel %vm1412, %v2467, 0
      %2489 = vmatpush.bf16.msra.mxu0 0
      %2490 = vmatpush.bf16.msra.mxu0 0
      %2491 = vmatpush.bf16.msra.mxu0 0
      %2492 = vmatpush.bf16.msra.mxu0 0
      %2493 = vmatpush.bf16.msra.mxu0 0
      %2494 = vmatpush.bf16.msra.mxu0 0
      %2495 = vmatpush.bf16.msra.mxu0 0
      %2496 = vmatpush.bf16.msra.mxu0 %v2475
      %2497 = vmatmul.bf16.gmra.mxu0 %v2478
      %v2498 = vpop.f32.mrf.mxu0
      %v2499 = vadd.f32 0.0, %v2498
      %v2500 = vpop.f32.mrf.mxu0
      %v2501 = vadd.f32 0.0, %v2500
      %2502 = vmatmul.bf16.gmra.mxu0 %v2481
      %v2503 = vpop.f32.mrf.mxu0
      %v2504 = vadd.f32 0.0, %v2503
      %v2505 = vpop.f32.mrf.mxu0
      %v2506 = vadd.f32 0.0, %v2505
      %2507 = vmatmul.bf16.gmra.mxu0 %v2484
      %v2508 = vpop.f32.mrf.mxu0
      %v2509 = vadd.f32 0.0, %v2508
      %v2510 = vpop.f32.mrf.mxu0
      %v2511 = vadd.f32 0.0, %v2510
      %2512 = vmatmul.bf16.gmra.mxu0 %v2487
      %v2513 = vpop.f32.mrf.mxu0
      %v2514 = vadd.f32 0.0, %v2513
      %v2515 = vpop.f32.mrf.mxu0
      %v2516 = vadd.f32 0.0, %v2515
      %2517 = vdwg.mxu0
      %v2518 = vadd.f32 %v1879, %v2499
      %v2519 = vadd.f32 %v1880, %v2501
      %v2520 = vadd.f32 %v1881, %v2504
      %v2521 = vadd.f32 %v1882, %v2506
      %v2522 = vadd.f32 %v1883, %v2509
      %v2523 = vadd.f32 %v1884, %v2511
      %v2524 = vadd.f32 %v1885, %v2514
      %v2525 = vadd.f32 %v1886, %v2516
      %v2526 = vadd.f32 %v2518, %v1223
      %v2527 = vadd.f32 %v2519, %v1224
      %v2528 = vadd.f32 %v2520, %v1225
      %v2529 = vadd.f32 %v2521, %v1226
      %v2530 = vadd.f32 %v2522, %v1227
      %v2531 = vadd.f32 %v2523, %v1228
      %v2532 = vadd.f32 %v2524, %v1229
      %v2533 = vadd.f32 %v2525, %v1230
      %v2534 = vld [vmem:[%s899] sm:$0x1]
      %v2535 = vld [vmem:[%s902] sm:$0x1]
      %v2536 = vsel %vm1256, %v2526, 0.0
      %2537 = vadd.xlane.f32.xlu0 %v2536
      %v2538 = vpop.xlane.xlu0 %2537
      %v2539 = vsel %vm1256, %v2527, 0.0
      %2540 = vadd.xlane.f32.xlu0 %v2539
      %v2541 = vpop.xlane.xlu0 %2540
      %v2542 = vsel %vm1256, %v2528, 0.0
      %2543 = vadd.xlane.f32.xlu0 %v2542
      %v2544 = vpop.xlane.xlu0 %2543
      %v2545 = vsel %vm1256, %v2529, 0.0
      %2546 = vadd.xlane.f32.xlu0 %v2545
      %v2547 = vpop.xlane.xlu0 %2546
      %v2548 = vsel %vm1256, %v2530, 0.0
      %2549 = vadd.xlane.f32.xlu0 %v2548
      %v2550 = vpop.xlane.xlu0 %2549
      %v2551 = vsel %vm1256, %v2531, 0.0
      %2552 = vadd.xlane.f32.xlu0 %v2551
      %v2553 = vpop.xlane.xlu0 %2552
      %v2554 = vsel %vm1256, %v2532, 0.0
      %2555 = vadd.xlane.f32.xlu0 %v2554
      %v2556 = vpop.xlane.xlu0 %2555
      %v2557 = vsel %vm1256, %v2533, 0.0
      %2558 = vadd.xlane.f32.xlu0 %v2557
      %v2559 = vpop.xlane.xlu0 %2558
      %v2560 = vrcp.pop 32.0
      %v2561 = vmul.f32 32.0, %v2560
      %v2562 = vsub.f32 1.0, %v2561
      %v2563 = vmul.f32 %v2560, %v2562
      %v2564 = vadd.f32 %v2560, %v2563
      %vm2565 = vweird.f32 %v2560
      %v2566 = vsel %vm2565, %v2560, %v2564
      %v2567 = vmul.f32 %v2538, %v2566
      %v2568 = vmul.f32 %v2541, %v2566
      %v2569 = vmul.f32 %v2544, %v2566
      %v2570 = vmul.f32 %v2547, %v2566
      %v2571 = vmul.f32 %v2550, %v2566
      %v2572 = vmul.f32 %v2553, %v2566
      %v2573 = vmul.f32 %v2556, %v2566
      %v2574 = vmul.f32 %v2559, %v2566
      %v2575 = vsub.f32 %v2526, %v2567
      %v2576 = vsub.f32 %v2527, %v2568
      %v2577 = vsub.f32 %v2528, %v2569
      %v2578 = vsub.f32 %v2529, %v2570
      %v2579 = vsub.f32 %v2530, %v2571
      %v2580 = vsub.f32 %v2531, %v2572
      %v2581 = vsub.f32 %v2532, %v2573
      %v2582 = vsub.f32 %v2533, %v2574
      %v2583 = vmul.f32 %v2575, %v2575
      %v2584 = vmul.f32 %v2576, %v2576
      %v2585 = vmul.f32 %v2577, %v2577
      %v2586 = vmul.f32 %v2578, %v2578
      %v2587 = vmul.f32 %v2579, %v2579
      %v2588 = vmul.f32 %v2580, %v2580
      %v2589 = vmul.f32 %v2581, %v2581
      %v2590 = vmul.f32 %v2582, %v2582
      %v2591 = vsel %vm1256, %v2583, 0.0
      %2592 = vadd.xlane.f32.xlu0 %v2591
      %v2593 = vpop.xlane.xlu0 %2592
      %v2594 = vsel %vm1256, %v2584, 0.0
      %2595 = vadd.xlane.f32.xlu0 %v2594
      %v2596 = vpop.xlane.xlu0 %2595
      %v2597 = vsel %vm1256, %v2585, 0.0
      %2598 = vadd.xlane.f32.xlu0 %v2597
      %v2599 = vpop.xlane.xlu0 %2598
      %v2600 = vsel %vm1256, %v2586, 0.0
      %2601 = vadd.xlane.f32.xlu0 %v2600
      %v2602 = vpop.xlane.xlu0 %2601
      %v2603 = vsel %vm1256, %v2587, 0.0
      %2604 = vadd.xlane.f32.xlu0 %v2603
      %v2605 = vpop.xlane.xlu0 %2604
      %v2606 = vsel %vm1256, %v2588, 0.0
      %2607 = vadd.xlane.f32.xlu0 %v2606
      %v2608 = vpop.xlane.xlu0 %2607
      %v2609 = vsel %vm1256, %v2589, 0.0
      %2610 = vadd.xlane.f32.xlu0 %v2609
      %v2611 = vpop.xlane.xlu0 %2610
      %v2612 = vsel %vm1256, %v2590, 0.0
      %2613 = vadd.xlane.f32.xlu0 %v2612
      %v2614 = vpop.xlane.xlu0 %2613
      %v2615 = vmul.f32 %v2593, %v2566
      %v2616 = vmul.f32 %v2596, %v2566
      %v2617 = vmul.f32 %v2599, %v2566
      %v2618 = vmul.f32 %v2602, %v2566
      %v2619 = vmul.f32 %v2605, %v2566
      %v2620 = vmul.f32 %v2608, %v2566
      %v2621 = vmul.f32 %v2611, %v2566
      %v2622 = vmul.f32 %v2614, %v2566
      %v2623 = vadd.f32 %v2615, 1e-12
      %v2624 = vadd.f32 %v2616, 1e-12
      %v2625 = vadd.f32 %v2617, 1e-12
      %v2626 = vadd.f32 %v2618, 1e-12
      %v2627 = vadd.f32 %v2619, 1e-12
      %v2628 = vadd.f32 %v2620, 1e-12
      %v2629 = vadd.f32 %v2621, 1e-12
      %v2630 = vadd.f32 %v2622, 1e-12
      %v2631 = vrsqrt.pop %v2623
      %v2632 = vmul.f32 %v2631, %v2623
      %v2633 = vmul.f32 %v2632, %v2631
      %v2634 = vmul.f32 0.5, %v2633
      %v2635 = vsub.f32 1.5, %v2634
      %v2636 = vmul.f32 %v2631, %v2635
      %vm2637 = vweird.f32 %v2623
      %vm2638 = vweird.f32 %v2631
      %vm2639 = vmor %vm2637, %vm2638
      %v2640 = vsel %vm2639, %v2631, %v2636
      %v2641 = vrsqrt.pop %v2624
      %v2642 = vmul.f32 %v2641, %v2624
      %v2643 = vmul.f32 %v2642, %v2641
      %v2644 = vmul.f32 0.5, %v2643
      %v2645 = vsub.f32 1.5, %v2644
      %v2646 = vmul.f32 %v2641, %v2645
      %vm2647 = vweird.f32 %v2624
      %vm2648 = vweird.f32 %v2641
      %vm2649 = vmor %vm2647, %vm2648
      %v2650 = vsel %vm2649, %v2641, %v2646
      %v2651 = vrsqrt.pop %v2625
      %v2652 = vmul.f32 %v2651, %v2625
      %v2653 = vmul.f32 %v2652, %v2651
      %v2654 = vmul.f32 0.5, %v2653
      %v2655 = vsub.f32 1.5, %v2654
      %v2656 = vmul.f32 %v2651, %v2655
      %vm2657 = vweird.f32 %v2625
      %vm2658 = vweird.f32 %v2651
      %vm2659 = vmor %vm2657, %vm2658
      %v2660 = vsel %vm2659, %v2651, %v2656
      %v2661 = vrsqrt.pop %v2626
      %v2662 = vmul.f32 %v2661, %v2626
      %v2663 = vmul.f32 %v2662, %v2661
      %v2664 = vmul.f32 0.5, %v2663
      %v2665 = vsub.f32 1.5, %v2664
      %v2666 = vmul.f32 %v2661, %v2665
      %vm2667 = vweird.f32 %v2626
      %vm2668 = vweird.f32 %v2661
      %vm2669 = vmor %vm2667, %vm2668
      %v2670 = vsel %vm2669, %v2661, %v2666
      %v2671 = vrsqrt.pop %v2627
      %v2672 = vmul.f32 %v2671, %v2627
      %v2673 = vmul.f32 %v2672, %v2671
      %v2674 = vmul.f32 0.5, %v2673
      %v2675 = vsub.f32 1.5, %v2674
      %v2676 = vmul.f32 %v2671, %v2675
      %vm2677 = vweird.f32 %v2627
      %vm2678 = vweird.f32 %v2671
      %vm2679 = vmor %vm2677, %vm2678
      %v2680 = vsel %vm2679, %v2671, %v2676
      %v2681 = vrsqrt.pop %v2628
      %v2682 = vmul.f32 %v2681, %v2628
      %v2683 = vmul.f32 %v2682, %v2681
      %v2684 = vmul.f32 0.5, %v2683
      %v2685 = vsub.f32 1.5, %v2684
      %v2686 = vmul.f32 %v2681, %v2685
      %vm2687 = vweird.f32 %v2628
      %vm2688 = vweird.f32 %v2681
      %vm2689 = vmor %vm2687, %vm2688
      %v2690 = vsel %vm2689, %v2681, %v2686
      %v2691 = vrsqrt.pop %v2629
      %v2692 = vmul.f32 %v2691, %v2629
      %v2693 = vmul.f32 %v2692, %v2691
      %v2694 = vmul.f32 0.5, %v2693
      %v2695 = vsub.f32 1.5, %v2694
      %v2696 = vmul.f32 %v2691, %v2695
      %vm2697 = vweird.f32 %v2629
      %vm2698 = vweird.f32 %v2691
      %vm2699 = vmor %vm2697, %vm2698
      %v2700 = vsel %vm2699, %v2691, %v2696
      %v2701 = vrsqrt.pop %v2630
      %v2702 = vmul.f32 %v2701, %v2630
      %v2703 = vmul.f32 %v2702, %v2701
      %v2704 = vmul.f32 0.5, %v2703
      %v2705 = vsub.f32 1.5, %v2704
      %v2706 = vmul.f32 %v2701, %v2705
      %vm2707 = vweird.f32 %v2630
      %vm2708 = vweird.f32 %v2701
      %vm2709 = vmor %vm2707, %vm2708
      %v2710 = vsel %vm2709, %v2701, %v2706
      %v2711 = vmul.f32 %v2575, %v2640
      %v2712 = vmul.f32 %v2576, %v2650
      %v2713 = vmul.f32 %v2577, %v2660
      %v2714 = vmul.f32 %v2578, %v2670
      %v2715 = vmul.f32 %v2579, %v2680
      %v2716 = vmul.f32 %v2580, %v2690
      %v2717 = vmul.f32 %v2581, %v2700
      %v2718 = vmul.f32 %v2582, %v2710
      %v2720 = vperm.slane %v2534, 0
      %v2722 = vmul.f32 %v2720, %v2711
      %v2723 = vmul.f32 %v2720, %v2712
      %v2724 = vmul.f32 %v2720, %v2713
      %v2725 = vmul.f32 %v2720, %v2714
      %v2726 = vmul.f32 %v2720, %v2715
      %v2727 = vmul.f32 %v2720, %v2716
      %v2728 = vmul.f32 %v2720, %v2717
      %v2729 = vmul.f32 %v2720, %v2718
      %v2731 = vperm.slane %v2535, 0
      %v2733 = vadd.f32 %v2722, %v2731
      %v2734 = vadd.f32 %v2723, %v2731
      %v2735 = vadd.f32 %v2724, %v2731
      %v2736 = vadd.f32 %v2725, %v2731
      %v2737 = vadd.f32 %v2726, %v2731
      %v2738 = vadd.f32 %v2727, %v2731
      %v2739 = vadd.f32 %v2728, %v2731
      %v2740 = vadd.f32 %v2729, %v2731
      %v2741 = vpack.c.bf16 %v2734, %v2733
      %v2742 = vpack.c.bf16 %v2736, %v2735
      %v2743 = vpack.c.bf16 %v2738, %v2737
      %v2744 = vpack.c.bf16 %v2740, %v2739
      %v2745 = vld [vmem:[%s907] sm:$0xf]
      %v2746 = vld [vmem:[%s907 + $0x4] sm:$0xf]
      %v2747 = vld [vmem:[%s907 + $0x8] sm:$0xf]
      %v2748 = vld [vmem:[%s907 + $0xc] sm:$0xf]
      %v2749 = vld [vmem:[%s910] sm:$0x1]
      %v2751 = vperm.slane %v2749, 0
      %v2757 = vunpack.c.l.b16 %v2745
      %v2758 = vunpack.c.l.b16 %v2746
      %v2759 = vunpack.c.l.b16 %v2747
      %v2760 = vunpack.c.l.b16 %v2748
      %v2761 = vpack.c.b16 %v2758, %v2757
      %v2762 = vpack.c.b16 %v2760, %v2759
      %v2766 = vsel %vm1256, %v2741, 0
      %v2769 = vsel %vm1256, %v2742, 0
      %v2772 = vsel %vm1256, %v2743, 0
      %v2775 = vsel %vm1256, %v2744, 0
      %2777 = vmatpush.bf16.msra.mxu0 0
      %2778 = vmatpush.bf16.msra.mxu0 0
      %2779 = vmatpush.bf16.msra.mxu0 0
      %2780 = vmatpush.bf16.msra.mxu0 0
      %2781 = vmatpush.bf16.msra.mxu0 0
      %2782 = vmatpush.bf16.msra.mxu0 0
      %2783 = vmatpush.bf16.msra.mxu0 %v2762
      %2784 = vmatpush.bf16.msra.mxu0 %v2761
      %2785 = vmatmul.bf16.gmra.mxu0 %v2766
      %v2786 = vpop.f32.mrf.mxu0
      %v2787 = vadd.f32 %v2751, %v2786
      %v2788 = vpop.f32.mrf.mxu0
      %v2789 = vadd.f32 %v2751, %v2788
      %2790 = vmatmul.bf16.gmra.mxu0 %v2769
      %v2791 = vpop.f32.mrf.mxu0
      %v2792 = vadd.f32 %v2751, %v2791
      %v2793 = vpop.f32.mrf.mxu0
      %v2794 = vadd.f32 %v2751, %v2793
      %2795 = vmatmul.bf16.gmra.mxu0 %v2772
      %v2796 = vpop.f32.mrf.mxu0
      %v2797 = vadd.f32 %v2751, %v2796
      %v2798 = vpop.f32.mrf.mxu0
      %v2799 = vadd.f32 %v2751, %v2798
      %2800 = vmatmul.bf16.gmra.mxu0 %v2775
      %v2801 = vpop.f32.mrf.mxu0
      %v2802 = vadd.f32 %v2751, %v2801
      %v2803 = vpop.f32.mrf.mxu0
      %v2804 = vadd.f32 %v2751, %v2803
      %2805 = vdwg.mxu0
      %v2806 = vmul.f32 %v2787, 0.5
      %v2807 = vmul.f32 %v2789, 0.5
      %v2808 = vmul.f32 %v2792, 0.5
      %v2809 = vmul.f32 %v2794, 0.5
      %v2810 = vmul.f32 %v2797, 0.5
      %v2811 = vmul.f32 %v2799, 0.5
      %v2812 = vmul.f32 %v2802, 0.5
      %v2813 = vmul.f32 %v2804, 0.5
      %v2814 = vrcp.pop 1.4142135
      %v2815 = vmul.f32 1.4142135, %v2814
      %v2816 = vsub.f32 1.0, %v2815
      %v2817 = vmul.f32 %v2814, %v2816
      %v2818 = vadd.f32 %v2814, %v2817
      %vm2819 = vweird.f32 %v2814
      %v2820 = vsel %vm2819, %v2814, %v2818
      %v2821 = vmul.f32 %v2787, %v2820
      %v2822 = vmul.f32 %v2789, %v2820
      %v2823 = vmul.f32 %v2792, %v2820
      %v2824 = vmul.f32 %v2794, %v2820
      %v2825 = vmul.f32 %v2797, %v2820
      %v2826 = vmul.f32 %v2799, %v2820
      %v2827 = vmul.f32 %v2802, %v2820
      %v2828 = vmul.f32 %v2804, %v2820
      %v2829 = vmul.f32 %v2821, %v2821
      %v2830 = vmin.f32 16.0, %v2829
      %v2831 = vmul.f32 %v2830, 2.1237322e-06
      %v2832 = vadd.f32 %v2831, 0.00028619796
      %v2833 = vmul.f32 %v2830, %v2832
      %v2834 = vadd.f32 %v2833, 0.0036580483
      %v2835 = vmul.f32 %v2830, %v2834
      %v2836 = vadd.f32 %v2835, 0.05243302
      %v2837 = vmul.f32 %v2830, %v2836
      %v2838 = vadd.f32 %v2837, 0.18741608
      %v2839 = vmul.f32 %v2830, %v2838
      %v2840 = vadd.f32 %v2839, 1.1283791
      %v2841 = vmul.f32 %v2821, %v2840
      %v2842 = vmul.f32 %v2830, 3.8918573e-05
      %v2843 = vadd.f32 %v2842, 0.001143296
      %v2844 = vmul.f32 %v2830, %v2843
      %v2845 = vadd.f32 %v2844, 0.014752088
      %v2846 = vmul.f32 %v2830, %v2845
      %v2847 = vadd.f32 %v2846, 0.112945676
      %v2848 = vmul.f32 %v2830, %v2847
      %v2849 = vadd.f32 %v2848, 0.4994258
      %v2850 = vmul.f32 %v2830, %v2849
      %v2851 = vadd.f32 %v2850, 1.0
      %v2852 = vrcp.pop %v2851
      %v2853 = vmul.f32 %v2851, %v2852
      %v2854 = vsub.f32 1.0, %v2853
      %v2855 = vmul.f32 %v2852, %v2854
      %v2856 = vadd.f32 %v2852, %v2855
      %vm2857 = vweird.f32 %v2851
      %vm2858 = vweird.f32 %v2852
      %vm2859 = vmor %vm2857, %vm2858
      %v2860 = vsel %vm2859, %v2852, %v2856
      %v2861 = vand.u32 2147483647, %v2851
      %vm2862 = vcmp.eq.f32.partialorder %v2861, 8.507059e+37
      %v2863 = vand.u32 %v2851, 2147483648
      %v2864 = vor.u32 1.1754944e-38, %v2863
      %v2865 = vsel %vm2862, %v2864, %v2860
      %v2866 = vmul.f32 %v2841, %v2865
      %v2867 = vmin.f32 %v2866, 1.0
      %v2868 = vmax.f32 %v2867, -1.0
      %v2869 = vmul.f32 %v2822, %v2822
      %v2870 = vmin.f32 16.0, %v2869
      %v2871 = vmul.f32 %v2870, 2.1237322e-06
      %v2872 = vadd.f32 %v2871, 0.00028619796
      %v2873 = vmul.f32 %v2870, %v2872
      %v2874 = vadd.f32 %v2873, 0.0036580483
      %v2875 = vmul.f32 %v2870, %v2874
      %v2876 = vadd.f32 %v2875, 0.05243302
      %v2877 = vmul.f32 %v2870, %v2876
      %v2878 = vadd.f32 %v2877, 0.18741608
      %v2879 = vmul.f32 %v2870, %v2878
      %v2880 = vadd.f32 %v2879, 1.1283791
      %v2881 = vmul.f32 %v2822, %v2880
      %v2882 = vmul.f32 %v2870, 3.8918573e-05
      %v2883 = vadd.f32 %v2882, 0.001143296
      %v2884 = vmul.f32 %v2870, %v2883
      %v2885 = vadd.f32 %v2884, 0.014752088
      %v2886 = vmul.f32 %v2870, %v2885
      %v2887 = vadd.f32 %v2886, 0.112945676
      %v2888 = vmul.f32 %v2870, %v2887
      %v2889 = vadd.f32 %v2888, 0.4994258
      %v2890 = vmul.f32 %v2870, %v2889
      %v2891 = vadd.f32 %v2890, 1.0
      %v2892 = vrcp.pop %v2891
      %v2893 = vmul.f32 %v2891, %v2892
      %v2894 = vsub.f32 1.0, %v2893
      %v2895 = vmul.f32 %v2892, %v2894
      %v2896 = vadd.f32 %v2892, %v2895
      %vm2897 = vweird.f32 %v2891
      %vm2898 = vweird.f32 %v2892
      %vm2899 = vmor %vm2897, %vm2898
      %v2900 = vsel %vm2899, %v2892, %v2896
      %v2901 = vand.u32 2147483647, %v2891
      %vm2902 = vcmp.eq.f32.partialorder %v2901, 8.507059e+37
      %v2903 = vand.u32 %v2891, 2147483648
      %v2904 = vor.u32 1.1754944e-38, %v2903
      %v2905 = vsel %vm2902, %v2904, %v2900
      %v2906 = vmul.f32 %v2881, %v2905
      %v2907 = vmin.f32 %v2906, 1.0
      %v2908 = vmax.f32 %v2907, -1.0
      %v2909 = vmul.f32 %v2823, %v2823
      %v2910 = vmin.f32 16.0, %v2909
      %v2911 = vmul.f32 %v2910, 2.1237322e-06
      %v2912 = vadd.f32 %v2911, 0.00028619796
      %v2913 = vmul.f32 %v2910, %v2912
      %v2914 = vadd.f32 %v2913, 0.0036580483
      %v2915 = vmul.f32 %v2910, %v2914
      %v2916 = vadd.f32 %v2915, 0.05243302
      %v2917 = vmul.f32 %v2910, %v2916
      %v2918 = vadd.f32 %v2917, 0.18741608
      %v2919 = vmul.f32 %v2910, %v2918
      %v2920 = vadd.f32 %v2919, 1.1283791
      %v2921 = vmul.f32 %v2823, %v2920
      %v2922 = vmul.f32 %v2910, 3.8918573e-05
      %v2923 = vadd.f32 %v2922, 0.001143296
      %v2924 = vmul.f32 %v2910, %v2923
      %v2925 = vadd.f32 %v2924, 0.014752088
      %v2926 = vmul.f32 %v2910, %v2925
      %v2927 = vadd.f32 %v2926, 0.112945676
      %v2928 = vmul.f32 %v2910, %v2927
      %v2929 = vadd.f32 %v2928, 0.4994258
      %v2930 = vmul.f32 %v2910, %v2929
      %v2931 = vadd.f32 %v2930, 1.0
      %v2932 = vrcp.pop %v2931
      %v2933 = vmul.f32 %v2931, %v2932
      %v2934 = vsub.f32 1.0, %v2933
      %v2935 = vmul.f32 %v2932, %v2934
      %v2936 = vadd.f32 %v2932, %v2935
      %vm2937 = vweird.f32 %v2931
      %vm2938 = vweird.f32 %v2932
      %vm2939 = vmor %vm2937, %vm2938
      %v2940 = vsel %vm2939, %v2932, %v2936
      %v2941 = vand.u32 2147483647, %v2931
      %vm2942 = vcmp.eq.f32.partialorder %v2941, 8.507059e+37
      %v2943 = vand.u32 %v2931, 2147483648
      %v2944 = vor.u32 1.1754944e-38, %v2943
      %v2945 = vsel %vm2942, %v2944, %v2940
      %v2946 = vmul.f32 %v2921, %v2945
      %v2947 = vmin.f32 %v2946, 1.0
      %v2948 = vmax.f32 %v2947, -1.0
      %v2949 = vmul.f32 %v2824, %v2824
      %v2950 = vmin.f32 16.0, %v2949
      %v2951 = vmul.f32 %v2950, 2.1237322e-06
      %v2952 = vadd.f32 %v2951, 0.00028619796
      %v2953 = vmul.f32 %v2950, %v2952
      %v2954 = vadd.f32 %v2953, 0.0036580483
      %v2955 = vmul.f32 %v2950, %v2954
      %v2956 = vadd.f32 %v2955, 0.05243302
      %v2957 = vmul.f32 %v2950, %v2956
      %v2958 = vadd.f32 %v2957, 0.18741608
      %v2959 = vmul.f32 %v2950, %v2958
      %v2960 = vadd.f32 %v2959, 1.1283791
      %v2961 = vmul.f32 %v2824, %v2960
      %v2962 = vmul.f32 %v2950, 3.8918573e-05
      %v2963 = vadd.f32 %v2962, 0.001143296
      %v2964 = vmul.f32 %v2950, %v2963
      %v2965 = vadd.f32 %v2964, 0.014752088
      %v2966 = vmul.f32 %v2950, %v2965
      %v2967 = vadd.f32 %v2966, 0.112945676
      %v2968 = vmul.f32 %v2950, %v2967
      %v2969 = vadd.f32 %v2968, 0.4994258
      %v2970 = vmul.f32 %v2950, %v2969
      %v2971 = vadd.f32 %v2970, 1.0
      %v2972 = vrcp.pop %v2971
      %v2973 = vmul.f32 %v2971, %v2972
      %v2974 = vsub.f32 1.0, %v2973
      %v2975 = vmul.f32 %v2972, %v2974
      %v2976 = vadd.f32 %v2972, %v2975
      %vm2977 = vweird.f32 %v2971
      %vm2978 = vweird.f32 %v2972
      %vm2979 = vmor %vm2977, %vm2978
      %v2980 = vsel %vm2979, %v2972, %v2976
      %v2981 = vand.u32 2147483647, %v2971
      %vm2982 = vcmp.eq.f32.partialorder %v2981, 8.507059e+37
      %v2983 = vand.u32 %v2971, 2147483648
      %v2984 = vor.u32 1.1754944e-38, %v2983
      %v2985 = vsel %vm2982, %v2984, %v2980
      %v2986 = vmul.f32 %v2961, %v2985
      %v2987 = vmin.f32 %v2986, 1.0
      %v2988 = vmax.f32 %v2987, -1.0
      %v2989 = vmul.f32 %v2825, %v2825
      %v2990 = vmin.f32 16.0, %v2989
      %v2991 = vmul.f32 %v2990, 2.1237322e-06
      %v2992 = vadd.f32 %v2991, 0.00028619796
      %v2993 = vmul.f32 %v2990, %v2992
      %v2994 = vadd.f32 %v2993, 0.0036580483
      %v2995 = vmul.f32 %v2990, %v2994
      %v2996 = vadd.f32 %v2995, 0.05243302
      %v2997 = vmul.f32 %v2990, %v2996
      %v2998 = vadd.f32 %v2997, 0.18741608
      %v2999 = vmul.f32 %v2990, %v2998
      %v3000 = vadd.f32 %v2999, 1.1283791
      %v3001 = vmul.f32 %v2825, %v3000
      %v3002 = vmul.f32 %v2990, 3.8918573e-05
      %v3003 = vadd.f32 %v3002, 0.001143296
      %v3004 = vmul.f32 %v2990, %v3003
      %v3005 = vadd.f32 %v3004, 0.014752088
      %v3006 = vmul.f32 %v2990, %v3005
      %v3007 = vadd.f32 %v3006, 0.112945676
      %v3008 = vmul.f32 %v2990, %v3007
      %v3009 = vadd.f32 %v3008, 0.4994258
      %v3010 = vmul.f32 %v2990, %v3009
      %v3011 = vadd.f32 %v3010, 1.0
      %v3012 = vrcp.pop %v3011
      %v3013 = vmul.f32 %v3011, %v3012
      %v3014 = vsub.f32 1.0, %v3013
      %v3015 = vmul.f32 %v3012, %v3014
      %v3016 = vadd.f32 %v3012, %v3015
      %vm3017 = vweird.f32 %v3011
      %vm3018 = vweird.f32 %v3012
      %vm3019 = vmor %vm3017, %vm3018
      %v3020 = vsel %vm3019, %v3012, %v3016
      %v3021 = vand.u32 2147483647, %v3011
      %vm3022 = vcmp.eq.f32.partialorder %v3021, 8.507059e+37
      %v3023 = vand.u32 %v3011, 2147483648
      %v3024 = vor.u32 1.1754944e-38, %v3023
      %v3025 = vsel %vm3022, %v3024, %v3020
      %v3026 = vmul.f32 %v3001, %v3025
      %v3027 = vmin.f32 %v3026, 1.0
      %v3028 = vmax.f32 %v3027, -1.0
      %v3029 = vmul.f32 %v2826, %v2826
      %v3030 = vmin.f32 16.0, %v3029
      %v3031 = vmul.f32 %v3030, 2.1237322e-06
      %v3032 = vadd.f32 %v3031, 0.00028619796
      %v3033 = vmul.f32 %v3030, %v3032
      %v3034 = vadd.f32 %v3033, 0.0036580483
      %v3035 = vmul.f32 %v3030, %v3034
      %v3036 = vadd.f32 %v3035, 0.05243302
      %v3037 = vmul.f32 %v3030, %v3036
      %v3038 = vadd.f32 %v3037, 0.18741608
      %v3039 = vmul.f32 %v3030, %v3038
      %v3040 = vadd.f32 %v3039, 1.1283791
      %v3041 = vmul.f32 %v2826, %v3040
      %v3042 = vmul.f32 %v3030, 3.8918573e-05
      %v3043 = vadd.f32 %v3042, 0.001143296
      %v3044 = vmul.f32 %v3030, %v3043
      %v3045 = vadd.f32 %v3044, 0.014752088
      %v3046 = vmul.f32 %v3030, %v3045
      %v3047 = vadd.f32 %v3046, 0.112945676
      %v3048 = vmul.f32 %v3030, %v3047
      %v3049 = vadd.f32 %v3048, 0.4994258
      %v3050 = vmul.f32 %v3030, %v3049
      %v3051 = vadd.f32 %v3050, 1.0
      %v3052 = vrcp.pop %v3051
      %v3053 = vmul.f32 %v3051, %v3052
      %v3054 = vsub.f32 1.0, %v3053
      %v3055 = vmul.f32 %v3052, %v3054
      %v3056 = vadd.f32 %v3052, %v3055
      %vm3057 = vweird.f32 %v3051
      %vm3058 = vweird.f32 %v3052
      %vm3059 = vmor %vm3057, %vm3058
      %v3060 = vsel %vm3059, %v3052, %v3056
      %v3061 = vand.u32 2147483647, %v3051
      %vm3062 = vcmp.eq.f32.partialorder %v3061, 8.507059e+37
      %v3063 = vand.u32 %v3051, 2147483648
      %v3064 = vor.u32 1.1754944e-38, %v3063
      %v3065 = vsel %vm3062, %v3064, %v3060
      %v3066 = vmul.f32 %v3041, %v3065
      %v3067 = vmin.f32 %v3066, 1.0
      %v3068 = vmax.f32 %v3067, -1.0
      %v3069 = vmul.f32 %v2827, %v2827
      %v3070 = vmin.f32 16.0, %v3069
      %v3071 = vmul.f32 %v3070, 2.1237322e-06
      %v3072 = vadd.f32 %v3071, 0.00028619796
      %v3073 = vmul.f32 %v3070, %v3072
      %v3074 = vadd.f32 %v3073, 0.0036580483
      %v3075 = vmul.f32 %v3070, %v3074
      %v3076 = vadd.f32 %v3075, 0.05243302
      %v3077 = vmul.f32 %v3070, %v3076
      %v3078 = vadd.f32 %v3077, 0.18741608
      %v3079 = vmul.f32 %v3070, %v3078
      %v3080 = vadd.f32 %v3079, 1.1283791
      %v3081 = vmul.f32 %v2827, %v3080
      %v3082 = vmul.f32 %v3070, 3.8918573e-05
      %v3083 = vadd.f32 %v3082, 0.001143296
      %v3084 = vmul.f32 %v3070, %v3083
      %v3085 = vadd.f32 %v3084, 0.014752088
      %v3086 = vmul.f32 %v3070, %v3085
      %v3087 = vadd.f32 %v3086, 0.112945676
      %v3088 = vmul.f32 %v3070, %v3087
      %v3089 = vadd.f32 %v3088, 0.4994258
      %v3090 = vmul.f32 %v3070, %v3089
      %v3091 = vadd.f32 %v3090, 1.0
      %v3092 = vrcp.pop %v3091
      %v3093 = vmul.f32 %v3091, %v3092
      %v3094 = vsub.f32 1.0, %v3093
      %v3095 = vmul.f32 %v3092, %v3094
      %v3096 = vadd.f32 %v3092, %v3095
      %vm3097 = vweird.f32 %v3091
      %vm3098 = vweird.f32 %v3092
      %vm3099 = vmor %vm3097, %vm3098
      %v3100 = vsel %vm3099, %v3092, %v3096
      %v3101 = vand.u32 2147483647, %v3091
      %vm3102 = vcmp.eq.f32.partialorder %v3101, 8.507059e+37
      %v3103 = vand.u32 %v3091, 2147483648
      %v3104 = vor.u32 1.1754944e-38, %v3103
      %v3105 = vsel %vm3102, %v3104, %v3100
      %v3106 = vmul.f32 %v3081, %v3105
      %v3107 = vmin.f32 %v3106, 1.0
      %v3108 = vmax.f32 %v3107, -1.0
      %v3109 = vmul.f32 %v2828, %v2828
      %v3110 = vmin.f32 16.0, %v3109
      %v3111 = vmul.f32 %v3110, 2.1237322e-06
      %v3112 = vadd.f32 %v3111, 0.00028619796
      %v3113 = vmul.f32 %v3110, %v3112
      %v3114 = vadd.f32 %v3113, 0.0036580483
      %v3115 = vmul.f32 %v3110, %v3114
      %v3116 = vadd.f32 %v3115, 0.05243302
      %v3117 = vmul.f32 %v3110, %v3116
      %v3118 = vadd.f32 %v3117, 0.18741608
      %v3119 = vmul.f32 %v3110, %v3118
      %v3120 = vadd.f32 %v3119, 1.1283791
      %v3121 = vmul.f32 %v2828, %v3120
      %v3122 = vmul.f32 %v3110, 3.8918573e-05
      %v3123 = vadd.f32 %v3122, 0.001143296
      %v3124 = vmul.f32 %v3110, %v3123
      %v3125 = vadd.f32 %v3124, 0.014752088
      %v3126 = vmul.f32 %v3110, %v3125
      %v3127 = vadd.f32 %v3126, 0.112945676
      %v3128 = vmul.f32 %v3110, %v3127
      %v3129 = vadd.f32 %v3128, 0.4994258
      %v3130 = vmul.f32 %v3110, %v3129
      %v3131 = vadd.f32 %v3130, 1.0
      %v3132 = vrcp.pop %v3131
      %v3133 = vmul.f32 %v3131, %v3132
      %v3134 = vsub.f32 1.0, %v3133
      %v3135 = vmul.f32 %v3132, %v3134
      %v3136 = vadd.f32 %v3132, %v3135
      %vm3137 = vweird.f32 %v3131
      %vm3138 = vweird.f32 %v3132
      %vm3139 = vmor %vm3137, %vm3138
      %v3140 = vsel %vm3139, %v3132, %v3136
      %v3141 = vand.u32 2147483647, %v3131
      %vm3142 = vcmp.eq.f32.partialorder %v3141, 8.507059e+37
      %v3143 = vand.u32 %v3131, 2147483648
      %v3144 = vor.u32 1.1754944e-38, %v3143
      %v3145 = vsel %vm3142, %v3144, %v3140
      %v3146 = vmul.f32 %v3121, %v3145
      %v3147 = vmin.f32 %v3146, 1.0
      %v3148 = vmax.f32 %v3147, -1.0
      %v3149 = vadd.f32 %v2868, 1.0
      %v3150 = vadd.f32 %v2908, 1.0
      %v3151 = vadd.f32 %v2948, 1.0
      %v3152 = vadd.f32 %v2988, 1.0
      %v3153 = vadd.f32 %v3028, 1.0
      %v3154 = vadd.f32 %v3068, 1.0
      %v3155 = vadd.f32 %v3108, 1.0
      %v3156 = vadd.f32 %v3148, 1.0
      %v3157 = vmul.f32 %v2806, %v3149
      %v3158 = vmul.f32 %v2807, %v3150
      %v3159 = vmul.f32 %v2808, %v3151
      %v3160 = vmul.f32 %v2809, %v3152
      %v3161 = vmul.f32 %v2810, %v3153
      %v3162 = vmul.f32 %v2811, %v3154
      %v3163 = vmul.f32 %v2812, %v3155
      %v3164 = vmul.f32 %v2813, %v3156
      %v3165 = vpack.c.bf16 %v3158, %v3157
      %v3166 = vpack.c.bf16 %v3160, %v3159
      %v3167 = vpack.c.bf16 %v3162, %v3161
      %v3168 = vpack.c.bf16 %v3164, %v3163
      %v3169 = vld [vmem:[%s915] sm:$0xf]
      %v3170 = vld [vmem:[%s915 + $0x4] sm:$0xf]
      %v3171 = vld [vmem:[%s915 + $0x8] sm:$0xf]
      %v3172 = vld [vmem:[%s915 + $0xc] sm:$0xf]
      %v3173 = vld [vmem:[%s915 + $0x10] sm:$0xf]
      %v3174 = vld [vmem:[%s915 + $0x14] sm:$0xf]
      %v3175 = vld [vmem:[%s915 + $0x18] sm:$0xf]
      %v3176 = vld [vmem:[%s915 + $0x1c] sm:$0xf]
      %v3177 = vld [vmem:[%s915 + $0x20] sm:$0xf]
      %v3178 = vld [vmem:[%s915 + $0x24] sm:$0xf]
      %v3179 = vld [vmem:[%s915 + $0x28] sm:$0xf]
      %v3180 = vld [vmem:[%s915 + $0x2c] sm:$0xf]
      %v3181 = vld [vmem:[%s915 + $0x30] sm:$0xf]
      %v3182 = vld [vmem:[%s915 + $0x34] sm:$0xf]
      %v3183 = vld [vmem:[%s915 + $0x38] sm:$0xf]
      %v3184 = vld [vmem:[%s915 + $0x3c] sm:$0xf]
      %v3185 = vld [vmem:[%s918] sm:$0x1]
      %v3187 = vperm.slane %v3185, 0
      %v3205 = vunpack.c.l.b16 %v3169
      %v3206 = vunpack.c.l.b16 %v3170
      %v3207 = vunpack.c.l.b16 %v3171
      %v3208 = vunpack.c.l.b16 %v3172
      %v3209 = vunpack.c.l.b16 %v3173
      %v3210 = vunpack.c.l.b16 %v3174
      %v3211 = vunpack.c.l.b16 %v3175
      %v3212 = vunpack.c.l.b16 %v3176
      %v3213 = vunpack.c.l.b16 %v3177
      %v3214 = vunpack.c.l.b16 %v3178
      %v3215 = vunpack.c.l.b16 %v3179
      %v3216 = vunpack.c.l.b16 %v3180
      %v3217 = vunpack.c.l.b16 %v3181
      %v3218 = vunpack.c.l.b16 %v3182
      %v3219 = vunpack.c.l.b16 %v3183
      %v3220 = vunpack.c.l.b16 %v3184
      %v3221 = vpack.c.b16 %v3206, %v3205
      %v3222 = vpack.c.b16 %v3208, %v3207
      %v3223 = vpack.c.b16 %v3210, %v3209
      %v3224 = vpack.c.b16 %v3212, %v3211
      %v3225 = vpack.c.b16 %v3214, %v3213
      %v3226 = vpack.c.b16 %v3216, %v3215
      %v3227 = vpack.c.b16 %v3218, %v3217
      %v3228 = vpack.c.b16 %v3220, %v3219
      %3237 = vmatpush.bf16.msra.mxu0 %v3228
      %3238 = vmatpush.bf16.msra.mxu0 %v3227
      %3239 = vmatpush.bf16.msra.mxu0 %v3226
      %3240 = vmatpush.bf16.msra.mxu0 %v3225
      %3241 = vmatpush.bf16.msra.mxu0 %v3224
      %3242 = vmatpush.bf16.msra.mxu0 %v3223
      %3243 = vmatpush.bf16.msra.mxu0 %v3222
      %3244 = vmatpush.bf16.msra.mxu0 %v3221
      %3245 = vmatmul.bf16.gmra.mxu0 %v3165
      %v3246 = vpop.f32.mrf.mxu0
      %v3247 = vadd.f32 %v3187, %v3246
      %v3248 = vpop.f32.mrf.mxu0
      %v3249 = vadd.f32 %v3187, %v3248
      %3250 = vmatmul.bf16.gmra.mxu0 %v3166
      %v3251 = vpop.f32.mrf.mxu0
      %v3252 = vadd.f32 %v3187, %v3251
      %v3253 = vpop.f32.mrf.mxu0
      %v3254 = vadd.f32 %v3187, %v3253
      %3255 = vmatmul.bf16.gmra.mxu0 %v3167
      %v3256 = vpop.f32.mrf.mxu0
      %v3257 = vadd.f32 %v3187, %v3256
      %v3258 = vpop.f32.mrf.mxu0
      %v3259 = vadd.f32 %v3187, %v3258
      %3260 = vmatmul.bf16.gmra.mxu0 %v3168
      %v3261 = vpop.f32.mrf.mxu0
      %v3262 = vadd.f32 %v3187, %v3261
      %v3263 = vpop.f32.mrf.mxu0
      %v3264 = vadd.f32 %v3187, %v3263
      %3265 = vdwg.mxu0
      %v3266 = vadd.f32 %v3247, %v2733
      %v3267 = vadd.f32 %v3249, %v2734
      %v3268 = vadd.f32 %v3252, %v2735
      %v3269 = vadd.f32 %v3254, %v2736
      %v3270 = vadd.f32 %v3257, %v2737
      %v3271 = vadd.f32 %v3259, %v2738
      %v3272 = vadd.f32 %v3262, %v2739
      %v3273 = vadd.f32 %v3264, %v2740
      %v3274 = vld [vmem:[%s921] sm:$0x1]
      %v3275 = vld [vmem:[%s924] sm:$0x1]
      %v3276 = vsel %vm1256, %v3266, 0.0
      %3277 = vadd.xlane.f32.xlu0 %v3276
      %v3278 = vpop.xlane.xlu0 %3277
      %v3279 = vsel %vm1256, %v3267, 0.0
      %3280 = vadd.xlane.f32.xlu0 %v3279
      %v3281 = vpop.xlane.xlu0 %3280
      %v3282 = vsel %vm1256, %v3268, 0.0
      %3283 = vadd.xlane.f32.xlu0 %v3282
      %v3284 = vpop.xlane.xlu0 %3283
      %v3285 = vsel %vm1256, %v3269, 0.0
      %3286 = vadd.xlane.f32.xlu0 %v3285
      %v3287 = vpop.xlane.xlu0 %3286
      %v3288 = vsel %vm1256, %v3270, 0.0
      %3289 = vadd.xlane.f32.xlu0 %v3288
      %v3290 = vpop.xlane.xlu0 %3289
      %v3291 = vsel %vm1256, %v3271, 0.0
      %3292 = vadd.xlane.f32.xlu0 %v3291
      %v3293 = vpop.xlane.xlu0 %3292
      %v3294 = vsel %vm1256, %v3272, 0.0
      %3295 = vadd.xlane.f32.xlu0 %v3294
      %v3296 = vpop.xlane.xlu0 %3295
      %v3297 = vsel %vm1256, %v3273, 0.0
      %3298 = vadd.xlane.f32.xlu0 %v3297
      %v3299 = vpop.xlane.xlu0 %3298
      %v3300 = vmul.f32 %v3278, %v2566
      %v3301 = vmul.f32 %v3281, %v2566
      %v3302 = vmul.f32 %v3284, %v2566
      %v3303 = vmul.f32 %v3287, %v2566
      %v3304 = vmul.f32 %v3290, %v2566
      %v3305 = vmul.f32 %v3293, %v2566
      %v3306 = vmul.f32 %v3296, %v2566
      %v3307 = vmul.f32 %v3299, %v2566
      %v3308 = vsub.f32 %v3266, %v3300
      %v3309 = vsub.f32 %v3267, %v3301
      %v3310 = vsub.f32 %v3268, %v3302
      %v3311 = vsub.f32 %v3269, %v3303
      %v3312 = vsub.f32 %v3270, %v3304
      %v3313 = vsub.f32 %v3271, %v3305
      %v3314 = vsub.f32 %v3272, %v3306
      %v3315 = vsub.f32 %v3273, %v3307
      %v3316 = vmul.f32 %v3308, %v3308
      %v3317 = vmul.f32 %v3309, %v3309
      %v3318 = vmul.f32 %v3310, %v3310
      %v3319 = vmul.f32 %v3311, %v3311
      %v3320 = vmul.f32 %v3312, %v3312
      %v3321 = vmul.f32 %v3313, %v3313
      %v3322 = vmul.f32 %v3314, %v3314
      %v3323 = vmul.f32 %v3315, %v3315
      %v3324 = vsel %vm1256, %v3316, 0.0
      %3325 = vadd.xlane.f32.xlu0 %v3324
      %v3326 = vpop.xlane.xlu0 %3325
      %v3327 = vsel %vm1256, %v3317, 0.0
      %3328 = vadd.xlane.f32.xlu0 %v3327
      %v3329 = vpop.xlane.xlu0 %3328
      %v3330 = vsel %vm1256, %v3318, 0.0
      %3331 = vadd.xlane.f32.xlu0 %v3330
      %v3332 = vpop.xlane.xlu0 %3331
      %v3333 = vsel %vm1256, %v3319, 0.0
      %3334 = vadd.xlane.f32.xlu0 %v3333
      %v3335 = vpop.xlane.xlu0 %3334
      %v3336 = vsel %vm1256, %v3320, 0.0
      %3337 = vadd.xlane.f32.xlu0 %v3336
      %v3338 = vpop.xlane.xlu0 %3337
      %v3339 = vsel %vm1256, %v3321, 0.0
      %3340 = vadd.xlane.f32.xlu0 %v3339
      %v3341 = vpop.xlane.xlu0 %3340
      %v3342 = vsel %vm1256, %v3322, 0.0
      %3343 = vadd.xlane.f32.xlu0 %v3342
      %v3344 = vpop.xlane.xlu0 %3343
      %v3345 = vsel %vm1256, %v3323, 0.0
      %3346 = vadd.xlane.f32.xlu0 %v3345
      %v3347 = vpop.xlane.xlu0 %3346
      %v3348 = vmul.f32 %v3326, %v2566
      %v3349 = vmul.f32 %v3329, %v2566
      %v3350 = vmul.f32 %v3332, %v2566
      %v3351 = vmul.f32 %v3335, %v2566
      %v3352 = vmul.f32 %v3338, %v2566
      %v3353 = vmul.f32 %v3341, %v2566
      %v3354 = vmul.f32 %v3344, %v2566
      %v3355 = vmul.f32 %v3347, %v2566
      %v3356 = vadd.f32 %v3348, 1e-12
      %v3357 = vadd.f32 %v3349, 1e-12
      %v3358 = vadd.f32 %v3350, 1e-12
      %v3359 = vadd.f32 %v3351, 1e-12
      %v3360 = vadd.f32 %v3352, 1e-12
      %v3361 = vadd.f32 %v3353, 1e-12
      %v3362 = vadd.f32 %v3354, 1e-12
      %v3363 = vadd.f32 %v3355, 1e-12
      %v3364 = vrsqrt.pop %v3356
      %v3365 = vmul.f32 %v3364, %v3356
      %v3366 = vmul.f32 %v3365, %v3364
      %v3367 = vmul.f32 0.5, %v3366
      %v3368 = vsub.f32 1.5, %v3367
      %v3369 = vmul.f32 %v3364, %v3368
      %vm3370 = vweird.f32 %v3356
      %vm3371 = vweird.f32 %v3364
      %vm3372 = vmor %vm3370, %vm3371
      %v3373 = vsel %vm3372, %v3364, %v3369
      %v3374 = vrsqrt.pop %v3357
      %v3375 = vmul.f32 %v3374, %v3357
      %v3376 = vmul.f32 %v3375, %v3374
      %v3377 = vmul.f32 0.5, %v3376
      %v3378 = vsub.f32 1.5, %v3377
      %v3379 = vmul.f32 %v3374, %v3378
      %vm3380 = vweird.f32 %v3357
      %vm3381 = vweird.f32 %v3374
      %vm3382 = vmor %vm3380, %vm3381
      %v3383 = vsel %vm3382, %v3374, %v3379
      %v3384 = vrsqrt.pop %v3358
      %v3385 = vmul.f32 %v3384, %v3358
      %v3386 = vmul.f32 %v3385, %v3384
      %v3387 = vmul.f32 0.5, %v3386
      %v3388 = vsub.f32 1.5, %v3387
      %v3389 = vmul.f32 %v3384, %v3388
      %vm3390 = vweird.f32 %v3358
      %vm3391 = vweird.f32 %v3384
      %vm3392 = vmor %vm3390, %vm3391
      %v3393 = vsel %vm3392, %v3384, %v3389
      %v3394 = vrsqrt.pop %v3359
      %v3395 = vmul.f32 %v3394, %v3359
      %v3396 = vmul.f32 %v3395, %v3394
      %v3397 = vmul.f32 0.5, %v3396
      %v3398 = vsub.f32 1.5, %v3397
      %v3399 = vmul.f32 %v3394, %v3398
      %vm3400 = vweird.f32 %v3359
      %vm3401 = vweird.f32 %v3394
      %vm3402 = vmor %vm3400, %vm3401
      %v3403 = vsel %vm3402, %v3394, %v3399
      %v3404 = vrsqrt.pop %v3360
      %v3405 = vmul.f32 %v3404, %v3360
      %v3406 = vmul.f32 %v3405, %v3404
      %v3407 = vmul.f32 0.5, %v3406
      %v3408 = vsub.f32 1.5, %v3407
      %v3409 = vmul.f32 %v3404, %v3408
      %vm3410 = vweird.f32 %v3360
      %vm3411 = vweird.f32 %v3404
      %vm3412 = vmor %vm3410, %vm3411
      %v3413 = vsel %vm3412, %v3404, %v3409
      %v3414 = vrsqrt.pop %v3361
      %v3415 = vmul.f32 %v3414, %v3361
      %v3416 = vmul.f32 %v3415, %v3414
      %v3417 = vmul.f32 0.5, %v3416
      %v3418 = vsub.f32 1.5, %v3417
      %v3419 = vmul.f32 %v3414, %v3418
      %vm3420 = vweird.f32 %v3361
      %vm3421 = vweird.f32 %v3414
      %vm3422 = vmor %vm3420, %vm3421
      %v3423 = vsel %vm3422, %v3414, %v3419
      %v3424 = vrsqrt.pop %v3362
      %v3425 = vmul.f32 %v3424, %v3362
      %v3426 = vmul.f32 %v3425, %v3424
      %v3427 = vmul.f32 0.5, %v3426
      %v3428 = vsub.f32 1.5, %v3427
      %v3429 = vmul.f32 %v3424, %v3428
      %vm3430 = vweird.f32 %v3362
      %vm3431 = vweird.f32 %v3424
      %vm3432 = vmor %vm3430, %vm3431
      %v3433 = vsel %vm3432, %v3424, %v3429
      %v3434 = vrsqrt.pop %v3363
      %v3435 = vmul.f32 %v3434, %v3363
      %v3436 = vmul.f32 %v3435, %v3434
      %v3437 = vmul.f32 0.5, %v3436
      %v3438 = vsub.f32 1.5, %v3437
      %v3439 = vmul.f32 %v3434, %v3438
      %vm3440 = vweird.f32 %v3363
      %vm3441 = vweird.f32 %v3434
      %vm3442 = vmor %vm3440, %vm3441
      %v3443 = vsel %vm3442, %v3434, %v3439
      %v3444 = vmul.f32 %v3308, %v3373
      %v3445 = vmul.f32 %v3309, %v3383
      %v3446 = vmul.f32 %v3310, %v3393
      %v3447 = vmul.f32 %v3311, %v3403
      %v3448 = vmul.f32 %v3312, %v3413
      %v3449 = vmul.f32 %v3313, %v3423
      %v3450 = vmul.f32 %v3314, %v3433
      %v3451 = vmul.f32 %v3315, %v3443
      %v3453 = vperm.slane %v3274, 0
      %v3455 = vmul.f32 %v3453, %v3444
      %v3456 = vmul.f32 %v3453, %v3445
      %v3457 = vmul.f32 %v3453, %v3446
      %v3458 = vmul.f32 %v3453, %v3447
      %v3459 = vmul.f32 %v3453, %v3448
      %v3460 = vmul.f32 %v3453, %v3449
      %v3461 = vmul.f32 %v3453, %v3450
      %v3462 = vmul.f32 %v3453, %v3451
      %v3464 = vperm.slane %v3275, 0
      %v3466 = vadd.f32 %v3455, %v3464
      %v3467 = vadd.f32 %v3456, %v3464
      %v3468 = vadd.f32 %v3457, %v3464
      %v3469 = vadd.f32 %v3458, %v3464
      %v3470 = vadd.f32 %v3459, %v3464
      %v3471 = vadd.f32 %v3460, %v3464
      %v3472 = vadd.f32 %v3461, %v3464
      %v3473 = vadd.f32 %v3462, %v3464
      %3474 = vst.msk [vmem:[%s929] sm:$0xff] %vm1256, %v3466
      %3475 = vst.msk [vmem:[%s929 + $0x8] sm:$0xff] %vm1256, %v3467
      %3476 = vst.msk [vmem:[%s929 + $0x10] sm:$0xff] %vm1256, %v3468
      %3477 = vst.msk [vmem:[%s929 + $0x18] sm:$0xff] %vm1256, %v3469
      %3478 = vst.msk [vmem:[%s929 + $0x20] sm:$0xff] %vm1256, %v3470
      %3479 = vst.msk [vmem:[%s929 + $0x28] sm:$0xff] %vm1256, %v3471
      %3480 = vst.msk [vmem:[%s929 + $0x30] sm:$0xff] %vm1256, %v3472
      %3481 = vst.msk [vmem:[%s929 + $0x38] sm:$0xff] %vm1256, %v3473
      %s3482 = smul.u32 8, %s35
      %p3483 = scmp.lt.s32.totalorder %s3482, 15
      %s3484 = scalar_select %p3483, %s3482, 15
      %s3485 = smul.addr %s3484, 8
      %s3486 = scalar_lea.vmem %s20, %s3485
      // Predicated region
      $region105: #{tpu_custom_call.1} parent=99 // pred_check
        %p3487 = pneg %p571
      $region106: #{tpu_custom_call.1} parent=99 // pred_check_branch
        %3489 = sbr.rel (%p3487) target = $region108
      $region107: #{tpu_custom_call.1} parent=99 // pred_region
        %s3490 = smul.u32 8, %s35
      $region108: #{tpu_custom_call.1} parent=99 // pred_fallthru
        _
    $region100: #{tpu_custom_call.1} parent=5 // pred_fallthru
      _
    %p3491 = scmp.le.s32.totalorder 2, %s26
    // Predicated region
    $region109: #{tpu_custom_call.1} parent=5 // pred_check
      %p3492 = pneg %p3491
    $region110: #{tpu_custom_call.1} parent=5 // pred_check_branch
      %3494 = sbr.rel (%p3492) target = $region112
    $region111: #{tpu_custom_call.1} parent=5 // pred_region
      %s3495 = ssub.s32 %s26, 2
      // Predicated region
      $region113: #{tpu_custom_call.1} parent=111 // pred_check
        %p3496 = pneg %p577
      $region114: #{tpu_custom_call.1} parent=111 // pred_check_branch
        %3498 = sbr.rel (%p3496) target = $region116
      $region115: #{tpu_custom_call.1} parent=111 // pred_region
        %s3499 = smul.u32 8, %s37
        %p3500 = scmp.lt.s32.totalorder %s3499, 15
        %s3501 = scalar_select %p3500, %s3499, 15
        %s3502 = smul.addr %s3501, 8
        %s3503 = scalar_lea.vmem %s20, %s3502
      $region116: #{tpu_custom_call.1} parent=111 // pred_fallthru
        _
    $region112: #{tpu_custom_call.1} parent=5 // pred_fallthru
      _
  $region6: #{tpu_custom_call.1} parent=0 // loop_footer
    %s30 = sadd.s32 1, %s26
  $region7: #{tpu_custom_call.1} parent=0 // loop_footer_branch
    %25 = sbr.rel target = $region3
  $region8: #{tpu_custom_call.1} parent=0 // loop_exit
    _

</llo_original>
